<compile_context>
chip_gen: v6e
topology: v6e:2x2x1
jax: 0.10.0
libtpu: 0.0.40
codegen_flags: <defaults>
</compile_context>

<pallas_src>
import functools

import jax
import jax.numpy as jnp
from jax.experimental import pallas as pl
from jax.experimental.pallas import tpu as pltpu

# ----------------------------- hyper-parameters -----------------------------
EMBEDDING_SIZE = 8
ENCODER_HIDDEN = 32
DECODER_HIDDEN = 32
ENCODING_SIZE = 32
NUM_PITCHES = 16
ENCODER_BIDIRECTIONAL = True
BATCH = 2
SEQ_LEN = 8
FEAT = EMBEDDING_SIZE + 2          # pitch embedding + step + duration

assert ENCODING_SIZE == DECODER_HIDDEN, "encoder summary feeds decoder init state"
assert ENCODER_HIDDEN == DECODER_HIDDEN, "step/duration heads applied to decoder output"
# TODO(synk): fused kernel below assumes a bidirectional encoder (as configured).
assert ENCODER_BIDIRECTIONAL

# ---------------------------- fused operand layout ---------------------------
GW = 128                 # padded width of one gate group (one vreg of lanes)
HID = 128                # padded hidden width (live: fwd 0:32 | bwd 32:64 | pad)
COLS = 4 * GW            # 512: [i | f | g | o] gate groups
X_COLS = 32              # padded feature columns of x_all (2*FEAT=20 -> 32)

R_WIH_ENC = 0                      # (32, 512)  rows 0:F fwd W_ih, F:2F bwd W_ih
R_B_ENC = R_WIH_ENC + X_COLS       # (8, 512)   row 0 = b_ih+b_hh (fwd|bwd lanes)
R_WHH_ENC = R_B_ENC + 8            # (128, 512) rows 0:H fwd, H:2H bwd, rest zero
R_WIH_DEC = R_WHH_ENC + HID        # (32, 512)  rows 0:F W_ih_dec
R_B_DEC = R_WIH_DEC + X_COLS       # (8, 512)
R_WHH_DEC = R_B_DEC + 8            # (128, 512) rows 0:Hd live
R_WHC = R_WHH_DEC + HID            # (128, 512) cols [0:E]=W_h, [128:128+E]=W_c
R_B_HC = R_WHC + HID               # (8, 512)
R_WHEADS = R_B_HC + 8              # (128, 512) cols [0:P]=pitch, [P]=step, [P+1]=dur
R_B_HEADS = R_WHEADS + HID         # (8, 512)
R_TOTAL = R_B_HEADS + 8            # 608 rows -> 608*512*4 B ~= 1.2 MB slab


def _vmem_spec():
    # Full-array block resident in VMEM (every operand here is KB-scale).
    return pl.BlockSpec(memory_space=pltpu.MemorySpace.VMEM)


# ------------------------------ fused kernel --------------------------------
def _make_fused_kernel(T, B, P):
    """Whole LSTMEncoderDecoder forward in one kernel.

    Inputs (VMEM):
      x_all: (2*T*B, 32)  rows 0:T*B  = encoder features, row t*B+b = [x_t | x_{T-1-t} | 0]
                          rows T*B:   = decoder features, row t*B+b = [x_t | 0]
      w:     (608, 512)   packed weight slab (layout above; gate order i,f,g,o;
                          biases pre-combined b_ih+b_hh; weights pre-transposed)
    Output:
      heads: (T*B, 128)   time-major [pitch(16) | step | duration | zero-pad]
    """
    f32 = jnp.float32
    TB = T * B

    def kernel(x_ref, w_ref, heads_ref):
        # ------------- bidirectional encoder (fwd+bwd folded, 128-lane gates) ----
        # One matmul produces the already fwd/bwd-selected gate inputs for every
        # timestep: encoder row t*B+b is [x_t | x_{T-1-t}] and the weight block is
        # block-structured (rows 0:F -> fwd gate lanes, F:2F -> bwd gate lanes).
        w_ih_enc = w_ref[R_WIH_ENC:R_WIH_ENC + X_COLS, :]
        b_enc = w_ref[R_B_ENC:R_B_ENC + 1, :]
        xg_enc = jnp.dot(x_ref[0:TB, :], w_ih_enc,
                         preferred_element_type=f32) + b_enc          # (T*B, 512)
        w_hh_enc = w_ref[R_WHH_ENC:R_WHH_ENC + HID, :]                 # (128, 512)

        h = jnp.zeros((B, HID), f32)        # lanes [fwd 0:32 | bwd 32:64 | pad 0]
        c = jnp.zeros((B, HID), f32)
        pooled = None
        for t in range(T):                  # T is static -> fully unrolled
            gates = xg_enc[t * B:(t + 1) * B, :] + jnp.dot(
                h, w_hh_enc, preferred_element_type=f32)               # (B, 512)
            i_g = jax.nn.sigmoid(gates[:, 0 * GW:1 * GW])
            f_g = jax.nn.sigmoid(gates[:, 1 * GW:2 * GW])
            g_g = jnp.tanh(gates[:, 2 * GW:3 * GW])
            o_g = jax.nn.sigmoid(gates[:, 3 * GW:4 * GW])
            c = f_g * c + i_g * g_g
            h = o_g * jnp.tanh(c)
            # torch.max(encoder_output, 1) is a per-feature max over time and is
            # order-independent, so a running max of [h_fwd | h_bwd] is exact.
            # Padded lanes stay exactly 0 (zero weights/bias -> gates 0).
            pooled = h if pooled is None else jnp.maximum(pooled, h)

        # --------------- encoding layers (h0 and c0 in one matmul) ---------------
        w_hc = w_ref[R_WHC:R_WHC + HID, :]
        b_hc = w_ref[R_B_HC:R_B_HC + 1, :]
        hc = jnp.dot(pooled, w_hc, preferred_element_type=f32) + b_hc  # (B, 512)
        h_d = hc[:, 0:HID]
        c_d = hc[:, HID:2 * HID]
        # TODO(synk): nn.Dropout() is identity in eval mode; no train-mode dropout.

        # ----------------------------- decoder LSTM ------------------------------
        w_ih_dec = w_ref[R_WIH_DEC:R_WIH_DEC + X_COLS, :]
        b_dec = w_ref[R_B_DEC:R_B_DEC + 1, :]
        xg_dec = jnp.dot(x_ref[TB:2 * TB, :], w_ih_dec,
                         preferred_element_type=f32) + b_dec           # (T*B, 512)
        w_hh_dec = w_ref[R_WHH_DEC:R_WHH_DEC + HID, :]

        dec_hs = []
        for t in range(T):
            gates = xg_dec[t * B:(t + 1) * B, :] + jnp.dot(
                h_d, w_hh_dec, preferred_element_type=f32)             # (B, 512)
            i_g = jax.nn.sigmoid(gates[:, 0 * GW:1 * GW])
            f_g = jax.nn.sigmoid(gates[:, 1 * GW:2 * GW])
            g_g = jnp.tanh(gates[:, 2 * GW:3 * GW])
            o_g = jax.nn.sigmoid(gates[:, 3 * GW:4 * GW])
            c_d = f_g * c_d + i_g * g_g
            h_d = o_g * jnp.tanh(c_d)
            dec_hs.append(h_d)
        dec_all = jnp.concatenate(dec_hs, axis=0)                      # (T*B, 128)

        # -------- fused output heads [pitch | step | duration | pad] (lane-dense) --
        w_heads = w_ref[R_WHEADS:R_WHEADS + HID, 0:GW]
        b_heads = w_ref[R_B_HEADS:R_B_HEADS + 1, 0:GW]
        heads_ref[...] = jnp.dot(dec_all, w_heads,
                                 preferred_element_type=f32) + b_heads

    return kernel


def run_fused(x_all, w_slab):
    T, B, P = SEQ_LEN, BATCH, NUM_PITCHES
    kernel = _make_fused_kernel(T, B, P)
    return pl.pallas_call(
        kernel,
        out_shape=jax.ShapeDtypeStruct((T * B, GW), jnp.float32),
        in_specs=[_vmem_spec(), _vmem_spec()],
        out_specs=_vmem_spec(),
    )(x_all, w_slab)


# ------------------------------ parameter setup ------------------------------
def init_params(key):
    keys = jax.random.split(key, 20)

    def w(k, shape, scale=0.1):
        return (scale * jax.random.normal(k, shape)).astype(jnp.float32)

    p = {}
    p['embedding'] = w(keys[0], (NUM_PITCHES, EMBEDDING_SIZE))

    # encoder LSTM (gate order i,f,g,o; weights pre-transposed, b = b_ih + b_hh)
    p['enc_wih_f'] = w(keys[1], (FEAT, 4 * ENCODER_HIDDEN))
    p['enc_whh_f'] = w(keys[2], (ENCODER_HIDDEN, 4 * ENCODER_HIDDEN))
    p['enc_b_f'] = w(keys[3], (1, 4 * ENCODER_HIDDEN))
    p['enc_wih_b'] = w(keys[4], (FEAT, 4 * ENCODER_HIDDEN))
    p['enc_whh_b'] = w(keys[5], (ENCODER_HIDDEN, 4 * ENCODER_HIDDEN))
    p['enc_b_b'] = w(keys[6], (1, 4 * ENCODER_HIDDEN))

    enc_out_dim = ENCODER_HIDDEN * (2 if ENCODER_BIDIRECTIONAL else 1)
    p['wh'] = w(keys[7], (enc_out_dim, ENCODING_SIZE))
    p['bh'] = w(keys[8], (1, ENCODING_SIZE))
    p['wc'] = w(keys[9], (enc_out_dim, ENCODING_SIZE))
    p['bc'] = w(keys[10], (1, ENCODING_SIZE))

    # decoder LSTM
    p['dec_wih'] = w(keys[11], (FEAT, 4 * DECODER_HIDDEN))
    p['dec_whh'] = w(keys[12], (DECODER_HIDDEN, 4 * DECODER_HIDDEN))
    p['dec_b'] = w(keys[13], (1, 4 * DECODER_HIDDEN))

    # output heads
    p['wp'] = w(keys[14], (DECODER_HIDDEN, NUM_PITCHES))
    p['bp'] = w(keys[15], (1, NUM_PITCHES))
    p['ws'] = w(keys[16], (ENCODER_HIDDEN, 1))
    p['bs'] = w(keys[17], (1, 1))
    p['wd'] = w(keys[18], (ENCODER_HIDDEN, 1))
    p['bd'] = w(keys[19], (1, 1))
    return p


def pack_params(p):
    """Build the single fused weight slab consumed by the kernel (done once).

    NOTE for checkpoint import: weights must be pre-transposed to (in, out) and
    LSTM biases pre-combined (b = b_ih + b_hh), PyTorch gate order i,f,g,o.
    """
    f32 = jnp.float32
    H, Hd, E, P, F = ENCODER_HIDDEN, DECODER_HIDDEN, ENCODING_SIZE, NUM_PITCHES, FEAT

    def scatter_gates(w_mat, n, lane_off):
        # (R, 4n) -> (R, 4*GW): gate g (width n) placed at lanes [g*GW+lane_off, +n)
        R = w_mat.shape[0]
        out = jnp.zeros((R, 4 * GW), f32)
        for g in range(4):
            out = out.at[:, g * GW + lane_off:g * GW + lane_off + n].set(
                w_mat[:, g * n:(g + 1) * n])
        return out

    slab = jnp.zeros((R_TOTAL, COLS), f32)

    # encoder input->gate: x_all cols [0:F] drive fwd lanes, [F:2F] drive bwd lanes
    slab = slab.at[R_WIH_ENC:R_WIH_ENC + F, :].set(scatter_gates(p['enc_wih_f'], H, 0))
    slab = slab.at[R_WIH_ENC + F:R_WIH_ENC + 2 * F, :].set(
        scatter_gates(p['enc_wih_b'], H, H))
    slab = slab.at[R_B_ENC, :].set(
        scatter_gates(p['enc_b_f'], H, 0)[0] + scatter_gates(p['enc_b_b'], H, H)[0])
    # encoder recurrent: fwd hidden (rows 0:H) -> fwd gate lanes, bwd -> bwd lanes
    slab = slab.at[R_WHH_ENC:R_WHH_ENC + H, :].set(scatter_gates(p['enc_whh_f'], H, 0))
    slab = slab.at[R_WHH_ENC + H:R_WHH_ENC + 2 * H, :].set(
        scatter_gates(p['enc_whh_b'], H, H))

    # decoder input->gate / recurrent
    slab = slab.at[R_WIH_DEC:R_WIH_DEC + F, :].set(scatter_gates(p['dec_wih'], Hd, 0))
    slab = slab.at[R_B_DEC, :].set(scatter_gates(p['dec_b'], Hd, 0)[0])
    slab = slab.at[R_WHH_DEC:R_WHH_DEC + Hd, :].set(scatter_gates(p['dec_whh'], Hd, 0))

    # encoding layers (h0 | c0) from pooled [fwd 0:H | bwd H:2H | pad]
    slab = slab.at[R_WHC:R_WHC + 2 * H, 0:E].set(p['wh'])
    slab = slab.at[R_WHC:R_WHC + 2 * H, HID:HID + E].set(p['wc'])
    slab = slab.at[R_B_HC, 0:E].set(p['bh'][0])
    slab = slab.at[R_B_HC, HID:HID + E].set(p['bc'][0])

    # output heads [pitch | step | duration], lane-dense padded to 128
    slab = slab.at[R_WHEADS:R_WHEADS + Hd, 0:P].set(p['wp'])
    slab = slab.at[R_WHEADS:R_WHEADS + Hd, P:P + 1].set(p['ws'])
    slab = slab.at[R_WHEADS:R_WHEADS + Hd, P + 1:P + 2].set(p['wd'])
    slab = slab.at[R_B_HEADS, 0:P].set(p['bp'][0])
    slab = slab.at[R_B_HEADS, P].set(p['bs'][0, 0])
    slab = slab.at[R_B_HEADS, P + 1].set(p['bd'][0, 0])
    return slab


# -------------------------------- full forward -------------------------------
@functools.partial(jax.jit, static_argnames=("sequence_length",))
def lstm_encoder_decoder_forward(weight_slab, embedding,
                                 encoder_input_pitch, encoder_input_step,
                                 encoder_input_duration,
                                 decoder_input_pitch, decoder_input_step,
                                 decoder_input_duration,
                                 sequence_length):
    B, T = encoder_input_pitch.shape
    assert sequence_length == T
    P = NUM_PITCHES
    F = FEAT

    # TODO(synk): embedding gather + feature concat kept as XLA ops (gather is
    # best handled by XLA at this size); reference's float64 mapped to float32.
    def features_tm(pitch_ids, step, dur):
        pe = jnp.take(embedding, pitch_ids, axis=0)                  # (B, T, E)
        feat = jnp.concatenate(
            [pe,
             step.astype(jnp.float32)[..., None],
             dur.astype(jnp.float32)[..., None]], axis=-1)           # (B, T, F)
        return jnp.transpose(feat, (1, 0, 2))                        # (T, B, F)

    enc_f = features_tm(encoder_input_pitch, encoder_input_step, encoder_input_duration)
    dec_f = features_tm(decoder_input_pitch, decoder_input_step, decoder_input_duration)

    # Encoder row t*B+b = [x_t | x_{T-1-t}] -> fwd/bwd selection baked into layout.
    enc_rows = jnp.concatenate([enc_f, enc_f[::-1]], axis=-1).reshape(T * B, 2 * F)
    dec_rows = jnp.concatenate([dec_f, jnp.zeros_like(dec_f)], axis=-1).reshape(T * B, 2 * F)
    x_rows = jnp.concatenate([enc_rows, dec_rows], axis=0)           # (2*T*B, 2F)
    x_all = jnp.pad(x_rows, ((0, 0), (0, X_COLS - 2 * F)))           # (2*T*B, 32)

    heads = run_fused(x_all, weight_slab)                            # (T*B, 128)
    heads = heads.reshape(T, B, GW)

    pitch_out = jnp.transpose(heads[:, :, :P], (1, 2, 0))            # (B, num_pitches, T)
    step_out = jnp.transpose(heads[:, :, P], (1, 0))                 # (B, T)
    dur_out = jnp.transpose(heads[:, :, P + 1], (1, 0))              # (B, T)
    return pitch_out, step_out, dur_out


# ------------------------------------ main -----------------------------------
if __name__ == "__main__":
    key = jax.random.PRNGKey(0)
    pkey, ikey = jax.random.split(key)
    params = init_params(pkey)
    weight_slab = pack_params(params)

    k = jax.random.split(ikey, 6)
    enc_pitch = jax.random.randint(k[0], (BATCH, SEQ_LEN), 0, NUM_PITCHES, dtype=jnp.int32)
    enc_step = jax.random.uniform(k[1], (BATCH, SEQ_LEN), dtype=jnp.float32)
    enc_dur = jax.random.uniform(k[2], (BATCH, SEQ_LEN), dtype=jnp.float32)
    dec_pitch = jax.random.randint(k[3], (BATCH, SEQ_LEN), 0, NUM_PITCHES, dtype=jnp.int32)
    dec_step = jax.random.uniform(k[4], (BATCH, SEQ_LEN), dtype=jnp.float32)
    dec_dur = jax.random.uniform(k[5], (BATCH, SEQ_LEN), dtype=jnp.float32)

    pitch_out, step_out, dur_out = lstm_encoder_decoder_forward(
        weight_slab, params['embedding'],
        enc_pitch, enc_step, enc_dur, dec_pitch, dec_step, dec_dur,
        sequence_length=SEQ_LEN)

    jax.block_until_ready((pitch_out, step_out, dur_out))
    assert pitch_out.shape == (BATCH, NUM_PITCHES, SEQ_LEN)
    assert step_out.shape == (BATCH, SEQ_LEN)
    assert dur_out.shape == (BATCH, SEQ_LEN)
    print("KERNEL_OK")
</pallas_src>

<mosaic_0001>
module attributes {stable_mosaic.version = 11 : i64} {
  func.func @kernel(%arg0: memref<32x32xf32, #tpu.memory_space<vmem>>, %arg1: memref<608x512xf32, #tpu.memory_space<vmem>>, %arg2: memref<16x128xf32, #tpu.memory_space<vmem>>) attributes {dimension_semantics = [], scalar_prefetch = 0 : i64, scratch_operands = 0 : i64, tpu.core_type = #tpu.core_type<tc>} {
    %c0 = arith.constant 0 : index
    %c0_0 = arith.constant 0 : index
    %0 = vector.load %arg1[%c0, %c0_0] : memref<608x512xf32, #tpu.memory_space<vmem>>, vector<32x512xf32>
    %c32 = arith.constant 32 : index
    %c0_1 = arith.constant 0 : index
    %1 = vector.load %arg1[%c32, %c0_1] : memref<608x512xf32, #tpu.memory_space<vmem>>, vector<1x512xf32>
    %c0_2 = arith.constant 0 : index
    %c0_3 = arith.constant 0 : index
    %2 = vector.load %arg0[%c0_2, %c0_3] : memref<32x32xf32, #tpu.memory_space<vmem>>, vector<16x32xf32>
    %cst = arith.constant dense<0.000000e+00> : vector<16x512xf32>
    %3 = tpu.matmul %2, %0, %cst {dimension_numbers = #tpu.dot_dimension_numbers<[1], [0], [0], [1], [0, 0, 1, 1], [], []>} : vector<16x32xf32>, vector<32x512xf32>, vector<16x512xf32> -> vector<16x512xf32>
    %4 = vector.broadcast %1 : vector<1x512xf32> to vector<16x512xf32>
    %5 = arith.addf %3, %4 : vector<16x512xf32>
    %c40 = arith.constant 40 : index
    %c0_4 = arith.constant 0 : index
    %6 = vector.load %arg1[%c40, %c0_4] : memref<608x512xf32, #tpu.memory_space<vmem>>, vector<128x512xf32>
    %cst_5 = arith.constant 0.000000e+00 : f32
    %7 = vector.broadcast %cst_5 : f32 to vector<2x128xf32>
    %cst_6 = arith.constant 0.000000e+00 : f32
    %8 = vector.broadcast %cst_6 : f32 to vector<2x128xf32>
    %9 = vector.extract_strided_slice %5 {offsets = [0, 0], sizes = [2, 512], strides = [1, 1]} : vector<16x512xf32> to vector<2x512xf32>
    %cst_7 = arith.constant dense<0.000000e+00> : vector<2x512xf32>
    %10 = tpu.matmul %7, %6, %cst_7 {dimension_numbers = #tpu.dot_dimension_numbers<[1], [0], [0], [1], [0, 0, 1, 1], [], []>} : vector<2x128xf32>, vector<128x512xf32>, vector<2x512xf32> -> vector<2x512xf32>
    %11 = arith.addf %9, %10 : vector<2x512xf32>
    %12 = vector.extract_strided_slice %11 {offsets = [0, 0], sizes = [2, 128], strides = [1, 1]} : vector<2x512xf32> to vector<2x128xf32>
    %13 = arith.negf %12 : vector<2x128xf32>
    %14 = math.exp %13 : vector<2x128xf32>
    %cst_8 = arith.constant 1.000000e+00 : f32
    %15 = vector.broadcast %cst_8 : f32 to vector<2x128xf32>
    %16 = arith.addf %15, %14 : vector<2x128xf32>
    %17 = arith.divf %15, %16 : vector<2x128xf32>
    %18 = vector.extract_strided_slice %11 {offsets = [0, 128], sizes = [2, 128], strides = [1, 1]} : vector<2x512xf32> to vector<2x128xf32>
    %19 = arith.negf %18 : vector<2x128xf32>
    %20 = math.exp %19 : vector<2x128xf32>
    %cst_9 = arith.constant 1.000000e+00 : f32
    %21 = vector.broadcast %cst_9 : f32 to vector<2x128xf32>
    %22 = arith.addf %21, %20 : vector<2x128xf32>
    %23 = arith.divf %21, %22 : vector<2x128xf32>
    %24 = vector.extract_strided_slice %11 {offsets = [0, 256], sizes = [2, 128], strides = [1, 1]} : vector<2x512xf32> to vector<2x128xf32>
    %25 = math.tanh %24 : vector<2x128xf32>
    %26 = vector.extract_strided_slice %11 {offsets = [0, 384], sizes = [2, 128], strides = [1, 1]} : vector<2x512xf32> to vector<2x128xf32>
    %27 = arith.negf %26 : vector<2x128xf32>
    %28 = math.exp %27 : vector<2x128xf32>
    %cst_10 = arith.constant 1.000000e+00 : f32
    %29 = vector.broadcast %cst_10 : f32 to vector<2x128xf32>
    %30 = arith.addf %29, %28 : vector<2x128xf32>
    %31 = arith.divf %29, %30 : vector<2x128xf32>
    %32 = arith.mulf %23, %8 : vector<2x128xf32>
    %33 = arith.mulf %17, %25 : vector<2x128xf32>
    %34 = arith.addf %32, %33 : vector<2x128xf32>
    %35 = math.tanh %34 : vector<2x128xf32>
    %36 = arith.mulf %31, %35 : vector<2x128xf32>
    %37 = vector.extract_strided_slice %5 {offsets = [2, 0], sizes = [2, 512], strides = [1, 1]} : vector<16x512xf32> to vector<2x512xf32>
    %cst_11 = arith.constant dense<0.000000e+00> : vector<2x512xf32>
    %38 = tpu.matmul %36, %6, %cst_11 {dimension_numbers = #tpu.dot_dimension_numbers<[1], [0], [0], [1], [0, 0, 1, 1], [], []>} : vector<2x128xf32>, vector<128x512xf32>, vector<2x512xf32> -> vector<2x512xf32>
    %39 = arith.addf %37, %38 : vector<2x512xf32>
    %40 = vector.extract_strided_slice %39 {offsets = [0, 0], sizes = [2, 128], strides = [1, 1]} : vector<2x512xf32> to vector<2x128xf32>
    %41 = arith.negf %40 : vector<2x128xf32>
    %42 = math.exp %41 : vector<2x128xf32>
    %cst_12 = arith.constant 1.000000e+00 : f32
    %43 = vector.broadcast %cst_12 : f32 to vector<2x128xf32>
    %44 = arith.addf %43, %42 : vector<2x128xf32>
    %45 = arith.divf %43, %44 : vector<2x128xf32>
    %46 = vector.extract_strided_slice %39 {offsets = [0, 128], sizes = [2, 128], strides = [1, 1]} : vector<2x512xf32> to vector<2x128xf32>
    %47 = arith.negf %46 : vector<2x128xf32>
    %48 = math.exp %47 : vector<2x128xf32>
    %cst_13 = arith.constant 1.000000e+00 : f32
    %49 = vector.broadcast %cst_13 : f32 to vector<2x128xf32>
    %50 = arith.addf %49, %48 : vector<2x128xf32>
    %51 = arith.divf %49, %50 : vector<2x128xf32>
    %52 = vector.extract_strided_slice %39 {offsets = [0, 256], sizes = [2, 128], strides = [1, 1]} : vector<2x512xf32> to vector<2x128xf32>
    %53 = math.tanh %52 : vector<2x128xf32>
    %54 = vector.extract_strided_slice %39 {offsets = [0, 384], sizes = [2, 128], strides = [1, 1]} : vector<2x512xf32> to vector<2x128xf32>
    %55 = arith.negf %54 : vector<2x128xf32>
    %56 = math.exp %55 : vector<2x128xf32>
    %cst_14 = arith.constant 1.000000e+00 : f32
    %57 = vector.broadcast %cst_14 : f32 to vector<2x128xf32>
    %58 = arith.addf %57, %56 : vector<2x128xf32>
    %59 = arith.divf %57, %58 : vector<2x128xf32>
    %60 = arith.mulf %51, %34 : vector<2x128xf32>
    %61 = arith.mulf %45, %53 : vector<2x128xf32>
    %62 = arith.addf %60, %61 : vector<2x128xf32>
    %63 = math.tanh %62 : vector<2x128xf32>
    %64 = arith.mulf %59, %63 : vector<2x128xf32>
    %65 = arith.maximumf %36, %64 : vector<2x128xf32>
    %66 = vector.extract_strided_slice %5 {offsets = [4, 0], sizes = [2, 512], strides = [1, 1]} : vector<16x512xf32> to vector<2x512xf32>
    %cst_15 = arith.constant dense<0.000000e+00> : vector<2x512xf32>
    %67 = tpu.matmul %64, %6, %cst_15 {dimension_numbers = #tpu.dot_dimension_numbers<[1], [0], [0], [1], [0, 0, 1, 1], [], []>} : vector<2x128xf32>, vector<128x512xf32>, vector<2x512xf32> -> vector<2x512xf32>
    %68 = arith.addf %66, %67 : vector<2x512xf32>
    %69 = vector.extract_strided_slice %68 {offsets = [0, 0], sizes = [2, 128], strides = [1, 1]} : vector<2x512xf32> to vector<2x128xf32>
    %70 = arith.negf %69 : vector<2x128xf32>
    %71 = math.exp %70 : vector<2x128xf32>
    %cst_16 = arith.constant 1.000000e+00 : f32
    %72 = vector.broadcast %cst_16 : f32 to vector<2x128xf32>
    %73 = arith.addf %72, %71 : vector<2x128xf32>
    %74 = arith.divf %72, %73 : vector<2x128xf32>
    %75 = vector.extract_strided_slice %68 {offsets = [0, 128], sizes = [2, 128], strides = [1, 1]} : vector<2x512xf32> to vector<2x128xf32>
    %76 = arith.negf %75 : vector<2x128xf32>
    %77 = math.exp %76 : vector<2x128xf32>
    %cst_17 = arith.constant 1.000000e+00 : f32
    %78 = vector.broadcast %cst_17 : f32 to vector<2x128xf32>
    %79 = arith.addf %78, %77 : vector<2x128xf32>
    %80 = arith.divf %78, %79 : vector<2x128xf32>
    %81 = vector.extract_strided_slice %68 {offsets = [0, 256], sizes = [2, 128], strides = [1, 1]} : vector<2x512xf32> to vector<2x128xf32>
    %82 = math.tanh %81 : vector<2x128xf32>
    %83 = vector.extract_strided_slice %68 {offsets = [0, 384], sizes = [2, 128], strides = [1, 1]} : vector<2x512xf32> to vector<2x128xf32>
    %84 = arith.negf %83 : vector<2x128xf32>
    %85 = math.exp %84 : vector<2x128xf32>
    %cst_18 = arith.constant 1.000000e+00 : f32
    %86 = vector.broadcast %cst_18 : f32 to vector<2x128xf32>
    %87 = arith.addf %86, %85 : vector<2x128xf32>
    %88 = arith.divf %86, %87 : vector<2x128xf32>
    %89 = arith.mulf %80, %62 : vector<2x128xf32>
    %90 = arith.mulf %74, %82 : vector<2x128xf32>
    %91 = arith.addf %89, %90 : vector<2x128xf32>
    %92 = math.tanh %91 : vector<2x128xf32>
    %93 = arith.mulf %88, %92 : vector<2x128xf32>
    %94 = arith.maximumf %65, %93 : vector<2x128xf32>
    %95 = vector.extract_strided_slice %5 {offsets = [6, 0], sizes = [2, 512], strides = [1, 1]} : vector<16x512xf32> to vector<2x512xf32>
    %cst_19 = arith.constant dense<0.000000e+00> : vector<2x512xf32>
    %96 = tpu.matmul %93, %6, %cst_19 {dimension_numbers = #tpu.dot_dimension_numbers<[1], [0], [0], [1], [0, 0, 1, 1], [], []>} : vector<2x128xf32>, vector<128x512xf32>, vector<2x512xf32> -> vector<2x512xf32>
    %97 = arith.addf %95, %96 : vector<2x512xf32>
    %98 = vector.extract_strided_slice %97 {offsets = [0, 0], sizes = [2, 128], strides = [1, 1]} : vector<2x512xf32> to vector<2x128xf32>
    %99 = arith.negf %98 : vector<2x128xf32>
    %100 = math.exp %99 : vector<2x128xf32>
    %cst_20 = arith.constant 1.000000e+00 : f32
    %101 = vector.broadcast %cst_20 : f32 to vector<2x128xf32>
    %102 = arith.addf %101, %100 : vector<2x128xf32>
    %103 = arith.divf %101, %102 : vector<2x128xf32>
    %104 = vector.extract_strided_slice %97 {offsets = [0, 128], sizes = [2, 128], strides = [1, 1]} : vector<2x512xf32> to vector<2x128xf32>
    %105 = arith.negf %104 : vector<2x128xf32>
    %106 = math.exp %105 : vector<2x128xf32>
    %cst_21 = arith.constant 1.000000e+00 : f32
    %107 = vector.broadcast %cst_21 : f32 to vector<2x128xf32>
    %108 = arith.addf %107, %106 : vector<2x128xf32>
    %109 = arith.divf %107, %108 : vector<2x128xf32>
    %110 = vector.extract_strided_slice %97 {offsets = [0, 256], sizes = [2, 128], strides = [1, 1]} : vector<2x512xf32> to vector<2x128xf32>
    %111 = math.tanh %110 : vector<2x128xf32>
    %112 = vector.extract_strided_slice %97 {offsets = [0, 384], sizes = [2, 128], strides = [1, 1]} : vector<2x512xf32> to vector<2x128xf32>
    %113 = arith.negf %112 : vector<2x128xf32>
    %114 = math.exp %113 : vector<2x128xf32>
    %cst_22 = arith.constant 1.000000e+00 : f32
    %115 = vector.broadcast %cst_22 : f32 to vector<2x128xf32>
    %116 = arith.addf %115, %114 : vector<2x128xf32>
    %117 = arith.divf %115, %116 : vector<2x128xf32>
    %118 = arith.mulf %109, %91 : vector<2x128xf32>
    %119 = arith.mulf %103, %111 : vector<2x128xf32>
    %120 = arith.addf %118, %119 : vector<2x128xf32>
    %121 = math.tanh %120 : vector<2x128xf32>
    %122 = arith.mulf %117, %121 : vector<2x128xf32>
    %123 = arith.maximumf %94, %122 : vector<2x128xf32>
    %124 = vector.extract_strided_slice %5 {offsets = [8, 0], sizes = [2, 512], strides = [1, 1]} : vector<16x512xf32> to vector<2x512xf32>
    %cst_23 = arith.constant dense<0.000000e+00> : vector<2x512xf32>
    %125 = tpu.matmul %122, %6, %cst_23 {dimension_numbers = #tpu.dot_dimension_numbers<[1], [0], [0], [1], [0, 0, 1, 1], [], []>} : vector<2x128xf32>, vector<128x512xf32>, vector<2x512xf32> -> vector<2x512xf32>
    %126 = arith.addf %124, %125 : vector<2x512xf32>
    %127 = vector.extract_strided_slice %126 {offsets = [0, 0], sizes = [2, 128], strides = [1, 1]} : vector<2x512xf32> to vector<2x128xf32>
    %128 = arith.negf %127 : vector<2x128xf32>
    %129 = math.exp %128 : vector<2x128xf32>
    %cst_24 = arith.constant 1.000000e+00 : f32
    %130 = vector.broadcast %cst_24 : f32 to vector<2x128xf32>
    %131 = arith.addf %130, %129 : vector<2x128xf32>
    %132 = arith.divf %130, %131 : vector<2x128xf32>
    %133 = vector.extract_strided_slice %126 {offsets = [0, 128], sizes = [2, 128], strides = [1, 1]} : vector<2x512xf32> to vector<2x128xf32>
    %134 = arith.negf %133 : vector<2x128xf32>
    %135 = math.exp %134 : vector<2x128xf32>
    %cst_25 = arith.constant 1.000000e+00 : f32
    %136 = vector.broadcast %cst_25 : f32 to vector<2x128xf32>
    %137 = arith.addf %136, %135 : vector<2x128xf32>
    %138 = arith.divf %136, %137 : vector<2x128xf32>
    %139 = vector.extract_strided_slice %126 {offsets = [0, 256], sizes = [2, 128], strides = [1, 1]} : vector<2x512xf32> to vector<2x128xf32>
    %140 = math.tanh %139 : vector<2x128xf32>
    %141 = vector.extract_strided_slice %126 {offsets = [0, 384], sizes = [2, 128], strides = [1, 1]} : vector<2x512xf32> to vector<2x128xf32>
    %142 = arith.negf %141 : vector<2x128xf32>
    %143 = math.exp %142 : vector<2x128xf32>
    %cst_26 = arith.constant 1.000000e+00 : f32
    %144 = vector.broadcast %cst_26 : f32 to vector<2x128xf32>
    %145 = arith.addf %144, %143 : vector<2x128xf32>
    %146 = arith.divf %144, %145 : vector<2x128xf32>
    %147 = arith.mulf %138, %120 : vector<2x128xf32>
    %148 = arith.mulf %132, %140 : vector<2x128xf32>
    %149 = arith.addf %147, %148 : vector<2x128xf32>
    %150 = math.tanh %149 : vector<2x128xf32>
    %151 = arith.mulf %146, %150 : vector<2x128xf32>
    %152 = arith.maximumf %123, %151 : vector<2x128xf32>
    %153 = vector.extract_strided_slice %5 {offsets = [10, 0], sizes = [2, 512], strides = [1, 1]} : vector<16x512xf32> to vector<2x512xf32>
    %cst_27 = arith.constant dense<0.000000e+00> : vector<2x512xf32>
    %154 = tpu.matmul %151, %6, %cst_27 {dimension_numbers = #tpu.dot_dimension_numbers<[1], [0], [0], [1], [0, 0, 1, 1], [], []>} : vector<2x128xf32>, vector<128x512xf32>, vector<2x512xf32> -> vector<2x512xf32>
    %155 = arith.addf %153, %154 : vector<2x512xf32>
    %156 = vector.extract_strided_slice %155 {offsets = [0, 0], sizes = [2, 128], strides = [1, 1]} : vector<2x512xf32> to vector<2x128xf32>
    %157 = arith.negf %156 : vector<2x128xf32>
    %158 = math.exp %157 : vector<2x128xf32>
    %cst_28 = arith.constant 1.000000e+00 : f32
    %159 = vector.broadcast %cst_28 : f32 to vector<2x128xf32>
    %160 = arith.addf %159, %158 : vector<2x128xf32>
    %161 = arith.divf %159, %160 : vector<2x128xf32>
    %162 = vector.extract_strided_slice %155 {offsets = [0, 128], sizes = [2, 128], strides = [1, 1]} : vector<2x512xf32> to vector<2x128xf32>
    %163 = arith.negf %162 : vector<2x128xf32>
    %164 = math.exp %163 : vector<2x128xf32>
    %cst_29 = arith.constant 1.000000e+00 : f32
    %165 = vector.broadcast %cst_29 : f32 to vector<2x128xf32>
    %166 = arith.addf %165, %164 : vector<2x128xf32>
    %167 = arith.divf %165, %166 : vector<2x128xf32>
    %168 = vector.extract_strided_slice %155 {offsets = [0, 256], sizes = [2, 128], strides = [1, 1]} : vector<2x512xf32> to vector<2x128xf32>
    %169 = math.tanh %168 : vector<2x128xf32>
    %170 = vector.extract_strided_slice %155 {offsets = [0, 384], sizes = [2, 128], strides = [1, 1]} : vector<2x512xf32> to vector<2x128xf32>
    %171 = arith.negf %170 : vector<2x128xf32>
    %172 = math.exp %171 : vector<2x128xf32>
    %cst_30 = arith.constant 1.000000e+00 : f32
    %173 = vector.broadcast %cst_30 : f32 to vector<2x128xf32>
    %174 = arith.addf %173, %172 : vector<2x128xf32>
    %175 = arith.divf %173, %174 : vector<2x128xf32>
    %176 = arith.mulf %167, %149 : vector<2x128xf32>
    %177 = arith.mulf %161, %169 : vector<2x128xf32>
    %178 = arith.addf %176, %177 : vector<2x128xf32>
    %179 = math.tanh %178 : vector<2x128xf32>
    %180 = arith.mulf %175, %179 : vector<2x128xf32>
    %181 = arith.maximumf %152, %180 : vector<2x128xf32>
    %182 = vector.extract_strided_slice %5 {offsets = [12, 0], sizes = [2, 512], strides = [1, 1]} : vector<16x512xf32> to vector<2x512xf32>
    %cst_31 = arith.constant dense<0.000000e+00> : vector<2x512xf32>
    %183 = tpu.matmul %180, %6, %cst_31 {dimension_numbers = #tpu.dot_dimension_numbers<[1], [0], [0], [1], [0, 0, 1, 1], [], []>} : vector<2x128xf32>, vector<128x512xf32>, vector<2x512xf32> -> vector<2x512xf32>
    %184 = arith.addf %182, %183 : vector<2x512xf32>
    %185 = vector.extract_strided_slice %184 {offsets = [0, 0], sizes = [2, 128], strides = [1, 1]} : vector<2x512xf32> to vector<2x128xf32>
    %186 = arith.negf %185 : vector<2x128xf32>
    %187 = math.exp %186 : vector<2x128xf32>
    %cst_32 = arith.constant 1.000000e+00 : f32
    %188 = vector.broadcast %cst_32 : f32 to vector<2x128xf32>
    %189 = arith.addf %188, %187 : vector<2x128xf32>
    %190 = arith.divf %188, %189 : vector<2x128xf32>
    %191 = vector.extract_strided_slice %184 {offsets = [0, 128], sizes = [2, 128], strides = [1, 1]} : vector<2x512xf32> to vector<2x128xf32>
    %192 = arith.negf %191 : vector<2x128xf32>
    %193 = math.exp %192 : vector<2x128xf32>
    %cst_33 = arith.constant 1.000000e+00 : f32
    %194 = vector.broadcast %cst_33 : f32 to vector<2x128xf32>
    %195 = arith.addf %194, %193 : vector<2x128xf32>
    %196 = arith.divf %194, %195 : vector<2x128xf32>
    %197 = vector.extract_strided_slice %184 {offsets = [0, 256], sizes = [2, 128], strides = [1, 1]} : vector<2x512xf32> to vector<2x128xf32>
    %198 = math.tanh %197 : vector<2x128xf32>
    %199 = vector.extract_strided_slice %184 {offsets = [0, 384], sizes = [2, 128], strides = [1, 1]} : vector<2x512xf32> to vector<2x128xf32>
    %200 = arith.negf %199 : vector<2x128xf32>
    %201 = math.exp %200 : vector<2x128xf32>
    %cst_34 = arith.constant 1.000000e+00 : f32
    %202 = vector.broadcast %cst_34 : f32 to vector<2x128xf32>
    %203 = arith.addf %202, %201 : vector<2x128xf32>
    %204 = arith.divf %202, %203 : vector<2x128xf32>
    %205 = arith.mulf %196, %178 : vector<2x128xf32>
    %206 = arith.mulf %190, %198 : vector<2x128xf32>
    %207 = arith.addf %205, %206 : vector<2x128xf32>
    %208 = math.tanh %207 : vector<2x128xf32>
    %209 = arith.mulf %204, %208 : vector<2x128xf32>
    %210 = arith.maximumf %181, %209 : vector<2x128xf32>
    %211 = vector.extract_strided_slice %5 {offsets = [14, 0], sizes = [2, 512], strides = [1, 1]} : vector<16x512xf32> to vector<2x512xf32>
    %cst_35 = arith.constant dense<0.000000e+00> : vector<2x512xf32>
    %212 = tpu.matmul %209, %6, %cst_35 {dimension_numbers = #tpu.dot_dimension_numbers<[1], [0], [0], [1], [0, 0, 1, 1], [], []>} : vector<2x128xf32>, vector<128x512xf32>, vector<2x512xf32> -> vector<2x512xf32>
    %213 = arith.addf %211, %212 : vector<2x512xf32>
    %214 = vector.extract_strided_slice %213 {offsets = [0, 0], sizes = [2, 128], strides = [1, 1]} : vector<2x512xf32> to vector<2x128xf32>
    %215 = arith.negf %214 : vector<2x128xf32>
    %216 = math.exp %215 : vector<2x128xf32>
    %cst_36 = arith.constant 1.000000e+00 : f32
    %217 = vector.broadcast %cst_36 : f32 to vector<2x128xf32>
    %218 = arith.addf %217, %216 : vector<2x128xf32>
    %219 = arith.divf %217, %218 : vector<2x128xf32>
    %220 = vector.extract_strided_slice %213 {offsets = [0, 128], sizes = [2, 128], strides = [1, 1]} : vector<2x512xf32> to vector<2x128xf32>
    %221 = arith.negf %220 : vector<2x128xf32>
    %222 = math.exp %221 : vector<2x128xf32>
    %cst_37 = arith.constant 1.000000e+00 : f32
    %223 = vector.broadcast %cst_37 : f32 to vector<2x128xf32>
    %224 = arith.addf %223, %222 : vector<2x128xf32>
    %225 = arith.divf %223, %224 : vector<2x128xf32>
    %226 = vector.extract_strided_slice %213 {offsets = [0, 256], sizes = [2, 128], strides = [1, 1]} : vector<2x512xf32> to vector<2x128xf32>
    %227 = math.tanh %226 : vector<2x128xf32>
    %228 = vector.extract_strided_slice %213 {offsets = [0, 384], sizes = [2, 128], strides = [1, 1]} : vector<2x512xf32> to vector<2x128xf32>
    %229 = arith.negf %228 : vector<2x128xf32>
    %230 = math.exp %229 : vector<2x128xf32>
    %cst_38 = arith.constant 1.000000e+00 : f32
    %231 = vector.broadcast %cst_38 : f32 to vector<2x128xf32>
    %232 = arith.addf %231, %230 : vector<2x128xf32>
    %233 = arith.divf %231, %232 : vector<2x128xf32>
    %234 = arith.mulf %225, %207 : vector<2x128xf32>
    %235 = arith.mulf %219, %227 : vector<2x128xf32>
    %236 = arith.addf %234, %235 : vector<2x128xf32>
    %237 = math.tanh %236 : vector<2x128xf32>
    %238 = arith.mulf %233, %237 : vector<2x128xf32>
    %239 = arith.maximumf %210, %238 : vector<2x128xf32>
    %c336 = arith.constant 336 : index
    %c0_39 = arith.constant 0 : index
    %240 = vector.load %arg1[%c336, %c0_39] : memref<608x512xf32, #tpu.memory_space<vmem>>, vector<128x512xf32>
    %c464 = arith.constant 464 : index
    %c0_40 = arith.constant 0 : index
    %241 = vector.load %arg1[%c464, %c0_40] : memref<608x512xf32, #tpu.memory_space<vmem>>, vector<1x512xf32>
    %cst_41 = arith.constant dense<0.000000e+00> : vector<2x512xf32>
    %242 = tpu.matmul %239, %240, %cst_41 {dimension_numbers = #tpu.dot_dimension_numbers<[1], [0], [0], [1], [0, 0, 1, 1], [], []>} : vector<2x128xf32>, vector<128x512xf32>, vector<2x512xf32> -> vector<2x512xf32>
    %243 = vector.broadcast %241 : vector<1x512xf32> to vector<2x512xf32>
    %244 = arith.addf %242, %243 : vector<2x512xf32>
    %245 = vector.extract_strided_slice %244 {offsets = [0, 0], sizes = [2, 128], strides = [1, 1]} : vector<2x512xf32> to vector<2x128xf32>
    %246 = vector.extract_strided_slice %244 {offsets = [0, 128], sizes = [2, 128], strides = [1, 1]} : vector<2x512xf32> to vector<2x128xf32>
    %c168 = arith.constant 168 : index
    %c0_42 = arith.constant 0 : index
    %247 = vector.load %arg1[%c168, %c0_42] : memref<608x512xf32, #tpu.memory_space<vmem>>, vector<32x512xf32>
    %c200 = arith.constant 200 : index
    %c0_43 = arith.constant 0 : index
    %248 = vector.load %arg1[%c200, %c0_43] : memref<608x512xf32, #tpu.memory_space<vmem>>, vector<1x512xf32>
    %c16 = arith.constant 16 : index
    %c0_44 = arith.constant 0 : index
    %249 = vector.load %arg0[%c16, %c0_44] : memref<32x32xf32, #tpu.memory_space<vmem>>, vector<16x32xf32>
    %cst_45 = arith.constant dense<0.000000e+00> : vector<16x512xf32>
    %250 = tpu.matmul %249, %247, %cst_45 {dimension_numbers = #tpu.dot_dimension_numbers<[1], [0], [0], [1], [0, 0, 1, 1], [], []>} : vector<16x32xf32>, vector<32x512xf32>, vector<16x512xf32> -> vector<16x512xf32>
    %251 = vector.broadcast %248 : vector<1x512xf32> to vector<16x512xf32>
    %252 = arith.addf %250, %251 : vector<16x512xf32>
    %c208 = arith.constant 208 : index
    %c0_46 = arith.constant 0 : index
    %253 = vector.load %arg1[%c208, %c0_46] : memref<608x512xf32, #tpu.memory_space<vmem>>, vector<128x512xf32>
    %254 = vector.extract_strided_slice %252 {offsets = [0, 0], sizes = [2, 512], strides = [1, 1]} : vector<16x512xf32> to vector<2x512xf32>
    %cst_47 = arith.constant dense<0.000000e+00> : vector<2x512xf32>
    %255 = tpu.matmul %245, %253, %cst_47 {dimension_numbers = #tpu.dot_dimension_numbers<[1], [0], [0], [1], [0, 0, 1, 1], [], []>} : vector<2x128xf32>, vector<128x512xf32>, vector<2x512xf32> -> vector<2x512xf32>
    %256 = arith.addf %254, %255 : vector<2x512xf32>
    %257 = vector.extract_strided_slice %256 {offsets = [0, 0], sizes = [2, 128], strides = [1, 1]} : vector<2x512xf32> to vector<2x128xf32>
    %258 = arith.negf %257 : vector<2x128xf32>
    %259 = math.exp %258 : vector<2x128xf32>
    %cst_48 = arith.constant 1.000000e+00 : f32
    %260 = vector.broadcast %cst_48 : f32 to vector<2x128xf32>
    %261 = arith.addf %260, %259 : vector<2x128xf32>
    %262 = arith.divf %260, %261 : vector<2x128xf32>
    %263 = vector.extract_strided_slice %256 {offsets = [0, 128], sizes = [2, 128], strides = [1, 1]} : vector<2x512xf32> to vector<2x128xf32>
    %264 = arith.negf %263 : vector<2x128xf32>
    %265 = math.exp %264 : vector<2x128xf32>
    %cst_49 = arith.constant 1.000000e+00 : f32
    %266 = vector.broadcast %cst_49 : f32 to vector<2x128xf32>
    %267 = arith.addf %266, %265 : vector<2x128xf32>
    %268 = arith.divf %266, %267 : vector<2x128xf32>
    %269 = vector.extract_strided_slice %256 {offsets = [0, 256], sizes = [2, 128], strides = [1, 1]} : vector<2x512xf32> to vector<2x128xf32>
    %270 = math.tanh %269 : vector<2x128xf32>
    %271 = vector.extract_strided_slice %256 {offsets = [0, 384], sizes = [2, 128], strides = [1, 1]} : vector<2x512xf32> to vector<2x128xf32>
    %272 = arith.negf %271 : vector<2x128xf32>
    %273 = math.exp %272 : vector<2x128xf32>
    %cst_50 = arith.constant 1.000000e+00 : f32
    %274 = vector.broadcast %cst_50 : f32 to vector<2x128xf32>
    %275 = arith.addf %274, %273 : vector<2x128xf32>
    %276 = arith.divf %274, %275 : vector<2x128xf32>
    %277 = arith.mulf %268, %246 : vector<2x128xf32>
    %278 = arith.mulf %262, %270 : vector<2x128xf32>
    %279 = arith.addf %277, %278 : vector<2x128xf32>
    %280 = math.tanh %279 : vector<2x128xf32>
    %281 = arith.mulf %276, %280 : vector<2x128xf32>
    %282 = vector.extract_strided_slice %252 {offsets = [2, 0], sizes = [2, 512], strides = [1, 1]} : vector<16x512xf32> to vector<2x512xf32>
    %cst_51 = arith.constant dense<0.000000e+00> : vector<2x512xf32>
    %283 = tpu.matmul %281, %253, %cst_51 {dimension_numbers = #tpu.dot_dimension_numbers<[1], [0], [0], [1], [0, 0, 1, 1], [], []>} : vector<2x128xf32>, vector<128x512xf32>, vector<2x512xf32> -> vector<2x512xf32>
    %284 = arith.addf %282, %283 : vector<2x512xf32>
    %285 = vector.extract_strided_slice %284 {offsets = [0, 0], sizes = [2, 128], strides = [1, 1]} : vector<2x512xf32> to vector<2x128xf32>
    %286 = arith.negf %285 : vector<2x128xf32>
    %287 = math.exp %286 : vector<2x128xf32>
    %cst_52 = arith.constant 1.000000e+00 : f32
    %288 = vector.broadcast %cst_52 : f32 to vector<2x128xf32>
    %289 = arith.addf %288, %287 : vector<2x128xf32>
    %290 = arith.divf %288, %289 : vector<2x128xf32>
    %291 = vector.extract_strided_slice %284 {offsets = [0, 128], sizes = [2, 128], strides = [1, 1]} : vector<2x512xf32> to vector<2x128xf32>
    %292 = arith.negf %291 : vector<2x128xf32>
    %293 = math.exp %292 : vector<2x128xf32>
    %cst_53 = arith.constant 1.000000e+00 : f32
    %294 = vector.broadcast %cst_53 : f32 to vector<2x128xf32>
    %295 = arith.addf %294, %293 : vector<2x128xf32>
    %296 = arith.divf %294, %295 : vector<2x128xf32>
    %297 = vector.extract_strided_slice %284 {offsets = [0, 256], sizes = [2, 128], strides = [1, 1]} : vector<2x512xf32> to vector<2x128xf32>
    %298 = math.tanh %297 : vector<2x128xf32>
    %299 = vector.extract_strided_slice %284 {offsets = [0, 384], sizes = [2, 128], strides = [1, 1]} : vector<2x512xf32> to vector<2x128xf32>
    %300 = arith.negf %299 : vector<2x128xf32>
    %301 = math.exp %300 : vector<2x128xf32>
    %cst_54 = arith.constant 1.000000e+00 : f32
    %302 = vector.broadcast %cst_54 : f32 to vector<2x128xf32>
    %303 = arith.addf %302, %301 : vector<2x128xf32>
    %304 = arith.divf %302, %303 : vector<2x128xf32>
    %305 = arith.mulf %296, %279 : vector<2x128xf32>
    %306 = arith.mulf %290, %298 : vector<2x128xf32>
    %307 = arith.addf %305, %306 : vector<2x128xf32>
    %308 = math.tanh %307 : vector<2x128xf32>
    %309 = arith.mulf %304, %308 : vector<2x128xf32>
    %310 = vector.extract_strided_slice %252 {offsets = [4, 0], sizes = [2, 512], strides = [1, 1]} : vector<16x512xf32> to vector<2x512xf32>
    %cst_55 = arith.constant dense<0.000000e+00> : vector<2x512xf32>
    %311 = tpu.matmul %309, %253, %cst_55 {dimension_numbers = #tpu.dot_dimension_numbers<[1], [0], [0], [1], [0, 0, 1, 1], [], []>} : vector<2x128xf32>, vector<128x512xf32>, vector<2x512xf32> -> vector<2x512xf32>
    %312 = arith.addf %310, %311 : vector<2x512xf32>
    %313 = vector.extract_strided_slice %312 {offsets = [0, 0], sizes = [2, 128], strides = [1, 1]} : vector<2x512xf32> to vector<2x128xf32>
    %314 = arith.negf %313 : vector<2x128xf32>
    %315 = math.exp %314 : vector<2x128xf32>
    %cst_56 = arith.constant 1.000000e+00 : f32
    %316 = vector.broadcast %cst_56 : f32 to vector<2x128xf32>
    %317 = arith.addf %316, %315 : vector<2x128xf32>
    %318 = arith.divf %316, %317 : vector<2x128xf32>
    %319 = vector.extract_strided_slice %312 {offsets = [0, 128], sizes = [2, 128], strides = [1, 1]} : vector<2x512xf32> to vector<2x128xf32>
    %320 = arith.negf %319 : vector<2x128xf32>
    %321 = math.exp %320 : vector<2x128xf32>
    %cst_57 = arith.constant 1.000000e+00 : f32
    %322 = vector.broadcast %cst_57 : f32 to vector<2x128xf32>
    %323 = arith.addf %322, %321 : vector<2x128xf32>
    %324 = arith.divf %322, %323 : vector<2x128xf32>
    %325 = vector.extract_strided_slice %312 {offsets = [0, 256], sizes = [2, 128], strides = [1, 1]} : vector<2x512xf32> to vector<2x128xf32>
    %326 = math.tanh %325 : vector<2x128xf32>
    %327 = vector.extract_strided_slice %312 {offsets = [0, 384], sizes = [2, 128], strides = [1, 1]} : vector<2x512xf32> to vector<2x128xf32>
    %328 = arith.negf %327 : vector<2x128xf32>
    %329 = math.exp %328 : vector<2x128xf32>
    %cst_58 = arith.constant 1.000000e+00 : f32
    %330 = vector.broadcast %cst_58 : f32 to vector<2x128xf32>
    %331 = arith.addf %330, %329 : vector<2x128xf32>
    %332 = arith.divf %330, %331 : vector<2x128xf32>
    %333 = arith.mulf %324, %307 : vector<2x128xf32>
    %334 = arith.mulf %318, %326 : vector<2x128xf32>
    %335 = arith.addf %333, %334 : vector<2x128xf32>
    %336 = math.tanh %335 : vector<2x128xf32>
    %337 = arith.mulf %332, %336 : vector<2x128xf32>
    %338 = vector.extract_strided_slice %252 {offsets = [6, 0], sizes = [2, 512], strides = [1, 1]} : vector<16x512xf32> to vector<2x512xf32>
    %cst_59 = arith.constant dense<0.000000e+00> : vector<2x512xf32>
    %339 = tpu.matmul %337, %253, %cst_59 {dimension_numbers = #tpu.dot_dimension_numbers<[1], [0], [0], [1], [0, 0, 1, 1], [], []>} : vector<2x128xf32>, vector<128x512xf32>, vector<2x512xf32> -> vector<2x512xf32>
    %340 = arith.addf %338, %339 : vector<2x512xf32>
    %341 = vector.extract_strided_slice %340 {offsets = [0, 0], sizes = [2, 128], strides = [1, 1]} : vector<2x512xf32> to vector<2x128xf32>
    %342 = arith.negf %341 : vector<2x128xf32>
    %343 = math.exp %342 : vector<2x128xf32>
    %cst_60 = arith.constant 1.000000e+00 : f32
    %344 = vector.broadcast %cst_60 : f32 to vector<2x128xf32>
    %345 = arith.addf %344, %343 : vector<2x128xf32>
    %346 = arith.divf %344, %345 : vector<2x128xf32>
    %347 = vector.extract_strided_slice %340 {offsets = [0, 128], sizes = [2, 128], strides = [1, 1]} : vector<2x512xf32> to vector<2x128xf32>
    %348 = arith.negf %347 : vector<2x128xf32>
    %349 = math.exp %348 : vector<2x128xf32>
    %cst_61 = arith.constant 1.000000e+00 : f32
    %350 = vector.broadcast %cst_61 : f32 to vector<2x128xf32>
    %351 = arith.addf %350, %349 : vector<2x128xf32>
    %352 = arith.divf %350, %351 : vector<2x128xf32>
    %353 = vector.extract_strided_slice %340 {offsets = [0, 256], sizes = [2, 128], strides = [1, 1]} : vector<2x512xf32> to vector<2x128xf32>
    %354 = math.tanh %353 : vector<2x128xf32>
    %355 = vector.extract_strided_slice %340 {offsets = [0, 384], sizes = [2, 128], strides = [1, 1]} : vector<2x512xf32> to vector<2x128xf32>
    %356 = arith.negf %355 : vector<2x128xf32>
    %357 = math.exp %356 : vector<2x128xf32>
    %cst_62 = arith.constant 1.000000e+00 : f32
    %358 = vector.broadcast %cst_62 : f32 to vector<2x128xf32>
    %359 = arith.addf %358, %357 : vector<2x128xf32>
    %360 = arith.divf %358, %359 : vector<2x128xf32>
    %361 = arith.mulf %352, %335 : vector<2x128xf32>
    %362 = arith.mulf %346, %354 : vector<2x128xf32>
    %363 = arith.addf %361, %362 : vector<2x128xf32>
    %364 = math.tanh %363 : vector<2x128xf32>
    %365 = arith.mulf %360, %364 : vector<2x128xf32>
    %366 = vector.extract_strided_slice %252 {offsets = [8, 0], sizes = [2, 512], strides = [1, 1]} : vector<16x512xf32> to vector<2x512xf32>
    %cst_63 = arith.constant dense<0.000000e+00> : vector<2x512xf32>
    %367 = tpu.matmul %365, %253, %cst_63 {dimension_numbers = #tpu.dot_dimension_numbers<[1], [0], [0], [1], [0, 0, 1, 1], [], []>} : vector<2x128xf32>, vector<128x512xf32>, vector<2x512xf32> -> vector<2x512xf32>
    %368 = arith.addf %366, %367 : vector<2x512xf32>
    %369 = vector.extract_strided_slice %368 {offsets = [0, 0], sizes = [2, 128], strides = [1, 1]} : vector<2x512xf32> to vector<2x128xf32>
    %370 = arith.negf %369 : vector<2x128xf32>
    %371 = math.exp %370 : vector<2x128xf32>
    %cst_64 = arith.constant 1.000000e+00 : f32
    %372 = vector.broadcast %cst_64 : f32 to vector<2x128xf32>
    %373 = arith.addf %372, %371 : vector<2x128xf32>
    %374 = arith.divf %372, %373 : vector<2x128xf32>
    %375 = vector.extract_strided_slice %368 {offsets = [0, 128], sizes = [2, 128], strides = [1, 1]} : vector<2x512xf32> to vector<2x128xf32>
    %376 = arith.negf %375 : vector<2x128xf32>
    %377 = math.exp %376 : vector<2x128xf32>
    %cst_65 = arith.constant 1.000000e+00 : f32
    %378 = vector.broadcast %cst_65 : f32 to vector<2x128xf32>
    %379 = arith.addf %378, %377 : vector<2x128xf32>
    %380 = arith.divf %378, %379 : vector<2x128xf32>
    %381 = vector.extract_strided_slice %368 {offsets = [0, 256], sizes = [2, 128], strides = [1, 1]} : vector<2x512xf32> to vector<2x128xf32>
    %382 = math.tanh %381 : vector<2x128xf32>
    %383 = vector.extract_strided_slice %368 {offsets = [0, 384], sizes = [2, 128], strides = [1, 1]} : vector<2x512xf32> to vector<2x128xf32>
    %384 = arith.negf %383 : vector<2x128xf32>
    %385 = math.exp %384 : vector<2x128xf32>
    %cst_66 = arith.constant 1.000000e+00 : f32
    %386 = vector.broadcast %cst_66 : f32 to vector<2x128xf32>
    %387 = arith.addf %386, %385 : vector<2x128xf32>
    %388 = arith.divf %386, %387 : vector<2x128xf32>
    %389 = arith.mulf %380, %363 : vector<2x128xf32>
    %390 = arith.mulf %374, %382 : vector<2x128xf32>
    %391 = arith.addf %389, %390 : vector<2x128xf32>
    %392 = math.tanh %391 : vector<2x128xf32>
    %393 = arith.mulf %388, %392 : vector<2x128xf32>
    %394 = vector.extract_strided_slice %252 {offsets = [10, 0], sizes = [2, 512], strides = [1, 1]} : vector<16x512xf32> to vector<2x512xf32>
    %cst_67 = arith.constant dense<0.000000e+00> : vector<2x512xf32>
    %395 = tpu.matmul %393, %253, %cst_67 {dimension_numbers = #tpu.dot_dimension_numbers<[1], [0], [0], [1], [0, 0, 1, 1], [], []>} : vector<2x128xf32>, vector<128x512xf32>, vector<2x512xf32> -> vector<2x512xf32>
    %396 = arith.addf %394, %395 : vector<2x512xf32>
    %397 = vector.extract_strided_slice %396 {offsets = [0, 0], sizes = [2, 128], strides = [1, 1]} : vector<2x512xf32> to vector<2x128xf32>
    %398 = arith.negf %397 : vector<2x128xf32>
    %399 = math.exp %398 : vector<2x128xf32>
    %cst_68 = arith.constant 1.000000e+00 : f32
    %400 = vector.broadcast %cst_68 : f32 to vector<2x128xf32>
    %401 = arith.addf %400, %399 : vector<2x128xf32>
    %402 = arith.divf %400, %401 : vector<2x128xf32>
    %403 = vector.extract_strided_slice %396 {offsets = [0, 128], sizes = [2, 128], strides = [1, 1]} : vector<2x512xf32> to vector<2x128xf32>
    %404 = arith.negf %403 : vector<2x128xf32>
    %405 = math.exp %404 : vector<2x128xf32>
    %cst_69 = arith.constant 1.000000e+00 : f32
    %406 = vector.broadcast %cst_69 : f32 to vector<2x128xf32>
    %407 = arith.addf %406, %405 : vector<2x128xf32>
    %408 = arith.divf %406, %407 : vector<2x128xf32>
    %409 = vector.extract_strided_slice %396 {offsets = [0, 256], sizes = [2, 128], strides = [1, 1]} : vector<2x512xf32> to vector<2x128xf32>
    %410 = math.tanh %409 : vector<2x128xf32>
    %411 = vector.extract_strided_slice %396 {offsets = [0, 384], sizes = [2, 128], strides = [1, 1]} : vector<2x512xf32> to vector<2x128xf32>
    %412 = arith.negf %411 : vector<2x128xf32>
    %413 = math.exp %412 : vector<2x128xf32>
    %cst_70 = arith.constant 1.000000e+00 : f32
    %414 = vector.broadcast %cst_70 : f32 to vector<2x128xf32>
    %415 = arith.addf %414, %413 : vector<2x128xf32>
    %416 = arith.divf %414, %415 : vector<2x128xf32>
    %417 = arith.mulf %408, %391 : vector<2x128xf32>
    %418 = arith.mulf %402, %410 : vector<2x128xf32>
    %419 = arith.addf %417, %418 : vector<2x128xf32>
    %420 = math.tanh %419 : vector<2x128xf32>
    %421 = arith.mulf %416, %420 : vector<2x128xf32>
    %422 = vector.extract_strided_slice %252 {offsets = [12, 0], sizes = [2, 512], strides = [1, 1]} : vector<16x512xf32> to vector<2x512xf32>
    %cst_71 = arith.constant dense<0.000000e+00> : vector<2x512xf32>
    %423 = tpu.matmul %421, %253, %cst_71 {dimension_numbers = #tpu.dot_dimension_numbers<[1], [0], [0], [1], [0, 0, 1, 1], [], []>} : vector<2x128xf32>, vector<128x512xf32>, vector<2x512xf32> -> vector<2x512xf32>
    %424 = arith.addf %422, %423 : vector<2x512xf32>
    %425 = vector.extract_strided_slice %424 {offsets = [0, 0], sizes = [2, 128], strides = [1, 1]} : vector<2x512xf32> to vector<2x128xf32>
    %426 = arith.negf %425 : vector<2x128xf32>
    %427 = math.exp %426 : vector<2x128xf32>
    %cst_72 = arith.constant 1.000000e+00 : f32
    %428 = vector.broadcast %cst_72 : f32 to vector<2x128xf32>
    %429 = arith.addf %428, %427 : vector<2x128xf32>
    %430 = arith.divf %428, %429 : vector<2x128xf32>
    %431 = vector.extract_strided_slice %424 {offsets = [0, 128], sizes = [2, 128], strides = [1, 1]} : vector<2x512xf32> to vector<2x128xf32>
    %432 = arith.negf %431 : vector<2x128xf32>
    %433 = math.exp %432 : vector<2x128xf32>
    %cst_73 = arith.constant 1.000000e+00 : f32
    %434 = vector.broadcast %cst_73 : f32 to vector<2x128xf32>
    %435 = arith.addf %434, %433 : vector<2x128xf32>
    %436 = arith.divf %434, %435 : vector<2x128xf32>
    %437 = vector.extract_strided_slice %424 {offsets = [0, 256], sizes = [2, 128], strides = [1, 1]} : vector<2x512xf32> to vector<2x128xf32>
    %438 = math.tanh %437 : vector<2x128xf32>
    %439 = vector.extract_strided_slice %424 {offsets = [0, 384], sizes = [2, 128], strides = [1, 1]} : vector<2x512xf32> to vector<2x128xf32>
    %440 = arith.negf %439 : vector<2x128xf32>
    %441 = math.exp %440 : vector<2x128xf32>
    %cst_74 = arith.constant 1.000000e+00 : f32
    %442 = vector.broadcast %cst_74 : f32 to vector<2x128xf32>
    %443 = arith.addf %442, %441 : vector<2x128xf32>
    %444 = arith.divf %442, %443 : vector<2x128xf32>
    %445 = arith.mulf %436, %419 : vector<2x128xf32>
    %446 = arith.mulf %430, %438 : vector<2x128xf32>
    %447 = arith.addf %445, %446 : vector<2x128xf32>
    %448 = math.tanh %447 : vector<2x128xf32>
    %449 = arith.mulf %444, %448 : vector<2x128xf32>
    %450 = vector.extract_strided_slice %252 {offsets = [14, 0], sizes = [2, 512], strides = [1, 1]} : vector<16x512xf32> to vector<2x512xf32>
    %cst_75 = arith.constant dense<0.000000e+00> : vector<2x512xf32>
    %451 = tpu.matmul %449, %253, %cst_75 {dimension_numbers = #tpu.dot_dimension_numbers<[1], [0], [0], [1], [0, 0, 1, 1], [], []>} : vector<2x128xf32>, vector<128x512xf32>, vector<2x512xf32> -> vector<2x512xf32>
    %452 = arith.addf %450, %451 : vector<2x512xf32>
    %453 = vector.extract_strided_slice %452 {offsets = [0, 0], sizes = [2, 128], strides = [1, 1]} : vector<2x512xf32> to vector<2x128xf32>
    %454 = arith.negf %453 : vector<2x128xf32>
    %455 = math.exp %454 : vector<2x128xf32>
    %cst_76 = arith.constant 1.000000e+00 : f32
    %456 = vector.broadcast %cst_76 : f32 to vector<2x128xf32>
    %457 = arith.addf %456, %455 : vector<2x128xf32>
    %458 = arith.divf %456, %457 : vector<2x128xf32>
    %459 = vector.extract_strided_slice %452 {offsets = [0, 128], sizes = [2, 128], strides = [1, 1]} : vector<2x512xf32> to vector<2x128xf32>
    %460 = arith.negf %459 : vector<2x128xf32>
    %461 = math.exp %460 : vector<2x128xf32>
    %cst_77 = arith.constant 1.000000e+00 : f32
    %462 = vector.broadcast %cst_77 : f32 to vector<2x128xf32>
    %463 = arith.addf %462, %461 : vector<2x128xf32>
    %464 = arith.divf %462, %463 : vector<2x128xf32>
    %465 = vector.extract_strided_slice %452 {offsets = [0, 256], sizes = [2, 128], strides = [1, 1]} : vector<2x512xf32> to vector<2x128xf32>
    %466 = math.tanh %465 : vector<2x128xf32>
    %467 = vector.extract_strided_slice %452 {offsets = [0, 384], sizes = [2, 128], strides = [1, 1]} : vector<2x512xf32> to vector<2x128xf32>
    %468 = arith.negf %467 : vector<2x128xf32>
    %469 = math.exp %468 : vector<2x128xf32>
    %cst_78 = arith.constant 1.000000e+00 : f32
    %470 = vector.broadcast %cst_78 : f32 to vector<2x128xf32>
    %471 = arith.addf %470, %469 : vector<2x128xf32>
    %472 = arith.divf %470, %471 : vector<2x128xf32>
    %473 = arith.mulf %464, %447 : vector<2x128xf32>
    %474 = arith.mulf %458, %466 : vector<2x128xf32>
    %475 = arith.addf %473, %474 : vector<2x128xf32>
    %476 = math.tanh %475 : vector<2x128xf32>
    %477 = arith.mulf %472, %476 : vector<2x128xf32>
    %478 = tpu.concatenate %281, %309, %337, %365, %393, %421, %449, %477 in 0 : vector<2x128xf32>, vector<2x128xf32>, vector<2x128xf32>, vector<2x128xf32>, vector<2x128xf32>, vector<2x128xf32>, vector<2x128xf32>, vector<2x128xf32> -> vector<16x128xf32>
    %c472 = arith.constant 472 : index
    %c0_79 = arith.constant 0 : index
    %479 = vector.load %arg1[%c472, %c0_79] : memref<608x512xf32, #tpu.memory_space<vmem>>, vector<128x128xf32>
    %c600 = arith.constant 600 : index
    %c0_80 = arith.constant 0 : index
    %480 = vector.load %arg1[%c600, %c0_80] : memref<608x512xf32, #tpu.memory_space<vmem>>, vector<1x128xf32>
    %cst_81 = arith.constant dense<0.000000e+00> : vector<16x128xf32>
    %481 = tpu.matmul %478, %479, %cst_81 {dimension_numbers = #tpu.dot_dimension_numbers<[1], [0], [0], [1], [0, 0, 1, 1], [], []>} : vector<16x128xf32>, vector<128x128xf32>, vector<16x128xf32> -> vector<16x128xf32>
    %482 = vector.broadcast %480 : vector<1x128xf32> to vector<16x128xf32>
    %483 = arith.addf %481, %482 : vector<16x128xf32>
    %c0_82 = arith.constant 0 : index
    %c0_83 = arith.constant 0 : index
    %484 = vector.load %arg2[%c0_82, %c0_83] : memref<16x128xf32, #tpu.memory_space<vmem>>, vector<16x128xf32>
    tpu.vector_store %arg2[%c0_82, %c0_83], %483 {strides = array<i32>} : memref<16x128xf32, #tpu.memory_space<vmem>>, vector<16x128xf32>,
    return
  }
}

</mosaic_0001>

<llo_original>
// kernel: lstm_encoder_decoder_forward.1
$region0: #{lstm_encoder_decoder_forward.1}
  #allocation0 [shape = 'u32[]', space=smem, size = 0x4, offset = 0x4, fixed_abs, tag = 'smem constant byte address 0x4 - core index']
  #allocation1 [shape = 'u32[144,128]{1,0:T(1,128)}', space=vmem, size = 0x12000, scoped, tag = 'internal scratch']
  %s0 = inlined_call_operand.vmem [shape: f32[32,32], index: 0, kind: input, shape index: {}]
  %s1 = inlined_call_operand.hbm [shape: f32[608,512], index: 1, kind: input, shape index: {}]
  %s2 = inlined_call_operand.vmem [shape: f32[16,128], index: 2, kind: output, shape index: {}]
  %s3 = sld [smem:[#allocation0]]
  $region22: #{lstm_encoder_decoder_forward.1} parent=0
    _
  %s5 = ssub.s32 1, %s3
  %s6 = scalar_select 0, %s5, %s3
  $region1: #{lstm_encoder_decoder_forward.1} parent=0
    #allocation2 [shape = 'u8[1245184]{0}', space=vmem, size = 0x130000, scoped, tag = 'input window, operand 1, single buffered']
    #allocation3 [shape = 's32[1]{0}', space=sflag, size = 0x4, scoped, tag = 'scoped memory for lstm_encoder_decoder_forward.1']
    %7 = vsyncpa [#allocation3], 0
    // Predicated region
    $region2: #{lstm_encoder_decoder_forward.1} parent=1 // pred_check
      _
    $region3: #{lstm_encoder_decoder_forward.1} parent=1 // pred_check_branch
      %9 = sbr.rel (0) target = $region5
    $region4: #{lstm_encoder_decoder_forward.1} parent=1 // pred_region
      _
    $region5: #{lstm_encoder_decoder_forward.1} parent=1 // pred_fallthru
      _
    // Predicated region
    $region6: #{lstm_encoder_decoder_forward.1} parent=1 // pred_check
      _
    $region7: #{lstm_encoder_decoder_forward.1} parent=1 // pred_check_branch
      %11 = sbr.rel (0) target = $region9
    $region8: #{lstm_encoder_decoder_forward.1} parent=1 // pred_region
      %s13 = ssub.s32 38912, 38912
      %14 = vsyncadd [#allocation3], %s13
      %s15 = sshll.u32 [#allocation2], 4
      %s16 = int_to_ptr.vmem [resolvable:$true] %s15
      %21 = dma.hbm_to_vmem [thread:$0]  %s1, 38912, %s16, [#allocation3], 512, 512, 32
    $region9: #{lstm_encoder_decoder_forward.1} parent=1 // pred_fallthru
      _
    // Predicated region
    $region10: #{lstm_encoder_decoder_forward.1} parent=1 // pred_check
      _
    $region11: #{lstm_encoder_decoder_forward.1} parent=1 // pred_check_branch
      %23 = sbr.rel (0) target = $region13
    $region12: #{lstm_encoder_decoder_forward.1} parent=1 // pred_region
      %24 = dma.done [#allocation3], 38912
    $region13: #{lstm_encoder_decoder_forward.1} parent=1 // pred_fallthru
      _
    %v25 = vld [vmem:[#allocation2] sm:$0xff]
    %v26 = vld [vmem:[#allocation2 + $0x8] sm:$0xff]
    %v27 = vld [vmem:[#allocation2 + $0x10] sm:$0xff]
    %v28 = vld [vmem:[#allocation2 + $0x18] sm:$0xff]
    %v29 = vld [vmem:[#allocation2 + $0x20] sm:$0xff]
    %v30 = vld [vmem:[#allocation2 + $0x28] sm:$0xff]
    %v31 = vld [vmem:[#allocation2 + $0x30] sm:$0xff]
    %v32 = vld [vmem:[#allocation2 + $0x38] sm:$0xff]
    %v33 = vld [vmem:[#allocation2 + $0x40] sm:$0xff]
    %v34 = vld [vmem:[#allocation2 + $0x48] sm:$0xff]
    %v35 = vld [vmem:[#allocation2 + $0x50] sm:$0xff]
    %v36 = vld [vmem:[#allocation2 + $0x58] sm:$0xff]
    %v37 = vld [vmem:[#allocation2 + $0x60] sm:$0xff]
    %v38 = vld [vmem:[#allocation2 + $0x68] sm:$0xff]
    %v39 = vld [vmem:[#allocation2 + $0x70] sm:$0xff]
    %v40 = vld [vmem:[#allocation2 + $0x78] sm:$0xff]
    %s41 = scalar_lea.vmem [#allocation2], 128
    %v42 = vld [vmem:[%s41] ss:$8 sm:$0xf]
    %v43 = vld [vmem:[%s0] sm:$0xff]
    %v44 = vld [vmem:[%s0 + $0x8] sm:$0xff]
    %v46 = vlaneseq
    %v47 = vshrl.u32 %v46, 7
    %v48 = vsub.s32 0, %v47
    %v49 = vrot.slane %v42, %v48
    %v50 = vlaneseq
    %v51 = vshrl.u32 %v50, 7
    %v52 = vsub.s32 1, %v51
    %v53 = vrot.slane %v42, %v52
    %v54 = vlaneseq
    %v55 = vshrl.u32 %v54, 7
    %v56 = vsub.s32 2, %v55
    %v57 = vrot.slane %v42, %v56
    %v58 = vlaneseq
    %v59 = vshrl.u32 %v58, 7
    %v60 = vsub.s32 3, %v59
    %v61 = vrot.slane %v42, %v60
    %vm66 = vcmask 261120
    %v68 = vsel %vm66, %v43, 0
    %v71 = vsel %vm66, %v44, 0
    %73 = vmatprep.subr.mxu0 0.0
    %74 = vmatpush1.msra.mxu0 0.0
    %75 = vmatprep.subr.mxu0 0.0
    %76 = vmatpush1.msra.mxu0 0.0
    %77 = vmatprep.subr.mxu0 0.0
    %78 = vmatpush1.msra.mxu0 0.0
    %79 = vmatprep.subr.mxu0 0.0
    %80 = vmatpush1.msra.mxu0 0.0
    %81 = vmatprep.subr.mxu0 0.0
    %82 = vmatpush1.msra.mxu0 0.0
    %83 = vmatprep.subr.mxu0 0.0
    %84 = vmatpush1.msra.mxu0 0.0
    %85 = vmatprep.subr.mxu0 0.0
    %86 = vmatpush1.msra.mxu0 0.0
    %87 = vmatprep.subr.mxu0 0.0
    %88 = vmatpush1.msra.mxu0 0.0
    %89 = vmatprep.subr.mxu0 0.0
    %90 = vmatpush1.msra.mxu0 0.0
    %91 = vmatprep.subr.mxu0 0.0
    %92 = vmatpush1.msra.mxu0 0.0
    %93 = vmatprep.subr.mxu0 0.0
    %94 = vmatpush1.msra.mxu0 0.0
    %95 = vmatprep.subr.mxu0 0.0
    %96 = vmatpush1.msra.mxu0 0.0
    %97 = vmatprep.subr.mxu0 %v38
    %98 = vmatpush1.msra.mxu0 %v37
    %99 = vmatprep.subr.mxu0 %v34
    %100 = vmatpush1.msra.mxu0 %v33
    %101 = vmatprep.subr.mxu0 %v30
    %102 = vmatpush1.msra.mxu0 %v29
    %103 = vmatprep.subr.mxu0 %v26
    %104 = vmatpush1.msra.mxu0 %v25
    %105 = vmatprep.subr.mxu0 0.0
    %106 = vmatpush2.msra.mxu0 0.0
    %107 = vmatprep.subr.mxu0 0.0
    %108 = vmatpush2.msra.mxu0 0.0
    %109 = vmatprep.subr.mxu0 0.0
    %110 = vmatpush2.msra.mxu0 0.0
    %111 = vmatprep.subr.mxu0 0.0
    %112 = vmatpush2.msra.mxu0 0.0
    %113 = vmatprep.subr.mxu0 0.0
    %114 = vmatpush2.msra.mxu0 0.0
    %115 = vmatprep.subr.mxu0 0.0
    %116 = vmatpush2.msra.mxu0 0.0
    %117 = vmatprep.subr.mxu0 0.0
    %118 = vmatpush2.msra.mxu0 0.0
    %119 = vmatprep.subr.mxu0 0.0
    %120 = vmatpush2.msra.mxu0 0.0
    %121 = vmatprep.subr.mxu0 0.0
    %122 = vmatpush2.msra.mxu0 0.0
    %123 = vmatprep.subr.mxu0 0.0
    %124 = vmatpush2.msra.mxu0 0.0
    %125 = vmatprep.subr.mxu0 0.0
    %126 = vmatpush2.msra.mxu0 0.0
    %127 = vmatprep.subr.mxu0 0.0
    %128 = vmatpush2.msra.mxu0 0.0
    %129 = vmatprep.subr.mxu0 0.0
    %130 = vmatpush2.msra.mxu0 0.0
    %131 = vmatprep.subr.mxu0 0.0
    %132 = vmatpush2.msra.mxu0 0.0
    %133 = vmatprep.subr.mxu0 0.0
    %134 = vmatpush2.msra.mxu0 0.0
    %135 = vmatprep.subr.mxu0 0.0
    %136 = vmatpush2.msra.mxu0 0.0
    %137 = vmatprep.mubr.f32.mxu0 0.0
    %138 = vmatmul.mubr.f32.gmra.mxu0 %v68
    %v139 = vpop.f32.mrf.mxu0
    %v140 = vadd.f32 %v49, %v139
    %v141 = vpop.f32.mrf.mxu0
    %v142 = vadd.f32 %v53, %v141
    %143 = vmatprep.mubr.f32.mxu0 0.0
    %144 = vmatmul.mubr.f32.gmra.mxu0 %v71
    %v145 = vpop.f32.mrf.mxu0
    %v146 = vadd.f32 %v49, %v145
    %v147 = vpop.f32.mrf.mxu0
    %v148 = vadd.f32 %v53, %v147
    %149 = vdwg.mxu0
    %150 = vmatprep.subr.mxu0 0.0
    %151 = vmatpush1.msra.mxu0 0.0
    %152 = vmatprep.subr.mxu0 0.0
    %153 = vmatpush1.msra.mxu0 0.0
    %154 = vmatprep.subr.mxu0 0.0
    %155 = vmatpush1.msra.mxu0 0.0
    %156 = vmatprep.subr.mxu0 0.0
    %157 = vmatpush1.msra.mxu0 0.0
    %158 = vmatprep.subr.mxu0 0.0
    %159 = vmatpush1.msra.mxu0 0.0
    %160 = vmatprep.subr.mxu0 0.0
    %161 = vmatpush1.msra.mxu0 0.0
    %162 = vmatprep.subr.mxu0 0.0
    %163 = vmatpush1.msra.mxu0 0.0
    %164 = vmatprep.subr.mxu0 0.0
    %165 = vmatpush1.msra.mxu0 0.0
    %166 = vmatprep.subr.mxu0 0.0
    %167 = vmatpush1.msra.mxu0 0.0
    %168 = vmatprep.subr.mxu0 0.0
    %169 = vmatpush1.msra.mxu0 0.0
    %170 = vmatprep.subr.mxu0 0.0
    %171 = vmatpush1.msra.mxu0 0.0
    %172 = vmatprep.subr.mxu0 0.0
    %173 = vmatpush1.msra.mxu0 0.0
    %174 = vmatprep.subr.mxu0 %v40
    %175 = vmatpush1.msra.mxu0 %v39
    %176 = vmatprep.subr.mxu0 %v36
    %177 = vmatpush1.msra.mxu0 %v35
    %178 = vmatprep.subr.mxu0 %v32
    %179 = vmatpush1.msra.mxu0 %v31
    %180 = vmatprep.subr.mxu0 %v28
    %181 = vmatpush1.msra.mxu0 %v27
    %182 = vmatprep.subr.mxu0 0.0
    %183 = vmatpush2.msra.mxu0 0.0
    %184 = vmatprep.subr.mxu0 0.0
    %185 = vmatpush2.msra.mxu0 0.0
    %186 = vmatprep.subr.mxu0 0.0
    %187 = vmatpush2.msra.mxu0 0.0
    %188 = vmatprep.subr.mxu0 0.0
    %189 = vmatpush2.msra.mxu0 0.0
    %190 = vmatprep.subr.mxu0 0.0
    %191 = vmatpush2.msra.mxu0 0.0
    %192 = vmatprep.subr.mxu0 0.0
    %193 = vmatpush2.msra.mxu0 0.0
    %194 = vmatprep.subr.mxu0 0.0
    %195 = vmatpush2.msra.mxu0 0.0
    %196 = vmatprep.subr.mxu0 0.0
    %197 = vmatpush2.msra.mxu0 0.0
    %198 = vmatprep.subr.mxu0 0.0
    %199 = vmatpush2.msra.mxu0 0.0
    %200 = vmatprep.subr.mxu0 0.0
    %201 = vmatpush2.msra.mxu0 0.0
    %202 = vmatprep.subr.mxu0 0.0
    %203 = vmatpush2.msra.mxu0 0.0
    %204 = vmatprep.subr.mxu0 0.0
    %205 = vmatpush2.msra.mxu0 0.0
    %206 = vmatprep.subr.mxu0 0.0
    %207 = vmatpush2.msra.mxu0 0.0
    %208 = vmatprep.subr.mxu0 0.0
    %209 = vmatpush2.msra.mxu0 0.0
    %210 = vmatprep.subr.mxu0 0.0
    %211 = vmatpush2.msra.mxu0 0.0
    %212 = vmatprep.subr.mxu0 0.0
    %213 = vmatpush2.msra.mxu0 0.0
    %214 = vmatprep.mubr.f32.mxu0 0.0
    %215 = vmatmul.mubr.f32.gmra.mxu0 %v68
    %v216 = vpop.f32.mrf.mxu0
    %v217 = vadd.f32 %v57, %v216
    %v218 = vpop.f32.mrf.mxu0
    %v219 = vadd.f32 %v61, %v218
    %220 = vmatprep.mubr.f32.mxu0 0.0
    %221 = vmatmul.mubr.f32.gmra.mxu0 %v71
    %v222 = vpop.f32.mrf.mxu0
    %v223 = vadd.f32 %v57, %v222
    %v224 = vpop.f32.mrf.mxu0
    %v225 = vadd.f32 %v61, %v224
    %226 = vdwg.mxu0
    %v227 = vld [vmem:[#allocation2 + $0xa0] sm:$0xff]
    %v228 = vld [vmem:[#allocation2 + $0xa8] sm:$0xff]
    %v229 = vld [vmem:[#allocation2 + $0xb0] sm:$0xff]
    %v230 = vld [vmem:[#allocation2 + $0xb8] sm:$0xff]
    %v231 = vld [vmem:[#allocation2 + $0xc0] sm:$0xff]
    %v232 = vld [vmem:[#allocation2 + $0xc8] sm:$0xff]
    %v233 = vld [vmem:[#allocation2 + $0xd0] sm:$0xff]
    %v234 = vld [vmem:[#allocation2 + $0xd8] sm:$0xff]
    %v235 = vld [vmem:[#allocation2 + $0xe0] sm:$0xff]
    %v236 = vld [vmem:[#allocation2 + $0xe8] sm:$0xff]
    %v237 = vld [vmem:[#allocation2 + $0xf0] sm:$0xff]
    %v238 = vld [vmem:[#allocation2 + $0xf8] sm:$0xff]
    %v239 = vld [vmem:[#allocation2 + $0x100] sm:$0xff]
    %v240 = vld [vmem:[#allocation2 + $0x108] sm:$0xff]
    %v241 = vld [vmem:[#allocation2 + $0x110] sm:$0xff]
    %v242 = vld [vmem:[#allocation2 + $0x118] sm:$0xff]
    %v243 = vld [vmem:[#allocation2 + $0x120] sm:$0xff]
    %v244 = vld [vmem:[#allocation2 + $0x128] sm:$0xff]
    %v245 = vld [vmem:[#allocation2 + $0x130] sm:$0xff]
    %v246 = vld [vmem:[#allocation2 + $0x138] sm:$0xff]
    %v247 = vld [vmem:[#allocation2 + $0x140] sm:$0xff]
    %v248 = vld [vmem:[#allocation2 + $0x148] sm:$0xff]
    %v249 = vld [vmem:[#allocation2 + $0x150] sm:$0xff]
    %v250 = vld [vmem:[#allocation2 + $0x158] sm:$0xff]
    %v251 = vld [vmem:[#allocation2 + $0x160] sm:$0xff]
    %v252 = vld [vmem:[#allocation2 + $0x168] sm:$0xff]
    %v253 = vld [vmem:[#allocation2 + $0x170] sm:$0xff]
    %v254 = vld [vmem:[#allocation2 + $0x178] sm:$0xff]
    %v255 = vld [vmem:[#allocation2 + $0x180] sm:$0xff]
    %v256 = vld [vmem:[#allocation2 + $0x188] sm:$0xff]
    %v257 = vld [vmem:[#allocation2 + $0x190] sm:$0xff]
    %v258 = vld [vmem:[#allocation2 + $0x198] sm:$0xff]
    %v259 = vld [vmem:[#allocation2 + $0x1a0] sm:$0xff]
    %v260 = vld [vmem:[#allocation2 + $0x1a8] sm:$0xff]
    %v261 = vld [vmem:[#allocation2 + $0x1b0] sm:$0xff]
    %v262 = vld [vmem:[#allocation2 + $0x1b8] sm:$0xff]
    %v263 = vld [vmem:[#allocation2 + $0x1c0] sm:$0xff]
    %v264 = vld [vmem:[#allocation2 + $0x1c8] sm:$0xff]
    %v265 = vld [vmem:[#allocation2 + $0x1d0] sm:$0xff]
    %v266 = vld [vmem:[#allocation2 + $0x1d8] sm:$0xff]
    %v267 = vld [vmem:[#allocation2 + $0x1e0] sm:$0xff]
    %v268 = vld [vmem:[#allocation2 + $0x1e8] sm:$0xff]
    %v269 = vld [vmem:[#allocation2 + $0x1f0] sm:$0xff]
    %v270 = vld [vmem:[#allocation2 + $0x1f8] sm:$0xff]
    %v271 = vld [vmem:[#allocation2 + $0x200] sm:$0xff]
    %v272 = vld [vmem:[#allocation2 + $0x208] sm:$0xff]
    %v273 = vld [vmem:[#allocation2 + $0x210] sm:$0xff]
    %v274 = vld [vmem:[#allocation2 + $0x218] sm:$0xff]
    %v275 = vld [vmem:[#allocation2 + $0x220] sm:$0xff]
    %v276 = vld [vmem:[#allocation2 + $0x228] sm:$0xff]
    %v277 = vld [vmem:[#allocation2 + $0x230] sm:$0xff]
    %v278 = vld [vmem:[#allocation2 + $0x238] sm:$0xff]
    %v279 = vld [vmem:[#allocation2 + $0x240] sm:$0xff]
    %v280 = vld [vmem:[#allocation2 + $0x248] sm:$0xff]
    %v281 = vld [vmem:[#allocation2 + $0x250] sm:$0xff]
    %v282 = vld [vmem:[#allocation2 + $0x258] sm:$0xff]
    %v283 = vld [vmem:[#allocation2 + $0x260] sm:$0xff]
    %v284 = vld [vmem:[#allocation2 + $0x268] sm:$0xff]
    %v285 = vld [vmem:[#allocation2 + $0x270] sm:$0xff]
    %v286 = vld [vmem:[#allocation2 + $0x278] sm:$0xff]
    %v287 = vld [vmem:[#allocation2 + $0x280] sm:$0xff]
    %v288 = vld [vmem:[#allocation2 + $0x288] sm:$0xff]
    %v289 = vld [vmem:[#allocation2 + $0x290] sm:$0xff]
    %v290 = vld [vmem:[#allocation2 + $0x298] sm:$0xff]
    %291 = vmatprep.subr.mxu0 %v288
    %292 = vmatpush1.msra.mxu0 %v287
    %293 = vmatprep.subr.mxu0 %v284
    %294 = vmatpush1.msra.mxu0 %v283
    %295 = vmatprep.subr.mxu0 %v280
    %296 = vmatpush1.msra.mxu0 %v279
    %297 = vmatprep.subr.mxu0 %v276
    %298 = vmatpush1.msra.mxu0 %v275
    %299 = vmatprep.subr.mxu0 %v272
    %300 = vmatpush1.msra.mxu0 %v271
    %301 = vmatprep.subr.mxu0 %v268
    %302 = vmatpush1.msra.mxu0 %v267
    %303 = vmatprep.subr.mxu0 %v264
    %304 = vmatpush1.msra.mxu0 %v263
    %305 = vmatprep.subr.mxu0 %v260
    %306 = vmatpush1.msra.mxu0 %v259
    %307 = vmatprep.subr.mxu0 %v256
    %308 = vmatpush1.msra.mxu0 %v255
    %309 = vmatprep.subr.mxu0 %v252
    %310 = vmatpush1.msra.mxu0 %v251
    %311 = vmatprep.subr.mxu0 %v248
    %312 = vmatpush1.msra.mxu0 %v247
    %313 = vmatprep.subr.mxu0 %v244
    %314 = vmatpush1.msra.mxu0 %v243
    %315 = vmatprep.subr.mxu0 %v240
    %316 = vmatpush1.msra.mxu0 %v239
    %317 = vmatprep.subr.mxu0 %v236
    %318 = vmatpush1.msra.mxu0 %v235
    %319 = vmatprep.subr.mxu0 %v232
    %320 = vmatpush1.msra.mxu0 %v231
    %321 = vmatprep.subr.mxu0 %v228
    %322 = vmatpush1.msra.mxu0 %v227
    %323 = vmatprep.subr.mxu0 0.0
    %324 = vmatpush2.msra.mxu0 0.0
    %325 = vmatprep.subr.mxu0 0.0
    %326 = vmatpush2.msra.mxu0 0.0
    %327 = vmatprep.subr.mxu0 0.0
    %328 = vmatpush2.msra.mxu0 0.0
    %329 = vmatprep.subr.mxu0 0.0
    %330 = vmatpush2.msra.mxu0 0.0
    %331 = vmatprep.subr.mxu0 0.0
    %332 = vmatpush2.msra.mxu0 0.0
    %333 = vmatprep.subr.mxu0 0.0
    %334 = vmatpush2.msra.mxu0 0.0
    %335 = vmatprep.subr.mxu0 0.0
    %336 = vmatpush2.msra.mxu0 0.0
    %337 = vmatprep.subr.mxu0 0.0
    %338 = vmatpush2.msra.mxu0 0.0
    %339 = vmatprep.subr.mxu0 0.0
    %340 = vmatpush2.msra.mxu0 0.0
    %341 = vmatprep.subr.mxu0 0.0
    %342 = vmatpush2.msra.mxu0 0.0
    %343 = vmatprep.subr.mxu0 0.0
    %344 = vmatpush2.msra.mxu0 0.0
    %345 = vmatprep.subr.mxu0 0.0
    %346 = vmatpush2.msra.mxu0 0.0
    %347 = vmatprep.subr.mxu0 0.0
    %348 = vmatpush2.msra.mxu0 0.0
    %349 = vmatprep.subr.mxu0 0.0
    %350 = vmatpush2.msra.mxu0 0.0
    %351 = vmatprep.subr.mxu0 0.0
    %352 = vmatpush2.msra.mxu0 0.0
    %353 = vmatprep.subr.mxu0 0.0
    %354 = vmatpush2.msra.mxu0 0.0
    %355 = vmatprep.mubr.f32.mxu0 0.0
    %356 = vmatmul.mubr.f32.gmra.mxu0 0.0
    %v357 = vpop.f32.mrf.mxu0
    %v358 = vadd.f32 0.0, %v357
    %v359 = vpop.f32.mrf.mxu0
    %v360 = vadd.f32 0.0, %v359
    %361 = vdwg.mxu0
    %362 = vmatprep.subr.mxu0 %v290
    %363 = vmatpush1.msra.mxu0 %v289
    %364 = vmatprep.subr.mxu0 %v286
    %365 = vmatpush1.msra.mxu0 %v285
    %366 = vmatprep.subr.mxu0 %v282
    %367 = vmatpush1.msra.mxu0 %v281
    %368 = vmatprep.subr.mxu0 %v278
    %369 = vmatpush1.msra.mxu0 %v277
    %370 = vmatprep.subr.mxu0 %v274
    %371 = vmatpush1.msra.mxu0 %v273
    %372 = vmatprep.subr.mxu0 %v270
    %373 = vmatpush1.msra.mxu0 %v269
    %374 = vmatprep.subr.mxu0 %v266
    %375 = vmatpush1.msra.mxu0 %v265
    %376 = vmatprep.subr.mxu0 %v262
    %377 = vmatpush1.msra.mxu0 %v261
    %378 = vmatprep.subr.mxu0 %v258
    %379 = vmatpush1.msra.mxu0 %v257
    %380 = vmatprep.subr.mxu0 %v254
    %381 = vmatpush1.msra.mxu0 %v253
    %382 = vmatprep.subr.mxu0 %v250
    %383 = vmatpush1.msra.mxu0 %v249
    %384 = vmatprep.subr.mxu0 %v246
    %385 = vmatpush1.msra.mxu0 %v245
    %386 = vmatprep.subr.mxu0 %v242
    %387 = vmatpush1.msra.mxu0 %v241
    %388 = vmatprep.subr.mxu0 %v238
    %389 = vmatpush1.msra.mxu0 %v237
    %390 = vmatprep.subr.mxu0 %v234
    %391 = vmatpush1.msra.mxu0 %v233
    %392 = vmatprep.subr.mxu0 %v230
    %393 = vmatpush1.msra.mxu0 %v229
    %394 = vmatprep.subr.mxu0 0.0
    %395 = vmatpush2.msra.mxu0 0.0
    %396 = vmatprep.subr.mxu0 0.0
    %397 = vmatpush2.msra.mxu0 0.0
    %398 = vmatprep.subr.mxu0 0.0
    %399 = vmatpush2.msra.mxu0 0.0
    %400 = vmatprep.subr.mxu0 0.0
    %401 = vmatpush2.msra.mxu0 0.0
    %402 = vmatprep.subr.mxu0 0.0
    %403 = vmatpush2.msra.mxu0 0.0
    %404 = vmatprep.subr.mxu0 0.0
    %405 = vmatpush2.msra.mxu0 0.0
    %406 = vmatprep.subr.mxu0 0.0
    %407 = vmatpush2.msra.mxu0 0.0
    %408 = vmatprep.subr.mxu0 0.0
    %409 = vmatpush2.msra.mxu0 0.0
    %410 = vmatprep.subr.mxu0 0.0
    %411 = vmatpush2.msra.mxu0 0.0
    %412 = vmatprep.subr.mxu0 0.0
    %413 = vmatpush2.msra.mxu0 0.0
    %414 = vmatprep.subr.mxu0 0.0
    %415 = vmatpush2.msra.mxu0 0.0
    %416 = vmatprep.subr.mxu0 0.0
    %417 = vmatpush2.msra.mxu0 0.0
    %418 = vmatprep.subr.mxu0 0.0
    %419 = vmatpush2.msra.mxu0 0.0
    %420 = vmatprep.subr.mxu0 0.0
    %421 = vmatpush2.msra.mxu0 0.0
    %422 = vmatprep.subr.mxu0 0.0
    %423 = vmatpush2.msra.mxu0 0.0
    %424 = vmatprep.subr.mxu0 0.0
    %425 = vmatpush2.msra.mxu0 0.0
    %426 = vmatprep.mubr.f32.mxu0 0.0
    %427 = vmatmul.mubr.f32.gmra.mxu0 0.0
    %v428 = vpop.f32.mrf.mxu0
    %v429 = vadd.f32 0.0, %v428
    %v430 = vpop.f32.mrf.mxu0
    %v431 = vadd.f32 0.0, %v430
    %432 = vdwg.mxu0
    %v433 = vadd.f32 %v140, %v358
    %v434 = vadd.f32 %v142, %v360
    %v435 = vadd.f32 %v217, %v429
    %v436 = vadd.f32 %v219, %v431
    %v437 = vxor.u32 %v433, 2147483648
    %v438 = vmul.f32 %v437, 1.442695
    %v439 = vpow.pop %v438
    %v440 = vadd.f32 %v439, 1.0
    %v441 = vrcp.pop %v440
    %v442 = vmul.f32 1.0, %v441
    %v443 = vxor.u32 %v434, 2147483648
    %v444 = vmul.f32 %v443, 1.442695
    %v445 = vpow.pop %v444
    %v446 = vadd.f32 %v445, 1.0
    %v447 = vrcp.pop %v446
    %v448 = vmul.f32 1.0, %v447
    %v449 = vtanh.pop %v435
    %v450 = vxor.u32 %v436, 2147483648
    %v451 = vmul.f32 %v450, 1.442695
    %v452 = vpow.pop %v451
    %v453 = vadd.f32 %v452, 1.0
    %v454 = vrcp.pop %v453
    %v455 = vmul.f32 1.0, %v454
    %v456 = vmul.f32 %v448, 0.0
    %v457 = vmul.f32 %v442, %v449
    %v458 = vadd.f32 %v456, %v457
    %v459 = vtanh.pop %v458
    %v460 = vmul.f32 %v455, %v459
    %461 = vmatprep.subr.mxu0 %v288
    %462 = vmatpush1.msra.mxu0 %v287
    %463 = vmatprep.subr.mxu0 %v284
    %464 = vmatpush1.msra.mxu0 %v283
    %465 = vmatprep.subr.mxu0 %v280
    %466 = vmatpush1.msra.mxu0 %v279
    %467 = vmatprep.subr.mxu0 %v276
    %468 = vmatpush1.msra.mxu0 %v275
    %469 = vmatprep.subr.mxu0 %v272
    %470 = vmatpush1.msra.mxu0 %v271
    %471 = vmatprep.subr.mxu0 %v268
    %472 = vmatpush1.msra.mxu0 %v267
    %473 = vmatprep.subr.mxu0 %v264
    %474 = vmatpush1.msra.mxu0 %v263
    %475 = vmatprep.subr.mxu0 %v260
    %476 = vmatpush1.msra.mxu0 %v259
    %477 = vmatprep.subr.mxu0 %v256
    %478 = vmatpush1.msra.mxu0 %v255
    %479 = vmatprep.subr.mxu0 %v252
    %480 = vmatpush1.msra.mxu0 %v251
    %481 = vmatprep.subr.mxu0 %v248
    %482 = vmatpush1.msra.mxu0 %v247
    %483 = vmatprep.subr.mxu0 %v244
    %484 = vmatpush1.msra.mxu0 %v243
    %485 = vmatprep.subr.mxu0 %v240
    %486 = vmatpush1.msra.mxu0 %v239
    %487 = vmatprep.subr.mxu0 %v236
    %488 = vmatpush1.msra.mxu0 %v235
    %489 = vmatprep.subr.mxu0 %v232
    %490 = vmatpush1.msra.mxu0 %v231
    %491 = vmatprep.subr.mxu0 %v228
    %492 = vmatpush1.msra.mxu0 %v227
    %493 = vmatprep.subr.mxu0 0.0
    %494 = vmatpush2.msra.mxu0 0.0
    %495 = vmatprep.subr.mxu0 0.0
    %496 = vmatpush2.msra.mxu0 0.0
    %497 = vmatprep.subr.mxu0 0.0
    %498 = vmatpush2.msra.mxu0 0.0
    %499 = vmatprep.subr.mxu0 0.0
    %500 = vmatpush2.msra.mxu0 0.0
    %501 = vmatprep.subr.mxu0 0.0
    %502 = vmatpush2.msra.mxu0 0.0
    %503 = vmatprep.subr.mxu0 0.0
    %504 = vmatpush2.msra.mxu0 0.0
    %505 = vmatprep.subr.mxu0 0.0
    %506 = vmatpush2.msra.mxu0 0.0
    %507 = vmatprep.subr.mxu0 0.0
    %508 = vmatpush2.msra.mxu0 0.0
    %509 = vmatprep.subr.mxu0 0.0
    %510 = vmatpush2.msra.mxu0 0.0
    %511 = vmatprep.subr.mxu0 0.0
    %512 = vmatpush2.msra.mxu0 0.0
    %513 = vmatprep.subr.mxu0 0.0
    %514 = vmatpush2.msra.mxu0 0.0
    %515 = vmatprep.subr.mxu0 0.0
    %516 = vmatpush2.msra.mxu0 0.0
    %517 = vmatprep.subr.mxu0 0.0
    %518 = vmatpush2.msra.mxu0 0.0
    %519 = vmatprep.subr.mxu0 0.0
    %520 = vmatpush2.msra.mxu0 0.0
    %521 = vmatprep.subr.mxu0 0.0
    %522 = vmatpush2.msra.mxu0 0.0
    %523 = vmatprep.subr.mxu0 0.0
    %524 = vmatpush2.msra.mxu0 0.0
    %525 = vmatprep.mubr.f32.mxu0 0.0
    %526 = vmatmul.mubr.f32.gmra.mxu0 %v460
    %v527 = vpop.f32.mrf.mxu0
    %v528 = vadd.f32 0.0, %v527
    %v529 = vpop.f32.mrf.mxu0
    %v530 = vadd.f32 0.0, %v529
    %531 = vdwg.mxu0
    %532 = vmatprep.subr.mxu0 %v290
    %533 = vmatpush1.msra.mxu0 %v289
    %534 = vmatprep.subr.mxu0 %v286
    %535 = vmatpush1.msra.mxu0 %v285
    %536 = vmatprep.subr.mxu0 %v282
    %537 = vmatpush1.msra.mxu0 %v281
    %538 = vmatprep.subr.mxu0 %v278
    %539 = vmatpush1.msra.mxu0 %v277
    %540 = vmatprep.subr.mxu0 %v274
    %541 = vmatpush1.msra.mxu0 %v273
    %542 = vmatprep.subr.mxu0 %v270
    %543 = vmatpush1.msra.mxu0 %v269
    %544 = vmatprep.subr.mxu0 %v266
    %545 = vmatpush1.msra.mxu0 %v265
    %546 = vmatprep.subr.mxu0 %v262
    %547 = vmatpush1.msra.mxu0 %v261
    %548 = vmatprep.subr.mxu0 %v258
    %549 = vmatpush1.msra.mxu0 %v257
    %550 = vmatprep.subr.mxu0 %v254
    %551 = vmatpush1.msra.mxu0 %v253
    %552 = vmatprep.subr.mxu0 %v250
    %553 = vmatpush1.msra.mxu0 %v249
    %554 = vmatprep.subr.mxu0 %v246
    %555 = vmatpush1.msra.mxu0 %v245
    %556 = vmatprep.subr.mxu0 %v242
    %557 = vmatpush1.msra.mxu0 %v241
    %558 = vmatprep.subr.mxu0 %v238
    %559 = vmatpush1.msra.mxu0 %v237
    %560 = vmatprep.subr.mxu0 %v234
    %561 = vmatpush1.msra.mxu0 %v233
    %562 = vmatprep.subr.mxu0 %v230
    %563 = vmatpush1.msra.mxu0 %v229
    %564 = vmatprep.subr.mxu0 0.0
    %565 = vmatpush2.msra.mxu0 0.0
    %566 = vmatprep.subr.mxu0 0.0
    %567 = vmatpush2.msra.mxu0 0.0
    %568 = vmatprep.subr.mxu0 0.0
    %569 = vmatpush2.msra.mxu0 0.0
    %570 = vmatprep.subr.mxu0 0.0
    %571 = vmatpush2.msra.mxu0 0.0
    %572 = vmatprep.subr.mxu0 0.0
    %573 = vmatpush2.msra.mxu0 0.0
    %574 = vmatprep.subr.mxu0 0.0
    %575 = vmatpush2.msra.mxu0 0.0
    %576 = vmatprep.subr.mxu0 0.0
    %577 = vmatpush2.msra.mxu0 0.0
    %578 = vmatprep.subr.mxu0 0.0
    %579 = vmatpush2.msra.mxu0 0.0
    %580 = vmatprep.subr.mxu0 0.0
    %581 = vmatpush2.msra.mxu0 0.0
    %582 = vmatprep.subr.mxu0 0.0
    %583 = vmatpush2.msra.mxu0 0.0
    %584 = vmatprep.subr.mxu0 0.0
    %585 = vmatpush2.msra.mxu0 0.0
    %586 = vmatprep.subr.mxu0 0.0
    %587 = vmatpush2.msra.mxu0 0.0
    %588 = vmatprep.subr.mxu0 0.0
    %589 = vmatpush2.msra.mxu0 0.0
    %590 = vmatprep.subr.mxu0 0.0
    %591 = vmatpush2.msra.mxu0 0.0
    %592 = vmatprep.subr.mxu0 0.0
    %593 = vmatpush2.msra.mxu0 0.0
    %594 = vmatprep.subr.mxu0 0.0
    %595 = vmatpush2.msra.mxu0 0.0
    %596 = vmatprep.mubr.f32.mxu0 0.0
    %597 = vmatmul.mubr.f32.gmra.mxu0 %v460
    %v598 = vpop.f32.mrf.mxu0
    %v599 = vadd.f32 0.0, %v598
    %v600 = vpop.f32.mrf.mxu0
    %v601 = vadd.f32 0.0, %v600
    %602 = vdwg.mxu0
    %v607 = vrot.slane %v528, 6
    %v608 = vrot.slane %v530, 6
    %v609 = vrot.slane %v599, 6
    %v610 = vrot.slane %v601, 6
    %v615 = vadd.f32 %v140, %v607
    %v616 = vadd.f32 %v142, %v608
    %v617 = vadd.f32 %v217, %v609
    %v618 = vadd.f32 %v219, %v610
    %v619 = vxor.u32 %v615, 2147483648
    %v620 = vmul.f32 %v619, 1.442695
    %v621 = vpow.pop %v620
    %v622 = vadd.f32 %v621, 1.0
    %v623 = vrcp.pop %v622
    %v624 = vmul.f32 1.0, %v623
    %v625 = vxor.u32 %v616, 2147483648
    %v626 = vmul.f32 %v625, 1.442695
    %v627 = vpow.pop %v626
    %v628 = vadd.f32 %v627, 1.0
    %v629 = vrcp.pop %v628
    %v630 = vmul.f32 1.0, %v629
    %v631 = vtanh.pop %v617
    %v632 = vxor.u32 %v618, 2147483648
    %v633 = vmul.f32 %v632, 1.442695
    %v634 = vpow.pop %v633
    %v635 = vadd.f32 %v634, 1.0
    %v636 = vrcp.pop %v635
    %v637 = vmul.f32 1.0, %v636
    %v639 = vrot.slane %v458, 6
    %v641 = vmul.f32 %v630, %v639
    %v642 = vmul.f32 %v624, %v631
    %v643 = vadd.f32 %v641, %v642
    %v644 = vtanh.pop %v643
    %v645 = vmul.f32 %v637, %v644
    %v647 = vrot.slane %v645, 2
    %v649 = vmax.f32 %v460, %v647
    %650 = vmatprep.subr.mxu0 %v288
    %651 = vmatpush1.msra.mxu0 %v287
    %652 = vmatprep.subr.mxu0 %v284
    %653 = vmatpush1.msra.mxu0 %v283
    %654 = vmatprep.subr.mxu0 %v280
    %655 = vmatpush1.msra.mxu0 %v279
    %656 = vmatprep.subr.mxu0 %v276
    %657 = vmatpush1.msra.mxu0 %v275
    %658 = vmatprep.subr.mxu0 %v272
    %659 = vmatpush1.msra.mxu0 %v271
    %660 = vmatprep.subr.mxu0 %v268
    %661 = vmatpush1.msra.mxu0 %v267
    %662 = vmatprep.subr.mxu0 %v264
    %663 = vmatpush1.msra.mxu0 %v263
    %664 = vmatprep.subr.mxu0 %v260
    %665 = vmatpush1.msra.mxu0 %v259
    %666 = vmatprep.subr.mxu0 %v256
    %667 = vmatpush1.msra.mxu0 %v255
    %668 = vmatprep.subr.mxu0 %v252
    %669 = vmatpush1.msra.mxu0 %v251
    %670 = vmatprep.subr.mxu0 %v248
    %671 = vmatpush1.msra.mxu0 %v247
    %672 = vmatprep.subr.mxu0 %v244
    %673 = vmatpush1.msra.mxu0 %v243
    %674 = vmatprep.subr.mxu0 %v240
    %675 = vmatpush1.msra.mxu0 %v239
    %676 = vmatprep.subr.mxu0 %v236
    %677 = vmatpush1.msra.mxu0 %v235
    %678 = vmatprep.subr.mxu0 %v232
    %679 = vmatpush1.msra.mxu0 %v231
    %680 = vmatprep.subr.mxu0 %v228
    %681 = vmatpush1.msra.mxu0 %v227
    %682 = vmatprep.subr.mxu0 0.0
    %683 = vmatpush2.msra.mxu0 0.0
    %684 = vmatprep.subr.mxu0 0.0
    %685 = vmatpush2.msra.mxu0 0.0
    %686 = vmatprep.subr.mxu0 0.0
    %687 = vmatpush2.msra.mxu0 0.0
    %688 = vmatprep.subr.mxu0 0.0
    %689 = vmatpush2.msra.mxu0 0.0
    %690 = vmatprep.subr.mxu0 0.0
    %691 = vmatpush2.msra.mxu0 0.0
    %692 = vmatprep.subr.mxu0 0.0
    %693 = vmatpush2.msra.mxu0 0.0
    %694 = vmatprep.subr.mxu0 0.0
    %695 = vmatpush2.msra.mxu0 0.0
    %696 = vmatprep.subr.mxu0 0.0
    %697 = vmatpush2.msra.mxu0 0.0
    %698 = vmatprep.subr.mxu0 0.0
    %699 = vmatpush2.msra.mxu0 0.0
    %700 = vmatprep.subr.mxu0 0.0
    %701 = vmatpush2.msra.mxu0 0.0
    %702 = vmatprep.subr.mxu0 0.0
    %703 = vmatpush2.msra.mxu0 0.0
    %704 = vmatprep.subr.mxu0 0.0
    %705 = vmatpush2.msra.mxu0 0.0
    %706 = vmatprep.subr.mxu0 0.0
    %707 = vmatpush2.msra.mxu0 0.0
    %708 = vmatprep.subr.mxu0 0.0
    %709 = vmatpush2.msra.mxu0 0.0
    %710 = vmatprep.subr.mxu0 0.0
    %711 = vmatpush2.msra.mxu0 0.0
    %712 = vmatprep.subr.mxu0 0.0
    %713 = vmatpush2.msra.mxu0 0.0
    %714 = vmatprep.mubr.f32.mxu0 0.0
    %715 = vmatmul.mubr.f32.gmra.mxu0 %v647
    %v716 = vpop.f32.mrf.mxu0
    %v717 = vadd.f32 0.0, %v716
    %v718 = vpop.f32.mrf.mxu0
    %v719 = vadd.f32 0.0, %v718
    %720 = vdwg.mxu0
    %721 = vmatprep.subr.mxu0 %v290
    %722 = vmatpush1.msra.mxu0 %v289
    %723 = vmatprep.subr.mxu0 %v286
    %724 = vmatpush1.msra.mxu0 %v285
    %725 = vmatprep.subr.mxu0 %v282
    %726 = vmatpush1.msra.mxu0 %v281
    %727 = vmatprep.subr.mxu0 %v278
    %728 = vmatpush1.msra.mxu0 %v277
    %729 = vmatprep.subr.mxu0 %v274
    %730 = vmatpush1.msra.mxu0 %v273
    %731 = vmatprep.subr.mxu0 %v270
    %732 = vmatpush1.msra.mxu0 %v269
    %733 = vmatprep.subr.mxu0 %v266
    %734 = vmatpush1.msra.mxu0 %v265
    %735 = vmatprep.subr.mxu0 %v262
    %736 = vmatpush1.msra.mxu0 %v261
    %737 = vmatprep.subr.mxu0 %v258
    %738 = vmatpush1.msra.mxu0 %v257
    %739 = vmatprep.subr.mxu0 %v254
    %740 = vmatpush1.msra.mxu0 %v253
    %741 = vmatprep.subr.mxu0 %v250
    %742 = vmatpush1.msra.mxu0 %v249
    %743 = vmatprep.subr.mxu0 %v246
    %744 = vmatpush1.msra.mxu0 %v245
    %745 = vmatprep.subr.mxu0 %v242
    %746 = vmatpush1.msra.mxu0 %v241
    %747 = vmatprep.subr.mxu0 %v238
    %748 = vmatpush1.msra.mxu0 %v237
    %749 = vmatprep.subr.mxu0 %v234
    %750 = vmatpush1.msra.mxu0 %v233
    %751 = vmatprep.subr.mxu0 %v230
    %752 = vmatpush1.msra.mxu0 %v229
    %753 = vmatprep.subr.mxu0 0.0
    %754 = vmatpush2.msra.mxu0 0.0
    %755 = vmatprep.subr.mxu0 0.0
    %756 = vmatpush2.msra.mxu0 0.0
    %757 = vmatprep.subr.mxu0 0.0
    %758 = vmatpush2.msra.mxu0 0.0
    %759 = vmatprep.subr.mxu0 0.0
    %760 = vmatpush2.msra.mxu0 0.0
    %761 = vmatprep.subr.mxu0 0.0
    %762 = vmatpush2.msra.mxu0 0.0
    %763 = vmatprep.subr.mxu0 0.0
    %764 = vmatpush2.msra.mxu0 0.0
    %765 = vmatprep.subr.mxu0 0.0
    %766 = vmatpush2.msra.mxu0 0.0
    %767 = vmatprep.subr.mxu0 0.0
    %768 = vmatpush2.msra.mxu0 0.0
    %769 = vmatprep.subr.mxu0 0.0
    %770 = vmatpush2.msra.mxu0 0.0
    %771 = vmatprep.subr.mxu0 0.0
    %772 = vmatpush2.msra.mxu0 0.0
    %773 = vmatprep.subr.mxu0 0.0
    %774 = vmatpush2.msra.mxu0 0.0
    %775 = vmatprep.subr.mxu0 0.0
    %776 = vmatpush2.msra.mxu0 0.0
    %777 = vmatprep.subr.mxu0 0.0
    %778 = vmatpush2.msra.mxu0 0.0
    %779 = vmatprep.subr.mxu0 0.0
    %780 = vmatpush2.msra.mxu0 0.0
    %781 = vmatprep.subr.mxu0 0.0
    %782 = vmatpush2.msra.mxu0 0.0
    %783 = vmatprep.subr.mxu0 0.0
    %784 = vmatpush2.msra.mxu0 0.0
    %785 = vmatprep.mubr.f32.mxu0 0.0
    %786 = vmatmul.mubr.f32.gmra.mxu0 %v647
    %v787 = vpop.f32.mrf.mxu0
    %v788 = vadd.f32 0.0, %v787
    %v789 = vpop.f32.mrf.mxu0
    %v790 = vadd.f32 0.0, %v789
    %791 = vdwg.mxu0
    %v796 = vrot.slane %v717, 4
    %v797 = vrot.slane %v719, 4
    %v798 = vrot.slane %v788, 4
    %v799 = vrot.slane %v790, 4
    %v804 = vadd.f32 %v140, %v796
    %v805 = vadd.f32 %v142, %v797
    %v806 = vadd.f32 %v217, %v798
    %v807 = vadd.f32 %v219, %v799
    %v808 = vxor.u32 %v804, 2147483648
    %v809 = vmul.f32 %v808, 1.442695
    %v810 = vpow.pop %v809
    %v811 = vadd.f32 %v810, 1.0
    %v812 = vrcp.pop %v811
    %v813 = vmul.f32 1.0, %v812
    %v814 = vxor.u32 %v805, 2147483648
    %v815 = vmul.f32 %v814, 1.442695
    %v816 = vpow.pop %v815
    %v817 = vadd.f32 %v816, 1.0
    %v818 = vrcp.pop %v817
    %v819 = vmul.f32 1.0, %v818
    %v820 = vtanh.pop %v806
    %v821 = vxor.u32 %v807, 2147483648
    %v822 = vmul.f32 %v821, 1.442695
    %v823 = vpow.pop %v822
    %v824 = vadd.f32 %v823, 1.0
    %v825 = vrcp.pop %v824
    %v826 = vmul.f32 1.0, %v825
    %v828 = vrot.slane %v643, 6
    %v830 = vmul.f32 %v819, %v828
    %v831 = vmul.f32 %v813, %v820
    %v832 = vadd.f32 %v830, %v831
    %v833 = vtanh.pop %v832
    %v834 = vmul.f32 %v826, %v833
    %v836 = vrot.slane %v834, 4
    %v838 = vmax.f32 %v649, %v836
    %839 = vmatprep.subr.mxu0 %v288
    %840 = vmatpush1.msra.mxu0 %v287
    %841 = vmatprep.subr.mxu0 %v284
    %842 = vmatpush1.msra.mxu0 %v283
    %843 = vmatprep.subr.mxu0 %v280
    %844 = vmatpush1.msra.mxu0 %v279
    %845 = vmatprep.subr.mxu0 %v276
    %846 = vmatpush1.msra.mxu0 %v275
    %847 = vmatprep.subr.mxu0 %v272
    %848 = vmatpush1.msra.mxu0 %v271
    %849 = vmatprep.subr.mxu0 %v268
    %850 = vmatpush1.msra.mxu0 %v267
    %851 = vmatprep.subr.mxu0 %v264
    %852 = vmatpush1.msra.mxu0 %v263
    %853 = vmatprep.subr.mxu0 %v260
    %854 = vmatpush1.msra.mxu0 %v259
    %855 = vmatprep.subr.mxu0 %v256
    %856 = vmatpush1.msra.mxu0 %v255
    %857 = vmatprep.subr.mxu0 %v252
    %858 = vmatpush1.msra.mxu0 %v251
    %859 = vmatprep.subr.mxu0 %v248
    %860 = vmatpush1.msra.mxu0 %v247
    %861 = vmatprep.subr.mxu0 %v244
    %862 = vmatpush1.msra.mxu0 %v243
    %863 = vmatprep.subr.mxu0 %v240
    %864 = vmatpush1.msra.mxu0 %v239
    %865 = vmatprep.subr.mxu0 %v236
    %866 = vmatpush1.msra.mxu0 %v235
    %867 = vmatprep.subr.mxu0 %v232
    %868 = vmatpush1.msra.mxu0 %v231
    %869 = vmatprep.subr.mxu0 %v228
    %870 = vmatpush1.msra.mxu0 %v227
    %871 = vmatprep.subr.mxu0 0.0
    %872 = vmatpush2.msra.mxu0 0.0
    %873 = vmatprep.subr.mxu0 0.0
    %874 = vmatpush2.msra.mxu0 0.0
    %875 = vmatprep.subr.mxu0 0.0
    %876 = vmatpush2.msra.mxu0 0.0
    %877 = vmatprep.subr.mxu0 0.0
    %878 = vmatpush2.msra.mxu0 0.0
    %879 = vmatprep.subr.mxu0 0.0
    %880 = vmatpush2.msra.mxu0 0.0
    %881 = vmatprep.subr.mxu0 0.0
    %882 = vmatpush2.msra.mxu0 0.0
    %883 = vmatprep.subr.mxu0 0.0
    %884 = vmatpush2.msra.mxu0 0.0
    %885 = vmatprep.subr.mxu0 0.0
    %886 = vmatpush2.msra.mxu0 0.0
    %887 = vmatprep.subr.mxu0 0.0
    %888 = vmatpush2.msra.mxu0 0.0
    %889 = vmatprep.subr.mxu0 0.0
    %890 = vmatpush2.msra.mxu0 0.0
    %891 = vmatprep.subr.mxu0 0.0
    %892 = vmatpush2.msra.mxu0 0.0
    %893 = vmatprep.subr.mxu0 0.0
    %894 = vmatpush2.msra.mxu0 0.0
    %895 = vmatprep.subr.mxu0 0.0
    %896 = vmatpush2.msra.mxu0 0.0
    %897 = vmatprep.subr.mxu0 0.0
    %898 = vmatpush2.msra.mxu0 0.0
    %899 = vmatprep.subr.mxu0 0.0
    %900 = vmatpush2.msra.mxu0 0.0
    %901 = vmatprep.subr.mxu0 0.0
    %902 = vmatpush2.msra.mxu0 0.0
    %903 = vmatprep.mubr.f32.mxu0 0.0
    %904 = vmatmul.mubr.f32.gmra.mxu0 %v836
    %v905 = vpop.f32.mrf.mxu0
    %v906 = vadd.f32 0.0, %v905
    %v907 = vpop.f32.mrf.mxu0
    %v908 = vadd.f32 0.0, %v907
    %909 = vdwg.mxu0
    %910 = vmatprep.subr.mxu0 %v290
    %911 = vmatpush1.msra.mxu0 %v289
    %912 = vmatprep.subr.mxu0 %v286
    %913 = vmatpush1.msra.mxu0 %v285
    %914 = vmatprep.subr.mxu0 %v282
    %915 = vmatpush1.msra.mxu0 %v281
    %916 = vmatprep.subr.mxu0 %v278
    %917 = vmatpush1.msra.mxu0 %v277
    %918 = vmatprep.subr.mxu0 %v274
    %919 = vmatpush1.msra.mxu0 %v273
    %920 = vmatprep.subr.mxu0 %v270
    %921 = vmatpush1.msra.mxu0 %v269
    %922 = vmatprep.subr.mxu0 %v266
    %923 = vmatpush1.msra.mxu0 %v265
    %924 = vmatprep.subr.mxu0 %v262
    %925 = vmatpush1.msra.mxu0 %v261
    %926 = vmatprep.subr.mxu0 %v258
    %927 = vmatpush1.msra.mxu0 %v257
    %928 = vmatprep.subr.mxu0 %v254
    %929 = vmatpush1.msra.mxu0 %v253
    %930 = vmatprep.subr.mxu0 %v250
    %931 = vmatpush1.msra.mxu0 %v249
    %932 = vmatprep.subr.mxu0 %v246
    %933 = vmatpush1.msra.mxu0 %v245
    %934 = vmatprep.subr.mxu0 %v242
    %935 = vmatpush1.msra.mxu0 %v241
    %936 = vmatprep.subr.mxu0 %v238
    %937 = vmatpush1.msra.mxu0 %v237
    %938 = vmatprep.subr.mxu0 %v234
    %939 = vmatpush1.msra.mxu0 %v233
    %940 = vmatprep.subr.mxu0 %v230
    %941 = vmatpush1.msra.mxu0 %v229
    %942 = vmatprep.subr.mxu0 0.0
    %943 = vmatpush2.msra.mxu0 0.0
    %944 = vmatprep.subr.mxu0 0.0
    %945 = vmatpush2.msra.mxu0 0.0
    %946 = vmatprep.subr.mxu0 0.0
    %947 = vmatpush2.msra.mxu0 0.0
    %948 = vmatprep.subr.mxu0 0.0
    %949 = vmatpush2.msra.mxu0 0.0
    %950 = vmatprep.subr.mxu0 0.0
    %951 = vmatpush2.msra.mxu0 0.0
    %952 = vmatprep.subr.mxu0 0.0
    %953 = vmatpush2.msra.mxu0 0.0
    %954 = vmatprep.subr.mxu0 0.0
    %955 = vmatpush2.msra.mxu0 0.0
    %956 = vmatprep.subr.mxu0 0.0
    %957 = vmatpush2.msra.mxu0 0.0
    %958 = vmatprep.subr.mxu0 0.0
    %959 = vmatpush2.msra.mxu0 0.0
    %960 = vmatprep.subr.mxu0 0.0
    %961 = vmatpush2.msra.mxu0 0.0
    %962 = vmatprep.subr.mxu0 0.0
    %963 = vmatpush2.msra.mxu0 0.0
    %964 = vmatprep.subr.mxu0 0.0
    %965 = vmatpush2.msra.mxu0 0.0
    %966 = vmatprep.subr.mxu0 0.0
    %967 = vmatpush2.msra.mxu0 0.0
    %968 = vmatprep.subr.mxu0 0.0
    %969 = vmatpush2.msra.mxu0 0.0
    %970 = vmatprep.subr.mxu0 0.0
    %971 = vmatpush2.msra.mxu0 0.0
    %972 = vmatprep.subr.mxu0 0.0
    %973 = vmatpush2.msra.mxu0 0.0
    %974 = vmatprep.mubr.f32.mxu0 0.0
    %975 = vmatmul.mubr.f32.gmra.mxu0 %v836
    %v976 = vpop.f32.mrf.mxu0
    %v977 = vadd.f32 0.0, %v976
    %v978 = vpop.f32.mrf.mxu0
    %v979 = vadd.f32 0.0, %v978
    %980 = vdwg.mxu0
    %v985 = vrot.slane %v906, 2
    %v986 = vrot.slane %v908, 2
    %v987 = vrot.slane %v977, 2
    %v988 = vrot.slane %v979, 2
    %v993 = vadd.f32 %v140, %v985
    %v994 = vadd.f32 %v142, %v986
    %v995 = vadd.f32 %v217, %v987
    %v996 = vadd.f32 %v219, %v988
    %v997 = vxor.u32 %v993, 2147483648
    %v998 = vmul.f32 %v997, 1.442695
    %v999 = vpow.pop %v998
    %v1000 = vadd.f32 %v999, 1.0
    %v1001 = vrcp.pop %v1000
    %v1002 = vmul.f32 1.0, %v1001
    %v1003 = vxor.u32 %v994, 2147483648
    %v1004 = vmul.f32 %v1003, 1.442695
    %v1005 = vpow.pop %v1004
    %v1006 = vadd.f32 %v1005, 1.0
    %v1007 = vrcp.pop %v1006
    %v1008 = vmul.f32 1.0, %v1007
    %v1009 = vtanh.pop %v995
    %v1010 = vxor.u32 %v996, 2147483648
    %v1011 = vmul.f32 %v1010, 1.442695
    %v1012 = vpow.pop %v1011
    %v1013 = vadd.f32 %v1012, 1.0
    %v1014 = vrcp.pop %v1013
    %v1015 = vmul.f32 1.0, %v1014
    %v1017 = vrot.slane %v832, 6
    %v1019 = vmul.f32 %v1008, %v1017
    %v1020 = vmul.f32 %v1002, %v1009
    %v1021 = vadd.f32 %v1019, %v1020
    %v1022 = vtanh.pop %v1021
    %v1023 = vmul.f32 %v1015, %v1022
    %v1025 = vrot.slane %v1023, 6
    %v1027 = vmax.f32 %v838, %v1025
    %1028 = vmatprep.subr.mxu0 %v288
    %1029 = vmatpush1.msra.mxu0 %v287
    %1030 = vmatprep.subr.mxu0 %v284
    %1031 = vmatpush1.msra.mxu0 %v283
    %1032 = vmatprep.subr.mxu0 %v280
    %1033 = vmatpush1.msra.mxu0 %v279
    %1034 = vmatprep.subr.mxu0 %v276
    %1035 = vmatpush1.msra.mxu0 %v275
    %1036 = vmatprep.subr.mxu0 %v272
    %1037 = vmatpush1.msra.mxu0 %v271
    %1038 = vmatprep.subr.mxu0 %v268
    %1039 = vmatpush1.msra.mxu0 %v267
    %1040 = vmatprep.subr.mxu0 %v264
    %1041 = vmatpush1.msra.mxu0 %v263
    %1042 = vmatprep.subr.mxu0 %v260
    %1043 = vmatpush1.msra.mxu0 %v259
    %1044 = vmatprep.subr.mxu0 %v256
    %1045 = vmatpush1.msra.mxu0 %v255
    %1046 = vmatprep.subr.mxu0 %v252
    %1047 = vmatpush1.msra.mxu0 %v251
    %1048 = vmatprep.subr.mxu0 %v248
    %1049 = vmatpush1.msra.mxu0 %v247
    %1050 = vmatprep.subr.mxu0 %v244
    %1051 = vmatpush1.msra.mxu0 %v243
    %1052 = vmatprep.subr.mxu0 %v240
    %1053 = vmatpush1.msra.mxu0 %v239
    %1054 = vmatprep.subr.mxu0 %v236
    %1055 = vmatpush1.msra.mxu0 %v235
    %1056 = vmatprep.subr.mxu0 %v232
    %1057 = vmatpush1.msra.mxu0 %v231
    %1058 = vmatprep.subr.mxu0 %v228
    %1059 = vmatpush1.msra.mxu0 %v227
    %1060 = vmatprep.subr.mxu0 0.0
    %1061 = vmatpush2.msra.mxu0 0.0
    %1062 = vmatprep.subr.mxu0 0.0
    %1063 = vmatpush2.msra.mxu0 0.0
    %1064 = vmatprep.subr.mxu0 0.0
    %1065 = vmatpush2.msra.mxu0 0.0
    %1066 = vmatprep.subr.mxu0 0.0
    %1067 = vmatpush2.msra.mxu0 0.0
    %1068 = vmatprep.subr.mxu0 0.0
    %1069 = vmatpush2.msra.mxu0 0.0
    %1070 = vmatprep.subr.mxu0 0.0
    %1071 = vmatpush2.msra.mxu0 0.0
    %1072 = vmatprep.subr.mxu0 0.0
    %1073 = vmatpush2.msra.mxu0 0.0
    %1074 = vmatprep.subr.mxu0 0.0
    %1075 = vmatpush2.msra.mxu0 0.0
    %1076 = vmatprep.subr.mxu0 0.0
    %1077 = vmatpush2.msra.mxu0 0.0
    %1078 = vmatprep.subr.mxu0 0.0
    %1079 = vmatpush2.msra.mxu0 0.0
    %1080 = vmatprep.subr.mxu0 0.0
    %1081 = vmatpush2.msra.mxu0 0.0
    %1082 = vmatprep.subr.mxu0 0.0
    %1083 = vmatpush2.msra.mxu0 0.0
    %1084 = vmatprep.subr.mxu0 0.0
    %1085 = vmatpush2.msra.mxu0 0.0
    %1086 = vmatprep.subr.mxu0 0.0
    %1087 = vmatpush2.msra.mxu0 0.0
    %1088 = vmatprep.subr.mxu0 0.0
    %1089 = vmatpush2.msra.mxu0 0.0
    %1090 = vmatprep.subr.mxu0 0.0
    %1091 = vmatpush2.msra.mxu0 0.0
    %1092 = vmatprep.mubr.f32.mxu0 0.0
    %1093 = vmatmul.mubr.f32.gmra.mxu0 %v1025
    %v1094 = vpop.f32.mrf.mxu0
    %v1095 = vadd.f32 0.0, %v1094
    %v1096 = vpop.f32.mrf.mxu0
    %v1097 = vadd.f32 0.0, %v1096
    %1098 = vdwg.mxu0
    %1099 = vmatprep.subr.mxu0 %v290
    %1100 = vmatpush1.msra.mxu0 %v289
    %1101 = vmatprep.subr.mxu0 %v286
    %1102 = vmatpush1.msra.mxu0 %v285
    %1103 = vmatprep.subr.mxu0 %v282
    %1104 = vmatpush1.msra.mxu0 %v281
    %1105 = vmatprep.subr.mxu0 %v278
    %1106 = vmatpush1.msra.mxu0 %v277
    %1107 = vmatprep.subr.mxu0 %v274
    %1108 = vmatpush1.msra.mxu0 %v273
    %1109 = vmatprep.subr.mxu0 %v270
    %1110 = vmatpush1.msra.mxu0 %v269
    %1111 = vmatprep.subr.mxu0 %v266
    %1112 = vmatpush1.msra.mxu0 %v265
    %1113 = vmatprep.subr.mxu0 %v262
    %1114 = vmatpush1.msra.mxu0 %v261
    %1115 = vmatprep.subr.mxu0 %v258
    %1116 = vmatpush1.msra.mxu0 %v257
    %1117 = vmatprep.subr.mxu0 %v254
    %1118 = vmatpush1.msra.mxu0 %v253
    %1119 = vmatprep.subr.mxu0 %v250
    %1120 = vmatpush1.msra.mxu0 %v249
    %1121 = vmatprep.subr.mxu0 %v246
    %1122 = vmatpush1.msra.mxu0 %v245
    %1123 = vmatprep.subr.mxu0 %v242
    %1124 = vmatpush1.msra.mxu0 %v241
    %1125 = vmatprep.subr.mxu0 %v238
    %1126 = vmatpush1.msra.mxu0 %v237
    %1127 = vmatprep.subr.mxu0 %v234
    %1128 = vmatpush1.msra.mxu0 %v233
    %1129 = vmatprep.subr.mxu0 %v230
    %1130 = vmatpush1.msra.mxu0 %v229
    %1131 = vmatprep.subr.mxu0 0.0
    %1132 = vmatpush2.msra.mxu0 0.0
    %1133 = vmatprep.subr.mxu0 0.0
    %1134 = vmatpush2.msra.mxu0 0.0
    %1135 = vmatprep.subr.mxu0 0.0
    %1136 = vmatpush2.msra.mxu0 0.0
    %1137 = vmatprep.subr.mxu0 0.0
    %1138 = vmatpush2.msra.mxu0 0.0
    %1139 = vmatprep.subr.mxu0 0.0
    %1140 = vmatpush2.msra.mxu0 0.0
    %1141 = vmatprep.subr.mxu0 0.0
    %1142 = vmatpush2.msra.mxu0 0.0
    %1143 = vmatprep.subr.mxu0 0.0
    %1144 = vmatpush2.msra.mxu0 0.0
    %1145 = vmatprep.subr.mxu0 0.0
    %1146 = vmatpush2.msra.mxu0 0.0
    %1147 = vmatprep.subr.mxu0 0.0
    %1148 = vmatpush2.msra.mxu0 0.0
    %1149 = vmatprep.subr.mxu0 0.0
    %1150 = vmatpush2.msra.mxu0 0.0
    %1151 = vmatprep.subr.mxu0 0.0
    %1152 = vmatpush2.msra.mxu0 0.0
    %1153 = vmatprep.subr.mxu0 0.0
    %1154 = vmatpush2.msra.mxu0 0.0
    %1155 = vmatprep.subr.mxu0 0.0
    %1156 = vmatpush2.msra.mxu0 0.0
    %1157 = vmatprep.subr.mxu0 0.0
    %1158 = vmatpush2.msra.mxu0 0.0
    %1159 = vmatprep.subr.mxu0 0.0
    %1160 = vmatpush2.msra.mxu0 0.0
    %1161 = vmatprep.subr.mxu0 0.0
    %1162 = vmatpush2.msra.mxu0 0.0
    %1163 = vmatprep.mubr.f32.mxu0 0.0
    %1164 = vmatmul.mubr.f32.gmra.mxu0 %v1025
    %v1165 = vpop.f32.mrf.mxu0
    %v1166 = vadd.f32 0.0, %v1165
    %v1167 = vpop.f32.mrf.mxu0
    %v1168 = vadd.f32 0.0, %v1167
    %1169 = vdwg.mxu0
    %v1170 = vadd.f32 %v146, %v1095
    %v1171 = vadd.f32 %v148, %v1097
    %v1172 = vadd.f32 %v223, %v1166
    %v1173 = vadd.f32 %v225, %v1168
    %v1174 = vxor.u32 %v1170, 2147483648
    %v1175 = vmul.f32 %v1174, 1.442695
    %v1176 = vpow.pop %v1175
    %v1177 = vadd.f32 %v1176, 1.0
    %v1178 = vrcp.pop %v1177
    %v1179 = vmul.f32 1.0, %v1178
    %v1180 = vxor.u32 %v1171, 2147483648
    %v1181 = vmul.f32 %v1180, 1.442695
    %v1182 = vpow.pop %v1181
    %v1183 = vadd.f32 %v1182, 1.0
    %v1184 = vrcp.pop %v1183
    %v1185 = vmul.f32 1.0, %v1184
    %v1186 = vtanh.pop %v1172
    %v1187 = vxor.u32 %v1173, 2147483648
    %v1188 = vmul.f32 %v1187, 1.442695
    %v1189 = vpow.pop %v1188
    %v1190 = vadd.f32 %v1189, 1.0
    %v1191 = vrcp.pop %v1190
    %v1192 = vmul.f32 1.0, %v1191
    %v1194 = vrot.slane %v1021, 6
    %v1196 = vmul.f32 %v1185, %v1194
    %v1197 = vmul.f32 %v1179, %v1186
    %v1198 = vadd.f32 %v1196, %v1197
    %v1199 = vtanh.pop %v1198
    %v1200 = vmul.f32 %v1192, %v1199
    %v1201 = vmax.f32 %v1027, %v1200
    %1202 = vmatprep.subr.mxu0 %v288
    %1203 = vmatpush1.msra.mxu0 %v287
    %1204 = vmatprep.subr.mxu0 %v284
    %1205 = vmatpush1.msra.mxu0 %v283
    %1206 = vmatprep.subr.mxu0 %v280
    %1207 = vmatpush1.msra.mxu0 %v279
    %1208 = vmatprep.subr.mxu0 %v276
    %1209 = vmatpush1.msra.mxu0 %v275
    %1210 = vmatprep.subr.mxu0 %v272
    %1211 = vmatpush1.msra.mxu0 %v271
    %1212 = vmatprep.subr.mxu0 %v268
    %1213 = vmatpush1.msra.mxu0 %v267
    %1214 = vmatprep.subr.mxu0 %v264
    %1215 = vmatpush1.msra.mxu0 %v263
    %1216 = vmatprep.subr.mxu0 %v260
    %1217 = vmatpush1.msra.mxu0 %v259
    %1218 = vmatprep.subr.mxu0 %v256
    %1219 = vmatpush1.msra.mxu0 %v255
    %1220 = vmatprep.subr.mxu0 %v252
    %1221 = vmatpush1.msra.mxu0 %v251
    %1222 = vmatprep.subr.mxu0 %v248
    %1223 = vmatpush1.msra.mxu0 %v247
    %1224 = vmatprep.subr.mxu0 %v244
    %1225 = vmatpush1.msra.mxu0 %v243
    %1226 = vmatprep.subr.mxu0 %v240
    %1227 = vmatpush1.msra.mxu0 %v239
    %1228 = vmatprep.subr.mxu0 %v236
    %1229 = vmatpush1.msra.mxu0 %v235
    %1230 = vmatprep.subr.mxu0 %v232
    %1231 = vmatpush1.msra.mxu0 %v231
    %1232 = vmatprep.subr.mxu0 %v228
    %1233 = vmatpush1.msra.mxu0 %v227
    %1234 = vmatprep.subr.mxu0 0.0
    %1235 = vmatpush2.msra.mxu0 0.0
    %1236 = vmatprep.subr.mxu0 0.0
    %1237 = vmatpush2.msra.mxu0 0.0
    %1238 = vmatprep.subr.mxu0 0.0
    %1239 = vmatpush2.msra.mxu0 0.0
    %1240 = vmatprep.subr.mxu0 0.0
    %1241 = vmatpush2.msra.mxu0 0.0
    %1242 = vmatprep.subr.mxu0 0.0
    %1243 = vmatpush2.msra.mxu0 0.0
    %1244 = vmatprep.subr.mxu0 0.0
    %1245 = vmatpush2.msra.mxu0 0.0
    %1246 = vmatprep.subr.mxu0 0.0
    %1247 = vmatpush2.msra.mxu0 0.0
    %1248 = vmatprep.subr.mxu0 0.0
    %1249 = vmatpush2.msra.mxu0 0.0
    %1250 = vmatprep.subr.mxu0 0.0
    %1251 = vmatpush2.msra.mxu0 0.0
    %1252 = vmatprep.subr.mxu0 0.0
    %1253 = vmatpush2.msra.mxu0 0.0
    %1254 = vmatprep.subr.mxu0 0.0
    %1255 = vmatpush2.msra.mxu0 0.0
    %1256 = vmatprep.subr.mxu0 0.0
    %1257 = vmatpush2.msra.mxu0 0.0
    %1258 = vmatprep.subr.mxu0 0.0
    %1259 = vmatpush2.msra.mxu0 0.0
    %1260 = vmatprep.subr.mxu0 0.0
    %1261 = vmatpush2.msra.mxu0 0.0
    %1262 = vmatprep.subr.mxu0 0.0
    %1263 = vmatpush2.msra.mxu0 0.0
    %1264 = vmatprep.subr.mxu0 0.0
    %1265 = vmatpush2.msra.mxu0 0.0
    %1266 = vmatprep.mubr.f32.mxu0 0.0
    %1267 = vmatmul.mubr.f32.gmra.mxu0 %v1200
    %v1268 = vpop.f32.mrf.mxu0
    %v1269 = vadd.f32 0.0, %v1268
    %v1270 = vpop.f32.mrf.mxu0
    %v1271 = vadd.f32 0.0, %v1270
    %1272 = vdwg.mxu0
    %1273 = vmatprep.subr.mxu0 %v290
    %1274 = vmatpush1.msra.mxu0 %v289
    %1275 = vmatprep.subr.mxu0 %v286
    %1276 = vmatpush1.msra.mxu0 %v285
    %1277 = vmatprep.subr.mxu0 %v282
    %1278 = vmatpush1.msra.mxu0 %v281
    %1279 = vmatprep.subr.mxu0 %v278
    %1280 = vmatpush1.msra.mxu0 %v277
    %1281 = vmatprep.subr.mxu0 %v274
    %1282 = vmatpush1.msra.mxu0 %v273
    %1283 = vmatprep.subr.mxu0 %v270
    %1284 = vmatpush1.msra.mxu0 %v269
    %1285 = vmatprep.subr.mxu0 %v266
    %1286 = vmatpush1.msra.mxu0 %v265
    %1287 = vmatprep.subr.mxu0 %v262
    %1288 = vmatpush1.msra.mxu0 %v261
    %1289 = vmatprep.subr.mxu0 %v258
    %1290 = vmatpush1.msra.mxu0 %v257
    %1291 = vmatprep.subr.mxu0 %v254
    %1292 = vmatpush1.msra.mxu0 %v253
    %1293 = vmatprep.subr.mxu0 %v250
    %1294 = vmatpush1.msra.mxu0 %v249
    %1295 = vmatprep.subr.mxu0 %v246
    %1296 = vmatpush1.msra.mxu0 %v245
    %1297 = vmatprep.subr.mxu0 %v242
    %1298 = vmatpush1.msra.mxu0 %v241
    %1299 = vmatprep.subr.mxu0 %v238
    %1300 = vmatpush1.msra.mxu0 %v237
    %1301 = vmatprep.subr.mxu0 %v234
    %1302 = vmatpush1.msra.mxu0 %v233
    %1303 = vmatprep.subr.mxu0 %v230
    %1304 = vmatpush1.msra.mxu0 %v229
    %1305 = vmatprep.subr.mxu0 0.0
    %1306 = vmatpush2.msra.mxu0 0.0
    %1307 = vmatprep.subr.mxu0 0.0
    %1308 = vmatpush2.msra.mxu0 0.0
    %1309 = vmatprep.subr.mxu0 0.0
    %1310 = vmatpush2.msra.mxu0 0.0
    %1311 = vmatprep.subr.mxu0 0.0
    %1312 = vmatpush2.msra.mxu0 0.0
    %1313 = vmatprep.subr.mxu0 0.0
    %1314 = vmatpush2.msra.mxu0 0.0
    %1315 = vmatprep.subr.mxu0 0.0
    %1316 = vmatpush2.msra.mxu0 0.0
    %1317 = vmatprep.subr.mxu0 0.0
    %1318 = vmatpush2.msra.mxu0 0.0
    %1319 = vmatprep.subr.mxu0 0.0
    %1320 = vmatpush2.msra.mxu0 0.0
    %1321 = vmatprep.subr.mxu0 0.0
    %1322 = vmatpush2.msra.mxu0 0.0
    %1323 = vmatprep.subr.mxu0 0.0
    %1324 = vmatpush2.msra.mxu0 0.0
    %1325 = vmatprep.subr.mxu0 0.0
    %1326 = vmatpush2.msra.mxu0 0.0
    %1327 = vmatprep.subr.mxu0 0.0
    %1328 = vmatpush2.msra.mxu0 0.0
    %1329 = vmatprep.subr.mxu0 0.0
    %1330 = vmatpush2.msra.mxu0 0.0
    %1331 = vmatprep.subr.mxu0 0.0
    %1332 = vmatpush2.msra.mxu0 0.0
    %1333 = vmatprep.subr.mxu0 0.0
    %1334 = vmatpush2.msra.mxu0 0.0
    %1335 = vmatprep.subr.mxu0 0.0
    %1336 = vmatpush2.msra.mxu0 0.0
    %1337 = vmatprep.mubr.f32.mxu0 0.0
    %1338 = vmatmul.mubr.f32.gmra.mxu0 %v1200
    %v1339 = vpop.f32.mrf.mxu0
    %v1340 = vadd.f32 0.0, %v1339
    %v1341 = vpop.f32.mrf.mxu0
    %v1342 = vadd.f32 0.0, %v1341
    %1343 = vdwg.mxu0
    %v1348 = vrot.slane %v1269, 6
    %v1349 = vrot.slane %v1271, 6
    %v1350 = vrot.slane %v1340, 6
    %v1351 = vrot.slane %v1342, 6
    %v1356 = vadd.f32 %v146, %v1348
    %v1357 = vadd.f32 %v148, %v1349
    %v1358 = vadd.f32 %v223, %v1350
    %v1359 = vadd.f32 %v225, %v1351
    %v1360 = vxor.u32 %v1356, 2147483648
    %v1361 = vmul.f32 %v1360, 1.442695
    %v1362 = vpow.pop %v1361
    %v1363 = vadd.f32 %v1362, 1.0
    %v1364 = vrcp.pop %v1363
    %v1365 = vmul.f32 1.0, %v1364
    %v1366 = vxor.u32 %v1357, 2147483648
    %v1367 = vmul.f32 %v1366, 1.442695
    %v1368 = vpow.pop %v1367
    %v1369 = vadd.f32 %v1368, 1.0
    %v1370 = vrcp.pop %v1369
    %v1371 = vmul.f32 1.0, %v1370
    %v1372 = vtanh.pop %v1358
    %v1373 = vxor.u32 %v1359, 2147483648
    %v1374 = vmul.f32 %v1373, 1.442695
    %v1375 = vpow.pop %v1374
    %v1376 = vadd.f32 %v1375, 1.0
    %v1377 = vrcp.pop %v1376
    %v1378 = vmul.f32 1.0, %v1377
    %v1380 = vrot.slane %v1198, 6
    %v1382 = vmul.f32 %v1371, %v1380
    %v1383 = vmul.f32 %v1365, %v1372
    %v1384 = vadd.f32 %v1382, %v1383
    %v1385 = vtanh.pop %v1384
    %v1386 = vmul.f32 %v1378, %v1385
    %v1388 = vrot.slane %v1386, 2
    %v1390 = vmax.f32 %v1201, %v1388
    %1391 = vmatprep.subr.mxu0 %v288
    %1392 = vmatpush1.msra.mxu0 %v287
    %1393 = vmatprep.subr.mxu0 %v284
    %1394 = vmatpush1.msra.mxu0 %v283
    %1395 = vmatprep.subr.mxu0 %v280
    %1396 = vmatpush1.msra.mxu0 %v279
    %1397 = vmatprep.subr.mxu0 %v276
    %1398 = vmatpush1.msra.mxu0 %v275
    %1399 = vmatprep.subr.mxu0 %v272
    %1400 = vmatpush1.msra.mxu0 %v271
    %1401 = vmatprep.subr.mxu0 %v268
    %1402 = vmatpush1.msra.mxu0 %v267
    %1403 = vmatprep.subr.mxu0 %v264
    %1404 = vmatpush1.msra.mxu0 %v263
    %1405 = vmatprep.subr.mxu0 %v260
    %1406 = vmatpush1.msra.mxu0 %v259
    %1407 = vmatprep.subr.mxu0 %v256
    %1408 = vmatpush1.msra.mxu0 %v255
    %1409 = vmatprep.subr.mxu0 %v252
    %1410 = vmatpush1.msra.mxu0 %v251
    %1411 = vmatprep.subr.mxu0 %v248
    %1412 = vmatpush1.msra.mxu0 %v247
    %1413 = vmatprep.subr.mxu0 %v244
    %1414 = vmatpush1.msra.mxu0 %v243
    %1415 = vmatprep.subr.mxu0 %v240
    %1416 = vmatpush1.msra.mxu0 %v239
    %1417 = vmatprep.subr.mxu0 %v236
    %1418 = vmatpush1.msra.mxu0 %v235
    %1419 = vmatprep.subr.mxu0 %v232
    %1420 = vmatpush1.msra.mxu0 %v231
    %1421 = vmatprep.subr.mxu0 %v228
    %1422 = vmatpush1.msra.mxu0 %v227
    %1423 = vmatprep.subr.mxu0 0.0
    %1424 = vmatpush2.msra.mxu0 0.0
    %1425 = vmatprep.subr.mxu0 0.0
    %1426 = vmatpush2.msra.mxu0 0.0
    %1427 = vmatprep.subr.mxu0 0.0
    %1428 = vmatpush2.msra.mxu0 0.0
    %1429 = vmatprep.subr.mxu0 0.0
    %1430 = vmatpush2.msra.mxu0 0.0
    %1431 = vmatprep.subr.mxu0 0.0
    %1432 = vmatpush2.msra.mxu0 0.0
    %1433 = vmatprep.subr.mxu0 0.0
    %1434 = vmatpush2.msra.mxu0 0.0
    %1435 = vmatprep.subr.mxu0 0.0
    %1436 = vmatpush2.msra.mxu0 0.0
    %1437 = vmatprep.subr.mxu0 0.0
    %1438 = vmatpush2.msra.mxu0 0.0
    %1439 = vmatprep.subr.mxu0 0.0
    %1440 = vmatpush2.msra.mxu0 0.0
    %1441 = vmatprep.subr.mxu0 0.0
    %1442 = vmatpush2.msra.mxu0 0.0
    %1443 = vmatprep.subr.mxu0 0.0
    %1444 = vmatpush2.msra.mxu0 0.0
    %1445 = vmatprep.subr.mxu0 0.0
    %1446 = vmatpush2.msra.mxu0 0.0
    %1447 = vmatprep.subr.mxu0 0.0
    %1448 = vmatpush2.msra.mxu0 0.0
    %1449 = vmatprep.subr.mxu0 0.0
    %1450 = vmatpush2.msra.mxu0 0.0
    %1451 = vmatprep.subr.mxu0 0.0
    %1452 = vmatpush2.msra.mxu0 0.0
    %1453 = vmatprep.subr.mxu0 0.0
    %1454 = vmatpush2.msra.mxu0 0.0
    %1455 = vmatprep.mubr.f32.mxu0 0.0
    %1456 = vmatmul.mubr.f32.gmra.mxu0 %v1388
    %v1457 = vpop.f32.mrf.mxu0
    %v1458 = vadd.f32 0.0, %v1457
    %v1459 = vpop.f32.mrf.mxu0
    %v1460 = vadd.f32 0.0, %v1459
    %1461 = vdwg.mxu0
    %1462 = vmatprep.subr.mxu0 %v290
    %1463 = vmatpush1.msra.mxu0 %v289
    %1464 = vmatprep.subr.mxu0 %v286
    %1465 = vmatpush1.msra.mxu0 %v285
    %1466 = vmatprep.subr.mxu0 %v282
    %1467 = vmatpush1.msra.mxu0 %v281
    %1468 = vmatprep.subr.mxu0 %v278
    %1469 = vmatpush1.msra.mxu0 %v277
    %1470 = vmatprep.subr.mxu0 %v274
    %1471 = vmatpush1.msra.mxu0 %v273
    %1472 = vmatprep.subr.mxu0 %v270
    %1473 = vmatpush1.msra.mxu0 %v269
    %1474 = vmatprep.subr.mxu0 %v266
    %1475 = vmatpush1.msra.mxu0 %v265
    %1476 = vmatprep.subr.mxu0 %v262
    %1477 = vmatpush1.msra.mxu0 %v261
    %1478 = vmatprep.subr.mxu0 %v258
    %1479 = vmatpush1.msra.mxu0 %v257
    %1480 = vmatprep.subr.mxu0 %v254
    %1481 = vmatpush1.msra.mxu0 %v253
    %1482 = vmatprep.subr.mxu0 %v250
    %1483 = vmatpush1.msra.mxu0 %v249
    %1484 = vmatprep.subr.mxu0 %v246
    %1485 = vmatpush1.msra.mxu0 %v245
    %1486 = vmatprep.subr.mxu0 %v242
    %1487 = vmatpush1.msra.mxu0 %v241
    %1488 = vmatprep.subr.mxu0 %v238
    %1489 = vmatpush1.msra.mxu0 %v237
    %1490 = vmatprep.subr.mxu0 %v234
    %1491 = vmatpush1.msra.mxu0 %v233
    %1492 = vmatprep.subr.mxu0 %v230
    %1493 = vmatpush1.msra.mxu0 %v229
    %1494 = vmatprep.subr.mxu0 0.0
    %1495 = vmatpush2.msra.mxu0 0.0
    %1496 = vmatprep.subr.mxu0 0.0
    %1497 = vmatpush2.msra.mxu0 0.0
    %1498 = vmatprep.subr.mxu0 0.0
    %1499 = vmatpush2.msra.mxu0 0.0
    %1500 = vmatprep.subr.mxu0 0.0
    %1501 = vmatpush2.msra.mxu0 0.0
    %1502 = vmatprep.subr.mxu0 0.0
    %1503 = vmatpush2.msra.mxu0 0.0
    %1504 = vmatprep.subr.mxu0 0.0
    %1505 = vmatpush2.msra.mxu0 0.0
    %1506 = vmatprep.subr.mxu0 0.0
    %1507 = vmatpush2.msra.mxu0 0.0
    %1508 = vmatprep.subr.mxu0 0.0
    %1509 = vmatpush2.msra.mxu0 0.0
    %1510 = vmatprep.subr.mxu0 0.0
    %1511 = vmatpush2.msra.mxu0 0.0
    %1512 = vmatprep.subr.mxu0 0.0
    %1513 = vmatpush2.msra.mxu0 0.0
    %1514 = vmatprep.subr.mxu0 0.0
    %1515 = vmatpush2.msra.mxu0 0.0
    %1516 = vmatprep.subr.mxu0 0.0
    %1517 = vmatpush2.msra.mxu0 0.0
    %1518 = vmatprep.subr.mxu0 0.0
    %1519 = vmatpush2.msra.mxu0 0.0
    %1520 = vmatprep.subr.mxu0 0.0
    %1521 = vmatpush2.msra.mxu0 0.0
    %1522 = vmatprep.subr.mxu0 0.0
    %1523 = vmatpush2.msra.mxu0 0.0
    %1524 = vmatprep.subr.mxu0 0.0
    %1525 = vmatpush2.msra.mxu0 0.0
    %1526 = vmatprep.mubr.f32.mxu0 0.0
    %1527 = vmatmul.mubr.f32.gmra.mxu0 %v1388
    %v1528 = vpop.f32.mrf.mxu0
    %v1529 = vadd.f32 0.0, %v1528
    %v1530 = vpop.f32.mrf.mxu0
    %v1531 = vadd.f32 0.0, %v1530
    %1532 = vdwg.mxu0
    %v1537 = vrot.slane %v1458, 4
    %v1538 = vrot.slane %v1460, 4
    %v1539 = vrot.slane %v1529, 4
    %v1540 = vrot.slane %v1531, 4
    %v1545 = vadd.f32 %v146, %v1537
    %v1546 = vadd.f32 %v148, %v1538
    %v1547 = vadd.f32 %v223, %v1539
    %v1548 = vadd.f32 %v225, %v1540
    %v1549 = vxor.u32 %v1545, 2147483648
    %v1550 = vmul.f32 %v1549, 1.442695
    %v1551 = vpow.pop %v1550
    %v1552 = vadd.f32 %v1551, 1.0
    %v1553 = vrcp.pop %v1552
    %v1554 = vmul.f32 1.0, %v1553
    %v1555 = vxor.u32 %v1546, 2147483648
    %v1556 = vmul.f32 %v1555, 1.442695
    %v1557 = vpow.pop %v1556
    %v1558 = vadd.f32 %v1557, 1.0
    %v1559 = vrcp.pop %v1558
    %v1560 = vmul.f32 1.0, %v1559
    %v1561 = vtanh.pop %v1547
    %v1562 = vxor.u32 %v1548, 2147483648
    %v1563 = vmul.f32 %v1562, 1.442695
    %v1564 = vpow.pop %v1563
    %v1565 = vadd.f32 %v1564, 1.0
    %v1566 = vrcp.pop %v1565
    %v1567 = vmul.f32 1.0, %v1566
    %v1569 = vrot.slane %v1384, 6
    %v1571 = vmul.f32 %v1560, %v1569
    %v1572 = vmul.f32 %v1554, %v1561
    %v1573 = vadd.f32 %v1571, %v1572
    %v1574 = vtanh.pop %v1573
    %v1575 = vmul.f32 %v1567, %v1574
    %v1577 = vrot.slane %v1575, 4
    %v1579 = vmax.f32 %v1390, %v1577
    %1580 = vmatprep.subr.mxu0 %v288
    %1581 = vmatpush1.msra.mxu0 %v287
    %1582 = vmatprep.subr.mxu0 %v284
    %1583 = vmatpush1.msra.mxu0 %v283
    %1584 = vmatprep.subr.mxu0 %v280
    %1585 = vmatpush1.msra.mxu0 %v279
    %1586 = vmatprep.subr.mxu0 %v276
    %1587 = vmatpush1.msra.mxu0 %v275
    %1588 = vmatprep.subr.mxu0 %v272
    %1589 = vmatpush1.msra.mxu0 %v271
    %1590 = vmatprep.subr.mxu0 %v268
    %1591 = vmatpush1.msra.mxu0 %v267
    %1592 = vmatprep.subr.mxu0 %v264
    %1593 = vmatpush1.msra.mxu0 %v263
    %1594 = vmatprep.subr.mxu0 %v260
    %1595 = vmatpush1.msra.mxu0 %v259
    %1596 = vmatprep.subr.mxu0 %v256
    %1597 = vmatpush1.msra.mxu0 %v255
    %1598 = vmatprep.subr.mxu0 %v252
    %1599 = vmatpush1.msra.mxu0 %v251
    %1600 = vmatprep.subr.mxu0 %v248
    %1601 = vmatpush1.msra.mxu0 %v247
    %1602 = vmatprep.subr.mxu0 %v244
    %1603 = vmatpush1.msra.mxu0 %v243
    %1604 = vmatprep.subr.mxu0 %v240
    %1605 = vmatpush1.msra.mxu0 %v239
    %1606 = vmatprep.subr.mxu0 %v236
    %1607 = vmatpush1.msra.mxu0 %v235
    %1608 = vmatprep.subr.mxu0 %v232
    %1609 = vmatpush1.msra.mxu0 %v231
    %1610 = vmatprep.subr.mxu0 %v228
    %1611 = vmatpush1.msra.mxu0 %v227
    %1612 = vmatprep.subr.mxu0 0.0
    %1613 = vmatpush2.msra.mxu0 0.0
    %1614 = vmatprep.subr.mxu0 0.0
    %1615 = vmatpush2.msra.mxu0 0.0
    %1616 = vmatprep.subr.mxu0 0.0
    %1617 = vmatpush2.msra.mxu0 0.0
    %1618 = vmatprep.subr.mxu0 0.0
    %1619 = vmatpush2.msra.mxu0 0.0
    %1620 = vmatprep.subr.mxu0 0.0
    %1621 = vmatpush2.msra.mxu0 0.0
    %1622 = vmatprep.subr.mxu0 0.0
    %1623 = vmatpush2.msra.mxu0 0.0
    %1624 = vmatprep.subr.mxu0 0.0
    %1625 = vmatpush2.msra.mxu0 0.0
    %1626 = vmatprep.subr.mxu0 0.0
    %1627 = vmatpush2.msra.mxu0 0.0
    %1628 = vmatprep.subr.mxu0 0.0
    %1629 = vmatpush2.msra.mxu0 0.0
    %1630 = vmatprep.subr.mxu0 0.0
    %1631 = vmatpush2.msra.mxu0 0.0
    %1632 = vmatprep.subr.mxu0 0.0
    %1633 = vmatpush2.msra.mxu0 0.0
    %1634 = vmatprep.subr.mxu0 0.0
    %1635 = vmatpush2.msra.mxu0 0.0
    %1636 = vmatprep.subr.mxu0 0.0
    %1637 = vmatpush2.msra.mxu0 0.0
    %1638 = vmatprep.subr.mxu0 0.0
    %1639 = vmatpush2.msra.mxu0 0.0
    %1640 = vmatprep.subr.mxu0 0.0
    %1641 = vmatpush2.msra.mxu0 0.0
    %1642 = vmatprep.subr.mxu0 0.0
    %1643 = vmatpush2.msra.mxu0 0.0
    %1644 = vmatprep.mubr.f32.mxu0 0.0
    %1645 = vmatmul.mubr.f32.gmra.mxu0 %v1577
    %v1646 = vpop.f32.mrf.mxu0
    %v1647 = vadd.f32 0.0, %v1646
    %v1648 = vpop.f32.mrf.mxu0
    %v1649 = vadd.f32 0.0, %v1648
    %1650 = vdwg.mxu0
    %1651 = vmatprep.subr.mxu0 %v290
    %1652 = vmatpush1.msra.mxu0 %v289
    %1653 = vmatprep.subr.mxu0 %v286
    %1654 = vmatpush1.msra.mxu0 %v285
    %1655 = vmatprep.subr.mxu0 %v282
    %1656 = vmatpush1.msra.mxu0 %v281
    %1657 = vmatprep.subr.mxu0 %v278
    %1658 = vmatpush1.msra.mxu0 %v277
    %1659 = vmatprep.subr.mxu0 %v274
    %1660 = vmatpush1.msra.mxu0 %v273
    %1661 = vmatprep.subr.mxu0 %v270
    %1662 = vmatpush1.msra.mxu0 %v269
    %1663 = vmatprep.subr.mxu0 %v266
    %1664 = vmatpush1.msra.mxu0 %v265
    %1665 = vmatprep.subr.mxu0 %v262
    %1666 = vmatpush1.msra.mxu0 %v261
    %1667 = vmatprep.subr.mxu0 %v258
    %1668 = vmatpush1.msra.mxu0 %v257
    %1669 = vmatprep.subr.mxu0 %v254
    %1670 = vmatpush1.msra.mxu0 %v253
    %1671 = vmatprep.subr.mxu0 %v250
    %1672 = vmatpush1.msra.mxu0 %v249
    %1673 = vmatprep.subr.mxu0 %v246
    %1674 = vmatpush1.msra.mxu0 %v245
    %1675 = vmatprep.subr.mxu0 %v242
    %1676 = vmatpush1.msra.mxu0 %v241
    %1677 = vmatprep.subr.mxu0 %v238
    %1678 = vmatpush1.msra.mxu0 %v237
    %1679 = vmatprep.subr.mxu0 %v234
    %1680 = vmatpush1.msra.mxu0 %v233
    %1681 = vmatprep.subr.mxu0 %v230
    %1682 = vmatpush1.msra.mxu0 %v229
    %1683 = vmatprep.subr.mxu0 0.0
    %1684 = vmatpush2.msra.mxu0 0.0
    %1685 = vmatprep.subr.mxu0 0.0
    %1686 = vmatpush2.msra.mxu0 0.0
    %1687 = vmatprep.subr.mxu0 0.0
    %1688 = vmatpush2.msra.mxu0 0.0
    %1689 = vmatprep.subr.mxu0 0.0
    %1690 = vmatpush2.msra.mxu0 0.0
    %1691 = vmatprep.subr.mxu0 0.0
    %1692 = vmatpush2.msra.mxu0 0.0
    %1693 = vmatprep.subr.mxu0 0.0
    %1694 = vmatpush2.msra.mxu0 0.0
    %1695 = vmatprep.subr.mxu0 0.0
    %1696 = vmatpush2.msra.mxu0 0.0
    %1697 = vmatprep.subr.mxu0 0.0
    %1698 = vmatpush2.msra.mxu0 0.0
    %1699 = vmatprep.subr.mxu0 0.0
    %1700 = vmatpush2.msra.mxu0 0.0
    %1701 = vmatprep.subr.mxu0 0.0
    %1702 = vmatpush2.msra.mxu0 0.0
    %1703 = vmatprep.subr.mxu0 0.0
    %1704 = vmatpush2.msra.mxu0 0.0
    %1705 = vmatprep.subr.mxu0 0.0
    %1706 = vmatpush2.msra.mxu0 0.0
    %1707 = vmatprep.subr.mxu0 0.0
    %1708 = vmatpush2.msra.mxu0 0.0
    %1709 = vmatprep.subr.mxu0 0.0
    %1710 = vmatpush2.msra.mxu0 0.0
    %1711 = vmatprep.subr.mxu0 0.0
    %1712 = vmatpush2.msra.mxu0 0.0
    %1713 = vmatprep.subr.mxu0 0.0
    %1714 = vmatpush2.msra.mxu0 0.0
    %1715 = vmatprep.mubr.f32.mxu0 0.0
    %1716 = vmatmul.mubr.f32.gmra.mxu0 %v1577
    %v1717 = vpop.f32.mrf.mxu0
    %v1718 = vadd.f32 0.0, %v1717
    %v1719 = vpop.f32.mrf.mxu0
    %v1720 = vadd.f32 0.0, %v1719
    %1721 = vdwg.mxu0
    %v1726 = vrot.slane %v1647, 2
    %v1727 = vrot.slane %v1649, 2
    %v1728 = vrot.slane %v1718, 2
    %v1729 = vrot.slane %v1720, 2
    %v1734 = vadd.f32 %v146, %v1726
    %v1735 = vadd.f32 %v148, %v1727
    %v1736 = vadd.f32 %v223, %v1728
    %v1737 = vadd.f32 %v225, %v1729
    %v1738 = vxor.u32 %v1734, 2147483648
    %v1739 = vmul.f32 %v1738, 1.442695
    %v1740 = vpow.pop %v1739
    %v1741 = vadd.f32 %v1740, 1.0
    %v1742 = vrcp.pop %v1741
    %v1743 = vmul.f32 1.0, %v1742
    %v1744 = vxor.u32 %v1735, 2147483648
    %v1745 = vmul.f32 %v1744, 1.442695
    %v1746 = vpow.pop %v1745
    %v1747 = vadd.f32 %v1746, 1.0
    %v1748 = vrcp.pop %v1747
    %v1749 = vmul.f32 1.0, %v1748
    %v1750 = vtanh.pop %v1736
    %v1751 = vxor.u32 %v1737, 2147483648
    %v1752 = vmul.f32 %v1751, 1.442695
    %v1753 = vpow.pop %v1752
    %v1754 = vadd.f32 %v1753, 1.0
    %v1755 = vrcp.pop %v1754
    %v1756 = vmul.f32 1.0, %v1755
    %v1758 = vrot.slane %v1573, 6
    %v1760 = vmul.f32 %v1749, %v1758
    %v1761 = vmul.f32 %v1743, %v1750
    %v1762 = vadd.f32 %v1760, %v1761
    %v1763 = vtanh.pop %v1762
    %v1764 = vmul.f32 %v1756, %v1763
    %v1766 = vrot.slane %v1764, 6
    %v1768 = vmax.f32 %v1579, %v1766
    %v1769 = vld [vmem:[#allocation2 + $0x540] sm:$0xff]
    %v1770 = vld [vmem:[#allocation2 + $0x548] sm:$0xff]
    %v1771 = vld [vmem:[#allocation2 + $0x560] sm:$0xff]
    %v1772 = vld [vmem:[#allocation2 + $0x568] sm:$0xff]
    %v1773 = vld [vmem:[#allocation2 + $0x580] sm:$0xff]
    %v1774 = vld [vmem:[#allocation2 + $0x588] sm:$0xff]
    %v1775 = vld [vmem:[#allocation2 + $0x5a0] sm:$0xff]
    %v1776 = vld [vmem:[#allocation2 + $0x5a8] sm:$0xff]
    %v1777 = vld [vmem:[#allocation2 + $0x5c0] sm:$0xff]
    %v1778 = vld [vmem:[#allocation2 + $0x5c8] sm:$0xff]
    %v1779 = vld [vmem:[#allocation2 + $0x5e0] sm:$0xff]
    %v1780 = vld [vmem:[#allocation2 + $0x5e8] sm:$0xff]
    %v1781 = vld [vmem:[#allocation2 + $0x600] sm:$0xff]
    %v1782 = vld [vmem:[#allocation2 + $0x608] sm:$0xff]
    %v1783 = vld [vmem:[#allocation2 + $0x620] sm:$0xff]
    %v1784 = vld [vmem:[#allocation2 + $0x628] sm:$0xff]
    %v1785 = vld [vmem:[#allocation2 + $0x640] sm:$0xff]
    %v1786 = vld [vmem:[#allocation2 + $0x648] sm:$0xff]
    %v1787 = vld [vmem:[#allocation2 + $0x660] sm:$0xff]
    %v1788 = vld [vmem:[#allocation2 + $0x668] sm:$0xff]
    %v1789 = vld [vmem:[#allocation2 + $0x680] sm:$0xff]
    %v1790 = vld [vmem:[#allocation2 + $0x688] sm:$0xff]
    %v1791 = vld [vmem:[#allocation2 + $0x6a0] sm:$0xff]
    %v1792 = vld [vmem:[#allocation2 + $0x6a8] sm:$0xff]
    %v1793 = vld [vmem:[#allocation2 + $0x6c0] sm:$0xff]
    %v1794 = vld [vmem:[#allocation2 + $0x6c8] sm:$0xff]
    %v1795 = vld [vmem:[#allocation2 + $0x6e0] sm:$0xff]
    %v1796 = vld [vmem:[#allocation2 + $0x6e8] sm:$0xff]
    %v1797 = vld [vmem:[#allocation2 + $0x700] sm:$0xff]
    %v1798 = vld [vmem:[#allocation2 + $0x708] sm:$0xff]
    %v1799 = vld [vmem:[#allocation2 + $0x720] sm:$0xff]
    %v1800 = vld [vmem:[#allocation2 + $0x728] sm:$0xff]
    %s1801 = scalar_lea.vmem [#allocation2], 1856
    %v1802 = vld [vmem:[%s1801] ss:$8 sm:$0xf]
    %v1804 = vlaneseq
    %v1805 = vshrl.u32 %v1804, 7
    %v1806 = vsub.s32 0, %v1805
    %v1807 = vrot.slane %v1802, %v1806
    %v1808 = vlaneseq
    %v1809 = vshrl.u32 %v1808, 7
    %v1810 = vsub.s32 1, %v1809
    %v1811 = vrot.slane %v1802, %v1810
    %1814 = vmatprep.subr.mxu0 %v1800
    %1815 = vmatpush1.msra.mxu0 %v1799
    %1816 = vmatprep.subr.mxu0 %v1798
    %1817 = vmatpush1.msra.mxu0 %v1797
    %1818 = vmatprep.subr.mxu0 %v1796
    %1819 = vmatpush1.msra.mxu0 %v1795
    %1820 = vmatprep.subr.mxu0 %v1794
    %1821 = vmatpush1.msra.mxu0 %v1793
    %1822 = vmatprep.subr.mxu0 %v1792
    %1823 = vmatpush1.msra.mxu0 %v1791
    %1824 = vmatprep.subr.mxu0 %v1790
    %1825 = vmatpush1.msra.mxu0 %v1789
    %1826 = vmatprep.subr.mxu0 %v1788
    %1827 = vmatpush1.msra.mxu0 %v1787
    %1828 = vmatprep.subr.mxu0 %v1786
    %1829 = vmatpush1.msra.mxu0 %v1785
    %1830 = vmatprep.subr.mxu0 %v1784
    %1831 = vmatpush1.msra.mxu0 %v1783
    %1832 = vmatprep.subr.mxu0 %v1782
    %1833 = vmatpush1.msra.mxu0 %v1781
    %1834 = vmatprep.subr.mxu0 %v1780
    %1835 = vmatpush1.msra.mxu0 %v1779
    %1836 = vmatprep.subr.mxu0 %v1778
    %1837 = vmatpush1.msra.mxu0 %v1777
    %1838 = vmatprep.subr.mxu0 %v1776
    %1839 = vmatpush1.msra.mxu0 %v1775
    %1840 = vmatprep.subr.mxu0 %v1774
    %1841 = vmatpush1.msra.mxu0 %v1773
    %1842 = vmatprep.subr.mxu0 %v1772
    %1843 = vmatpush1.msra.mxu0 %v1771
    %1844 = vmatprep.subr.mxu0 %v1770
    %1845 = vmatpush1.msra.mxu0 %v1769
    %1846 = vmatprep.subr.mxu0 0.0
    %1847 = vmatpush2.msra.mxu0 0.0
    %1848 = vmatprep.subr.mxu0 0.0
    %1849 = vmatpush2.msra.mxu0 0.0
    %1850 = vmatprep.subr.mxu0 0.0
    %1851 = vmatpush2.msra.mxu0 0.0
    %1852 = vmatprep.subr.mxu0 0.0
    %1853 = vmatpush2.msra.mxu0 0.0
    %1854 = vmatprep.subr.mxu0 0.0
    %1855 = vmatpush2.msra.mxu0 0.0
    %1856 = vmatprep.subr.mxu0 0.0
    %1857 = vmatpush2.msra.mxu0 0.0
    %1858 = vmatprep.subr.mxu0 0.0
    %1859 = vmatpush2.msra.mxu0 0.0
    %1860 = vmatprep.subr.mxu0 0.0
    %1861 = vmatpush2.msra.mxu0 0.0
    %1862 = vmatprep.subr.mxu0 0.0
    %1863 = vmatpush2.msra.mxu0 0.0
    %1864 = vmatprep.subr.mxu0 0.0
    %1865 = vmatpush2.msra.mxu0 0.0
    %1866 = vmatprep.subr.mxu0 0.0
    %1867 = vmatpush2.msra.mxu0 0.0
    %1868 = vmatprep.subr.mxu0 0.0
    %1869 = vmatpush2.msra.mxu0 0.0
    %1870 = vmatprep.subr.mxu0 0.0
    %1871 = vmatpush2.msra.mxu0 0.0
    %1872 = vmatprep.subr.mxu0 0.0
    %1873 = vmatpush2.msra.mxu0 0.0
    %1874 = vmatprep.subr.mxu0 0.0
    %1875 = vmatpush2.msra.mxu0 0.0
    %1876 = vmatprep.subr.mxu0 0.0
    %1877 = vmatpush2.msra.mxu0 0.0
    %1878 = vmatprep.mubr.f32.mxu0 0.0
    %1879 = vmatmul.mubr.f32.gmra.mxu0 %v1768
    %v1880 = vpop.f32.mrf.mxu0
    %v1881 = vadd.f32 %v1807, %v1880
    %v1882 = vpop.f32.mrf.mxu0
    %v1883 = vadd.f32 %v1811, %v1882
    %1884 = vdwg.mxu0
    %v1885 = vld [vmem:[#allocation2 + $0x2a0] sm:$0xff]
    %v1886 = vld [vmem:[#allocation2 + $0x2a8] sm:$0xff]
    %v1887 = vld [vmem:[#allocation2 + $0x2b0] sm:$0xff]
    %v1888 = vld [vmem:[#allocation2 + $0x2b8] sm:$0xff]
    %v1889 = vld [vmem:[#allocation2 + $0x2c0] sm:$0xff]
    %v1890 = vld [vmem:[#allocation2 + $0x2c8] sm:$0xff]
    %v1891 = vld [vmem:[#allocation2 + $0x2d0] sm:$0xff]
    %v1892 = vld [vmem:[#allocation2 + $0x2d8] sm:$0xff]
    %v1893 = vld [vmem:[#allocation2 + $0x2e0] sm:$0xff]
    %v1894 = vld [vmem:[#allocation2 + $0x2e8] sm:$0xff]
    %v1895 = vld [vmem:[#allocation2 + $0x2f0] sm:$0xff]
    %v1896 = vld [vmem:[#allocation2 + $0x2f8] sm:$0xff]
    %v1897 = vld [vmem:[#allocation2 + $0x300] sm:$0xff]
    %v1898 = vld [vmem:[#allocation2 + $0x308] sm:$0xff]
    %v1899 = vld [vmem:[#allocation2 + $0x310] sm:$0xff]
    %v1900 = vld [vmem:[#allocation2 + $0x318] sm:$0xff]
    %s1901 = scalar_lea.vmem [#allocation2], 800
    %v1902 = vld [vmem:[%s1901] ss:$8 sm:$0xf]
    %v1903 = vld [vmem:[%s0 + $0x10] sm:$0xff]
    %v1904 = vld [vmem:[%s0 + $0x18] sm:$0xff]
    %v1906 = vlaneseq
    %v1907 = vshrl.u32 %v1906, 7
    %v1908 = vsub.s32 0, %v1907
    %v1909 = vrot.slane %v1902, %v1908
    %v1910 = vlaneseq
    %v1911 = vshrl.u32 %v1910, 7
    %v1912 = vsub.s32 1, %v1911
    %v1913 = vrot.slane %v1902, %v1912
    %v1914 = vlaneseq
    %v1915 = vshrl.u32 %v1914, 7
    %v1916 = vsub.s32 2, %v1915
    %v1917 = vrot.slane %v1902, %v1916
    %v1918 = vlaneseq
    %v1919 = vshrl.u32 %v1918, 7
    %v1920 = vsub.s32 3, %v1919
    %v1921 = vrot.slane %v1902, %v1920
    %v1927 = vsel %vm66, %v1903, 0
    %v1930 = vsel %vm66, %v1904, 0
    %1932 = vmatprep.subr.mxu0 0.0
    %1933 = vmatpush1.msra.mxu0 0.0
    %1934 = vmatprep.subr.mxu0 0.0
    %1935 = vmatpush1.msra.mxu0 0.0
    %1936 = vmatprep.subr.mxu0 0.0
    %1937 = vmatpush1.msra.mxu0 0.0
    %1938 = vmatprep.subr.mxu0 0.0
    %1939 = vmatpush1.msra.mxu0 0.0
    %1940 = vmatprep.subr.mxu0 0.0
    %1941 = vmatpush1.msra.mxu0 0.0
    %1942 = vmatprep.subr.mxu0 0.0
    %1943 = vmatpush1.msra.mxu0 0.0
    %1944 = vmatprep.subr.mxu0 0.0
    %1945 = vmatpush1.msra.mxu0 0.0
    %1946 = vmatprep.subr.mxu0 0.0
    %1947 = vmatpush1.msra.mxu0 0.0
    %1948 = vmatprep.subr.mxu0 0.0
    %1949 = vmatpush1.msra.mxu0 0.0
    %1950 = vmatprep.subr.mxu0 0.0
    %1951 = vmatpush1.msra.mxu0 0.0
    %1952 = vmatprep.subr.mxu0 0.0
    %1953 = vmatpush1.msra.mxu0 0.0
    %1954 = vmatprep.subr.mxu0 0.0
    %1955 = vmatpush1.msra.mxu0 0.0
    %1956 = vmatprep.subr.mxu0 %v1898
    %1957 = vmatpush1.msra.mxu0 %v1897
    %1958 = vmatprep.subr.mxu0 %v1894
    %1959 = vmatpush1.msra.mxu0 %v1893
    %1960 = vmatprep.subr.mxu0 %v1890
    %1961 = vmatpush1.msra.mxu0 %v1889
    %1962 = vmatprep.subr.mxu0 %v1886
    %1963 = vmatpush1.msra.mxu0 %v1885
    %1964 = vmatprep.subr.mxu0 0.0
    %1965 = vmatpush2.msra.mxu0 0.0
    %1966 = vmatprep.subr.mxu0 0.0
    %1967 = vmatpush2.msra.mxu0 0.0
    %1968 = vmatprep.subr.mxu0 0.0
    %1969 = vmatpush2.msra.mxu0 0.0
    %1970 = vmatprep.subr.mxu0 0.0
    %1971 = vmatpush2.msra.mxu0 0.0
    %1972 = vmatprep.subr.mxu0 0.0
    %1973 = vmatpush2.msra.mxu0 0.0
    %1974 = vmatprep.subr.mxu0 0.0
    %1975 = vmatpush2.msra.mxu0 0.0
    %1976 = vmatprep.subr.mxu0 0.0
    %1977 = vmatpush2.msra.mxu0 0.0
    %1978 = vmatprep.subr.mxu0 0.0
    %1979 = vmatpush2.msra.mxu0 0.0
    %1980 = vmatprep.subr.mxu0 0.0
    %1981 = vmatpush2.msra.mxu0 0.0
    %1982 = vmatprep.subr.mxu0 0.0
    %1983 = vmatpush2.msra.mxu0 0.0
    %1984 = vmatprep.subr.mxu0 0.0
    %1985 = vmatpush2.msra.mxu0 0.0
    %1986 = vmatprep.subr.mxu0 0.0
    %1987 = vmatpush2.msra.mxu0 0.0
    %1988 = vmatprep.subr.mxu0 0.0
    %1989 = vmatpush2.msra.mxu0 0.0
    %1990 = vmatprep.subr.mxu0 0.0
    %1991 = vmatpush2.msra.mxu0 0.0
    %1992 = vmatprep.subr.mxu0 0.0
    %1993 = vmatpush2.msra.mxu0 0.0
    %1994 = vmatprep.subr.mxu0 0.0
    %1995 = vmatpush2.msra.mxu0 0.0
    %1996 = vmatprep.mubr.f32.mxu0 0.0
    %1997 = vmatmul.mubr.f32.gmra.mxu0 %v1927
    %v1998 = vpop.f32.mrf.mxu0
    %v1999 = vadd.f32 %v1909, %v1998
    %v2000 = vpop.f32.mrf.mxu0
    %v2001 = vadd.f32 %v1913, %v2000
    %2002 = vmatprep.mubr.f32.mxu0 0.0
    %2003 = vmatmul.mubr.f32.gmra.mxu0 %v1930
    %v2004 = vpop.f32.mrf.mxu0
    %v2005 = vadd.f32 %v1909, %v2004
    %v2006 = vpop.f32.mrf.mxu0
    %v2007 = vadd.f32 %v1913, %v2006
    %2008 = vdwg.mxu0
    %2009 = vmatprep.subr.mxu0 0.0
    %2010 = vmatpush1.msra.mxu0 0.0
    %2011 = vmatprep.subr.mxu0 0.0
    %2012 = vmatpush1.msra.mxu0 0.0
    %2013 = vmatprep.subr.mxu0 0.0
    %2014 = vmatpush1.msra.mxu0 0.0
    %2015 = vmatprep.subr.mxu0 0.0
    %2016 = vmatpush1.msra.mxu0 0.0
    %2017 = vmatprep.subr.mxu0 0.0
    %2018 = vmatpush1.msra.mxu0 0.0
    %2019 = vmatprep.subr.mxu0 0.0
    %2020 = vmatpush1.msra.mxu0 0.0
    %2021 = vmatprep.subr.mxu0 0.0
    %2022 = vmatpush1.msra.mxu0 0.0
    %2023 = vmatprep.subr.mxu0 0.0
    %2024 = vmatpush1.msra.mxu0 0.0
    %2025 = vmatprep.subr.mxu0 0.0
    %2026 = vmatpush1.msra.mxu0 0.0
    %2027 = vmatprep.subr.mxu0 0.0
    %2028 = vmatpush1.msra.mxu0 0.0
    %2029 = vmatprep.subr.mxu0 0.0
    %2030 = vmatpush1.msra.mxu0 0.0
    %2031 = vmatprep.subr.mxu0 0.0
    %2032 = vmatpush1.msra.mxu0 0.0
    %2033 = vmatprep.subr.mxu0 %v1900
    %2034 = vmatpush1.msra.mxu0 %v1899
    %2035 = vmatprep.subr.mxu0 %v1896
    %2036 = vmatpush1.msra.mxu0 %v1895
    %2037 = vmatprep.subr.mxu0 %v1892
    %2038 = vmatpush1.msra.mxu0 %v1891
    %2039 = vmatprep.subr.mxu0 %v1888
    %2040 = vmatpush1.msra.mxu0 %v1887
    %2041 = vmatprep.subr.mxu0 0.0
    %2042 = vmatpush2.msra.mxu0 0.0
    %2043 = vmatprep.subr.mxu0 0.0
    %2044 = vmatpush2.msra.mxu0 0.0
    %2045 = vmatprep.subr.mxu0 0.0
    %2046 = vmatpush2.msra.mxu0 0.0
    %2047 = vmatprep.subr.mxu0 0.0
    %2048 = vmatpush2.msra.mxu0 0.0
    %2049 = vmatprep.subr.mxu0 0.0
    %2050 = vmatpush2.msra.mxu0 0.0
    %2051 = vmatprep.subr.mxu0 0.0
    %2052 = vmatpush2.msra.mxu0 0.0
    %2053 = vmatprep.subr.mxu0 0.0
    %2054 = vmatpush2.msra.mxu0 0.0
    %2055 = vmatprep.subr.mxu0 0.0
    %2056 = vmatpush2.msra.mxu0 0.0
    %2057 = vmatprep.subr.mxu0 0.0
    %2058 = vmatpush2.msra.mxu0 0.0
    %2059 = vmatprep.subr.mxu0 0.0
    %2060 = vmatpush2.msra.mxu0 0.0
    %2061 = vmatprep.subr.mxu0 0.0
    %2062 = vmatpush2.msra.mxu0 0.0
    %2063 = vmatprep.subr.mxu0 0.0
    %2064 = vmatpush2.msra.mxu0 0.0
    %2065 = vmatprep.subr.mxu0 0.0
    %2066 = vmatpush2.msra.mxu0 0.0
    %2067 = vmatprep.subr.mxu0 0.0
    %2068 = vmatpush2.msra.mxu0 0.0
    %2069 = vmatprep.subr.mxu0 0.0
    %2070 = vmatpush2.msra.mxu0 0.0
    %2071 = vmatprep.subr.mxu0 0.0
    %2072 = vmatpush2.msra.mxu0 0.0
    %2073 = vmatprep.mubr.f32.mxu0 0.0
    %2074 = vmatmul.mubr.f32.gmra.mxu0 %v1927
    %v2075 = vpop.f32.mrf.mxu0
    %v2076 = vadd.f32 %v1917, %v2075
    %v2077 = vpop.f32.mrf.mxu0
    %v2078 = vadd.f32 %v1921, %v2077
    %2079 = vmatprep.mubr.f32.mxu0 0.0
    %2080 = vmatmul.mubr.f32.gmra.mxu0 %v1930
    %v2081 = vpop.f32.mrf.mxu0
    %v2082 = vadd.f32 %v1917, %v2081
    %v2083 = vpop.f32.mrf.mxu0
    %v2084 = vadd.f32 %v1921, %v2083
    %2085 = vdwg.mxu0
    %v2086 = vld [vmem:[#allocation2 + $0x340] sm:$0xff]
    %v2087 = vld [vmem:[#allocation2 + $0x348] sm:$0xff]
    %v2088 = vld [vmem:[#allocation2 + $0x350] sm:$0xff]
    %v2089 = vld [vmem:[#allocation2 + $0x358] sm:$0xff]
    %v2090 = vld [vmem:[#allocation2 + $0x360] sm:$0xff]
    %v2091 = vld [vmem:[#allocation2 + $0x368] sm:$0xff]
    %v2092 = vld [vmem:[#allocation2 + $0x370] sm:$0xff]
    %v2093 = vld [vmem:[#allocation2 + $0x378] sm:$0xff]
    %v2094 = vld [vmem:[#allocation2 + $0x380] sm:$0xff]
    %v2095 = vld [vmem:[#allocation2 + $0x388] sm:$0xff]
    %v2096 = vld [vmem:[#allocation2 + $0x390] sm:$0xff]
    %v2097 = vld [vmem:[#allocation2 + $0x398] sm:$0xff]
    %v2098 = vld [vmem:[#allocation2 + $0x3a0] sm:$0xff]
    %v2099 = vld [vmem:[#allocation2 + $0x3a8] sm:$0xff]
    %v2100 = vld [vmem:[#allocation2 + $0x3b0] sm:$0xff]
    %v2101 = vld [vmem:[#allocation2 + $0x3b8] sm:$0xff]
    %v2102 = vld [vmem:[#allocation2 + $0x3c0] sm:$0xff]
    %v2103 = vld [vmem:[#allocation2 + $0x3c8] sm:$0xff]
    %v2104 = vld [vmem:[#allocation2 + $0x3d0] sm:$0xff]
    %v2105 = vld [vmem:[#allocation2 + $0x3d8] sm:$0xff]
    %v2106 = vld [vmem:[#allocation2 + $0x3e0] sm:$0xff]
    %v2107 = vld [vmem:[#allocation2 + $0x3e8] sm:$0xff]
    %v2108 = vld [vmem:[#allocation2 + $0x3f0] sm:$0xff]
    %v2109 = vld [vmem:[#allocation2 + $0x3f8] sm:$0xff]
    %v2110 = vld [vmem:[#allocation2 + $0x400] sm:$0xff]
    %v2111 = vld [vmem:[#allocation2 + $0x408] sm:$0xff]
    %v2112 = vld [vmem:[#allocation2 + $0x410] sm:$0xff]
    %v2113 = vld [vmem:[#allocation2 + $0x418] sm:$0xff]
    %v2114 = vld [vmem:[#allocation2 + $0x420] sm:$0xff]
    %v2115 = vld [vmem:[#allocation2 + $0x428] sm:$0xff]
    %v2116 = vld [vmem:[#allocation2 + $0x430] sm:$0xff]
    %v2117 = vld [vmem:[#allocation2 + $0x438] sm:$0xff]
    %v2118 = vld [vmem:[#allocation2 + $0x440] sm:$0xff]
    %v2119 = vld [vmem:[#allocation2 + $0x448] sm:$0xff]
    %v2120 = vld [vmem:[#allocation2 + $0x450] sm:$0xff]
    %v2121 = vld [vmem:[#allocation2 + $0x458] sm:$0xff]
    %v2122 = vld [vmem:[#allocation2 + $0x460] sm:$0xff]
    %v2123 = vld [vmem:[#allocation2 + $0x468] sm:$0xff]
    %v2124 = vld [vmem:[#allocation2 + $0x470] sm:$0xff]
    %v2125 = vld [vmem:[#allocation2 + $0x478] sm:$0xff]
    %v2126 = vld [vmem:[#allocation2 + $0x480] sm:$0xff]
    %v2127 = vld [vmem:[#allocation2 + $0x488] sm:$0xff]
    %v2128 = vld [vmem:[#allocation2 + $0x490] sm:$0xff]
    %v2129 = vld [vmem:[#allocation2 + $0x498] sm:$0xff]
    %v2130 = vld [vmem:[#allocation2 + $0x4a0] sm:$0xff]
    %v2131 = vld [vmem:[#allocation2 + $0x4a8] sm:$0xff]
    %v2132 = vld [vmem:[#allocation2 + $0x4b0] sm:$0xff]
    %v2133 = vld [vmem:[#allocation2 + $0x4b8] sm:$0xff]
    %v2134 = vld [vmem:[#allocation2 + $0x4c0] sm:$0xff]
    %v2135 = vld [vmem:[#allocation2 + $0x4c8] sm:$0xff]
    %v2136 = vld [vmem:[#allocation2 + $0x4d0] sm:$0xff]
    %v2137 = vld [vmem:[#allocation2 + $0x4d8] sm:$0xff]
    %v2138 = vld [vmem:[#allocation2 + $0x4e0] sm:$0xff]
    %v2139 = vld [vmem:[#allocation2 + $0x4e8] sm:$0xff]
    %v2140 = vld [vmem:[#allocation2 + $0x4f0] sm:$0xff]
    %v2141 = vld [vmem:[#allocation2 + $0x4f8] sm:$0xff]
    %v2142 = vld [vmem:[#allocation2 + $0x500] sm:$0xff]
    %v2143 = vld [vmem:[#allocation2 + $0x508] sm:$0xff]
    %v2144 = vld [vmem:[#allocation2 + $0x510] sm:$0xff]
    %v2145 = vld [vmem:[#allocation2 + $0x518] sm:$0xff]
    %v2146 = vld [vmem:[#allocation2 + $0x520] sm:$0xff]
    %v2147 = vld [vmem:[#allocation2 + $0x528] sm:$0xff]
    %v2148 = vld [vmem:[#allocation2 + $0x530] sm:$0xff]
    %v2149 = vld [vmem:[#allocation2 + $0x538] sm:$0xff]
    %2150 = vmatprep.subr.mxu0 %v2147
    %2151 = vmatpush1.msra.mxu0 %v2146
    %2152 = vmatprep.subr.mxu0 %v2143
    %2153 = vmatpush1.msra.mxu0 %v2142
    %2154 = vmatprep.subr.mxu0 %v2139
    %2155 = vmatpush1.msra.mxu0 %v2138
    %2156 = vmatprep.subr.mxu0 %v2135
    %2157 = vmatpush1.msra.mxu0 %v2134
    %2158 = vmatprep.subr.mxu0 %v2131
    %2159 = vmatpush1.msra.mxu0 %v2130
    %2160 = vmatprep.subr.mxu0 %v2127
    %2161 = vmatpush1.msra.mxu0 %v2126
    %2162 = vmatprep.subr.mxu0 %v2123
    %2163 = vmatpush1.msra.mxu0 %v2122
    %2164 = vmatprep.subr.mxu0 %v2119
    %2165 = vmatpush1.msra.mxu0 %v2118
    %2166 = vmatprep.subr.mxu0 %v2115
    %2167 = vmatpush1.msra.mxu0 %v2114
    %2168 = vmatprep.subr.mxu0 %v2111
    %2169 = vmatpush1.msra.mxu0 %v2110
    %2170 = vmatprep.subr.mxu0 %v2107
    %2171 = vmatpush1.msra.mxu0 %v2106
    %2172 = vmatprep.subr.mxu0 %v2103
    %2173 = vmatpush1.msra.mxu0 %v2102
    %2174 = vmatprep.subr.mxu0 %v2099
    %2175 = vmatpush1.msra.mxu0 %v2098
    %2176 = vmatprep.subr.mxu0 %v2095
    %2177 = vmatpush1.msra.mxu0 %v2094
    %2178 = vmatprep.subr.mxu0 %v2091
    %2179 = vmatpush1.msra.mxu0 %v2090
    %2180 = vmatprep.subr.mxu0 %v2087
    %2181 = vmatpush1.msra.mxu0 %v2086
    %2182 = vmatprep.subr.mxu0 0.0
    %2183 = vmatpush2.msra.mxu0 0.0
    %2184 = vmatprep.subr.mxu0 0.0
    %2185 = vmatpush2.msra.mxu0 0.0
    %2186 = vmatprep.subr.mxu0 0.0
    %2187 = vmatpush2.msra.mxu0 0.0
    %2188 = vmatprep.subr.mxu0 0.0
    %2189 = vmatpush2.msra.mxu0 0.0
    %2190 = vmatprep.subr.mxu0 0.0
    %2191 = vmatpush2.msra.mxu0 0.0
    %2192 = vmatprep.subr.mxu0 0.0
    %2193 = vmatpush2.msra.mxu0 0.0
    %2194 = vmatprep.subr.mxu0 0.0
    %2195 = vmatpush2.msra.mxu0 0.0
    %2196 = vmatprep.subr.mxu0 0.0
    %2197 = vmatpush2.msra.mxu0 0.0
    %2198 = vmatprep.subr.mxu0 0.0
    %2199 = vmatpush2.msra.mxu0 0.0
    %2200 = vmatprep.subr.mxu0 0.0
    %2201 = vmatpush2.msra.mxu0 0.0
    %2202 = vmatprep.subr.mxu0 0.0
    %2203 = vmatpush2.msra.mxu0 0.0
    %2204 = vmatprep.subr.mxu0 0.0
    %2205 = vmatpush2.msra.mxu0 0.0
    %2206 = vmatprep.subr.mxu0 0.0
    %2207 = vmatpush2.msra.mxu0 0.0
    %2208 = vmatprep.subr.mxu0 0.0
    %2209 = vmatpush2.msra.mxu0 0.0
    %2210 = vmatprep.subr.mxu0 0.0
    %2211 = vmatpush2.msra.mxu0 0.0
    %2212 = vmatprep.subr.mxu0 0.0
    %2213 = vmatpush2.msra.mxu0 0.0
    %2214 = vmatprep.mubr.f32.mxu0 0.0
    %2215 = vmatmul.mubr.f32.gmra.mxu0 %v1881
    %v2216 = vpop.f32.mrf.mxu0
    %v2217 = vadd.f32 0.0, %v2216
    %v2218 = vpop.f32.mrf.mxu0
    %v2219 = vadd.f32 0.0, %v2218
    %2220 = vdwg.mxu0
    %2221 = vmatprep.subr.mxu0 %v2149
    %2222 = vmatpush1.msra.mxu0 %v2148
    %2223 = vmatprep.subr.mxu0 %v2145
    %2224 = vmatpush1.msra.mxu0 %v2144
    %2225 = vmatprep.subr.mxu0 %v2141
    %2226 = vmatpush1.msra.mxu0 %v2140
    %2227 = vmatprep.subr.mxu0 %v2137
    %2228 = vmatpush1.msra.mxu0 %v2136
    %2229 = vmatprep.subr.mxu0 %v2133
    %2230 = vmatpush1.msra.mxu0 %v2132
    %2231 = vmatprep.subr.mxu0 %v2129
    %2232 = vmatpush1.msra.mxu0 %v2128
    %2233 = vmatprep.subr.mxu0 %v2125
    %2234 = vmatpush1.msra.mxu0 %v2124
    %2235 = vmatprep.subr.mxu0 %v2121
    %2236 = vmatpush1.msra.mxu0 %v2120
    %2237 = vmatprep.subr.mxu0 %v2117
    %2238 = vmatpush1.msra.mxu0 %v2116
    %2239 = vmatprep.subr.mxu0 %v2113
    %2240 = vmatpush1.msra.mxu0 %v2112
    %2241 = vmatprep.subr.mxu0 %v2109
    %2242 = vmatpush1.msra.mxu0 %v2108
    %2243 = vmatprep.subr.mxu0 %v2105
    %2244 = vmatpush1.msra.mxu0 %v2104
    %2245 = vmatprep.subr.mxu0 %v2101
    %2246 = vmatpush1.msra.mxu0 %v2100
    %2247 = vmatprep.subr.mxu0 %v2097
    %2248 = vmatpush1.msra.mxu0 %v2096
    %2249 = vmatprep.subr.mxu0 %v2093
    %2250 = vmatpush1.msra.mxu0 %v2092
    %2251 = vmatprep.subr.mxu0 %v2089
    %2252 = vmatpush1.msra.mxu0 %v2088
    %2253 = vmatprep.subr.mxu0 0.0
    %2254 = vmatpush2.msra.mxu0 0.0
    %2255 = vmatprep.subr.mxu0 0.0
    %2256 = vmatpush2.msra.mxu0 0.0
    %2257 = vmatprep.subr.mxu0 0.0
    %2258 = vmatpush2.msra.mxu0 0.0
    %2259 = vmatprep.subr.mxu0 0.0
    %2260 = vmatpush2.msra.mxu0 0.0
    %2261 = vmatprep.subr.mxu0 0.0
    %2262 = vmatpush2.msra.mxu0 0.0
    %2263 = vmatprep.subr.mxu0 0.0
    %2264 = vmatpush2.msra.mxu0 0.0
    %2265 = vmatprep.subr.mxu0 0.0
    %2266 = vmatpush2.msra.mxu0 0.0
    %2267 = vmatprep.subr.mxu0 0.0
    %2268 = vmatpush2.msra.mxu0 0.0
    %2269 = vmatprep.subr.mxu0 0.0
    %2270 = vmatpush2.msra.mxu0 0.0
    %2271 = vmatprep.subr.mxu0 0.0
    %2272 = vmatpush2.msra.mxu0 0.0
    %2273 = vmatprep.subr.mxu0 0.0
    %2274 = vmatpush2.msra.mxu0 0.0
    %2275 = vmatprep.subr.mxu0 0.0
    %2276 = vmatpush2.msra.mxu0 0.0
    %2277 = vmatprep.subr.mxu0 0.0
    %2278 = vmatpush2.msra.mxu0 0.0
    %2279 = vmatprep.subr.mxu0 0.0
    %2280 = vmatpush2.msra.mxu0 0.0
    %2281 = vmatprep.subr.mxu0 0.0
    %2282 = vmatpush2.msra.mxu0 0.0
    %2283 = vmatprep.subr.mxu0 0.0
    %2284 = vmatpush2.msra.mxu0 0.0
    %2285 = vmatprep.mubr.f32.mxu0 0.0
    %2286 = vmatmul.mubr.f32.gmra.mxu0 %v1881
    %v2287 = vpop.f32.mrf.mxu0
    %v2288 = vadd.f32 0.0, %v2287
    %v2289 = vpop.f32.mrf.mxu0
    %v2290 = vadd.f32 0.0, %v2289
    %2291 = vdwg.mxu0
    %v2292 = vadd.f32 %v1999, %v2217
    %v2293 = vadd.f32 %v2001, %v2219
    %v2294 = vadd.f32 %v2076, %v2288
    %v2295 = vadd.f32 %v2078, %v2290
    %v2296 = vxor.u32 %v2292, 2147483648
    %v2297 = vmul.f32 %v2296, 1.442695
    %v2298 = vpow.pop %v2297
    %v2299 = vadd.f32 %v2298, 1.0
    %v2300 = vrcp.pop %v2299
    %v2301 = vmul.f32 1.0, %v2300
    %v2302 = vxor.u32 %v2293, 2147483648
    %v2303 = vmul.f32 %v2302, 1.442695
    %v2304 = vpow.pop %v2303
    %v2305 = vadd.f32 %v2304, 1.0
    %v2306 = vrcp.pop %v2305
    %v2307 = vmul.f32 1.0, %v2306
    %v2308 = vtanh.pop %v2294
    %v2309 = vxor.u32 %v2295, 2147483648
    %v2310 = vmul.f32 %v2309, 1.442695
    %v2311 = vpow.pop %v2310
    %v2312 = vadd.f32 %v2311, 1.0
    %v2313 = vrcp.pop %v2312
    %v2314 = vmul.f32 1.0, %v2313
    %v2315 = vmul.f32 %v2307, %v1883
    %v2316 = vmul.f32 %v2301, %v2308
    %v2317 = vadd.f32 %v2315, %v2316
    %v2318 = vtanh.pop %v2317
    %v2319 = vmul.f32 %v2314, %v2318
    %2320 = vmatprep.subr.mxu0 %v2147
    %2321 = vmatpush1.msra.mxu0 %v2146
    %2322 = vmatprep.subr.mxu0 %v2143
    %2323 = vmatpush1.msra.mxu0 %v2142
    %2324 = vmatprep.subr.mxu0 %v2139
    %2325 = vmatpush1.msra.mxu0 %v2138
    %2326 = vmatprep.subr.mxu0 %v2135
    %2327 = vmatpush1.msra.mxu0 %v2134
    %2328 = vmatprep.subr.mxu0 %v2131
    %2329 = vmatpush1.msra.mxu0 %v2130
    %2330 = vmatprep.subr.mxu0 %v2127
    %2331 = vmatpush1.msra.mxu0 %v2126
    %2332 = vmatprep.subr.mxu0 %v2123
    %2333 = vmatpush1.msra.mxu0 %v2122
    %2334 = vmatprep.subr.mxu0 %v2119
    %2335 = vmatpush1.msra.mxu0 %v2118
    %2336 = vmatprep.subr.mxu0 %v2115
    %2337 = vmatpush1.msra.mxu0 %v2114
    %2338 = vmatprep.subr.mxu0 %v2111
    %2339 = vmatpush1.msra.mxu0 %v2110
    %2340 = vmatprep.subr.mxu0 %v2107
    %2341 = vmatpush1.msra.mxu0 %v2106
    %2342 = vmatprep.subr.mxu0 %v2103
    %2343 = vmatpush1.msra.mxu0 %v2102
    %2344 = vmatprep.subr.mxu0 %v2099
    %2345 = vmatpush1.msra.mxu0 %v2098
    %2346 = vmatprep.subr.mxu0 %v2095
    %2347 = vmatpush1.msra.mxu0 %v2094
    %2348 = vmatprep.subr.mxu0 %v2091
    %2349 = vmatpush1.msra.mxu0 %v2090
    %2350 = vmatprep.subr.mxu0 %v2087
    %2351 = vmatpush1.msra.mxu0 %v2086
    %2352 = vmatprep.subr.mxu0 0.0
    %2353 = vmatpush2.msra.mxu0 0.0
    %2354 = vmatprep.subr.mxu0 0.0
    %2355 = vmatpush2.msra.mxu0 0.0
    %2356 = vmatprep.subr.mxu0 0.0
    %2357 = vmatpush2.msra.mxu0 0.0
    %2358 = vmatprep.subr.mxu0 0.0
    %2359 = vmatpush2.msra.mxu0 0.0
    %2360 = vmatprep.subr.mxu0 0.0
    %2361 = vmatpush2.msra.mxu0 0.0
    %2362 = vmatprep.subr.mxu0 0.0
    %2363 = vmatpush2.msra.mxu0 0.0
    %2364 = vmatprep.subr.mxu0 0.0
    %2365 = vmatpush2.msra.mxu0 0.0
    %2366 = vmatprep.subr.mxu0 0.0
    %2367 = vmatpush2.msra.mxu0 0.0
    %2368 = vmatprep.subr.mxu0 0.0
    %2369 = vmatpush2.msra.mxu0 0.0
    %2370 = vmatprep.subr.mxu0 0.0
    %2371 = vmatpush2.msra.mxu0 0.0
    %2372 = vmatprep.subr.mxu0 0.0
    %2373 = vmatpush2.msra.mxu0 0.0
    %2374 = vmatprep.subr.mxu0 0.0
    %2375 = vmatpush2.msra.mxu0 0.0
    %2376 = vmatprep.subr.mxu0 0.0
    %2377 = vmatpush2.msra.mxu0 0.0
    %2378 = vmatprep.subr.mxu0 0.0
    %2379 = vmatpush2.msra.mxu0 0.0
    %2380 = vmatprep.subr.mxu0 0.0
    %2381 = vmatpush2.msra.mxu0 0.0
    %2382 = vmatprep.subr.mxu0 0.0
    %2383 = vmatpush2.msra.mxu0 0.0
    %2384 = vmatprep.mubr.f32.mxu0 0.0
    %2385 = vmatmul.mubr.f32.gmra.mxu0 %v2319
    %v2386 = vpop.f32.mrf.mxu0
    %v2387 = vadd.f32 0.0, %v2386
    %v2388 = vpop.f32.mrf.mxu0
    %v2389 = vadd.f32 0.0, %v2388
    %2390 = vdwg.mxu0
    %2391 = vmatprep.subr.mxu0 %v2149
    %2392 = vmatpush1.msra.mxu0 %v2148
    %2393 = vmatprep.subr.mxu0 %v2145
    %2394 = vmatpush1.msra.mxu0 %v2144
    %2395 = vmatprep.subr.mxu0 %v2141
    %2396 = vmatpush1.msra.mxu0 %v2140
    %2397 = vmatprep.subr.mxu0 %v2137
    %2398 = vmatpush1.msra.mxu0 %v2136
    %2399 = vmatprep.subr.mxu0 %v2133
    %2400 = vmatpush1.msra.mxu0 %v2132
    %2401 = vmatprep.subr.mxu0 %v2129
    %2402 = vmatpush1.msra.mxu0 %v2128
    %2403 = vmatprep.subr.mxu0 %v2125
    %2404 = vmatpush1.msra.mxu0 %v2124
    %2405 = vmatprep.subr.mxu0 %v2121
    %2406 = vmatpush1.msra.mxu0 %v2120
    %2407 = vmatprep.subr.mxu0 %v2117
    %2408 = vmatpush1.msra.mxu0 %v2116
    %2409 = vmatprep.subr.mxu0 %v2113
    %2410 = vmatpush1.msra.mxu0 %v2112
    %2411 = vmatprep.subr.mxu0 %v2109
    %2412 = vmatpush1.msra.mxu0 %v2108
    %2413 = vmatprep.subr.mxu0 %v2105
    %2414 = vmatpush1.msra.mxu0 %v2104
    %2415 = vmatprep.subr.mxu0 %v2101
    %2416 = vmatpush1.msra.mxu0 %v2100
    %2417 = vmatprep.subr.mxu0 %v2097
    %2418 = vmatpush1.msra.mxu0 %v2096
    %2419 = vmatprep.subr.mxu0 %v2093
    %2420 = vmatpush1.msra.mxu0 %v2092
    %2421 = vmatprep.subr.mxu0 %v2089
    %2422 = vmatpush1.msra.mxu0 %v2088
    %2423 = vmatprep.subr.mxu0 0.0
    %2424 = vmatpush2.msra.mxu0 0.0
    %2425 = vmatprep.subr.mxu0 0.0
    %2426 = vmatpush2.msra.mxu0 0.0
    %2427 = vmatprep.subr.mxu0 0.0
    %2428 = vmatpush2.msra.mxu0 0.0
    %2429 = vmatprep.subr.mxu0 0.0
    %2430 = vmatpush2.msra.mxu0 0.0
    %2431 = vmatprep.subr.mxu0 0.0
    %2432 = vmatpush2.msra.mxu0 0.0
    %2433 = vmatprep.subr.mxu0 0.0
    %2434 = vmatpush2.msra.mxu0 0.0
    %2435 = vmatprep.subr.mxu0 0.0
    %2436 = vmatpush2.msra.mxu0 0.0
    %2437 = vmatprep.subr.mxu0 0.0
    %2438 = vmatpush2.msra.mxu0 0.0
    %2439 = vmatprep.subr.mxu0 0.0
    %2440 = vmatpush2.msra.mxu0 0.0
    %2441 = vmatprep.subr.mxu0 0.0
    %2442 = vmatpush2.msra.mxu0 0.0
    %2443 = vmatprep.subr.mxu0 0.0
    %2444 = vmatpush2.msra.mxu0 0.0
    %2445 = vmatprep.subr.mxu0 0.0
    %2446 = vmatpush2.msra.mxu0 0.0
    %2447 = vmatprep.subr.mxu0 0.0
    %2448 = vmatpush2.msra.mxu0 0.0
    %2449 = vmatprep.subr.mxu0 0.0
    %2450 = vmatpush2.msra.mxu0 0.0
    %2451 = vmatprep.subr.mxu0 0.0
    %2452 = vmatpush2.msra.mxu0 0.0
    %2453 = vmatprep.subr.mxu0 0.0
    %2454 = vmatpush2.msra.mxu0 0.0
    %2455 = vmatprep.mubr.f32.mxu0 0.0
    %2456 = vmatmul.mubr.f32.gmra.mxu0 %v2319
    %v2457 = vpop.f32.mrf.mxu0
    %v2458 = vadd.f32 0.0, %v2457
    %v2459 = vpop.f32.mrf.mxu0
    %v2460 = vadd.f32 0.0, %v2459
    %2461 = vdwg.mxu0
    %v2466 = vrot.slane %v2387, 6
    %v2467 = vrot.slane %v2389, 6
    %v2468 = vrot.slane %v2458, 6
    %v2469 = vrot.slane %v2460, 6
    %v2474 = vadd.f32 %v1999, %v2466
    %v2475 = vadd.f32 %v2001, %v2467
    %v2476 = vadd.f32 %v2076, %v2468
    %v2477 = vadd.f32 %v2078, %v2469
    %v2478 = vxor.u32 %v2474, 2147483648
    %v2479 = vmul.f32 %v2478, 1.442695
    %v2480 = vpow.pop %v2479
    %v2481 = vadd.f32 %v2480, 1.0
    %v2482 = vrcp.pop %v2481
    %v2483 = vmul.f32 1.0, %v2482
    %v2484 = vxor.u32 %v2475, 2147483648
    %v2485 = vmul.f32 %v2484, 1.442695
    %v2486 = vpow.pop %v2485
    %v2487 = vadd.f32 %v2486, 1.0
    %v2488 = vrcp.pop %v2487
    %v2489 = vmul.f32 1.0, %v2488
    %v2490 = vtanh.pop %v2476
    %v2491 = vxor.u32 %v2477, 2147483648
    %v2492 = vmul.f32 %v2491, 1.442695
    %v2493 = vpow.pop %v2492
    %v2494 = vadd.f32 %v2493, 1.0
    %v2495 = vrcp.pop %v2494
    %v2496 = vmul.f32 1.0, %v2495
    %v2498 = vrot.slane %v2317, 6
    %v2500 = vmul.f32 %v2489, %v2498
    %v2501 = vmul.f32 %v2483, %v2490
    %v2502 = vadd.f32 %v2500, %v2501
    %v2503 = vtanh.pop %v2502
    %v2504 = vmul.f32 %v2496, %v2503
    %v2506 = vrot.slane %v2504, 2
    %2508 = vmatprep.subr.mxu0 %v2147
    %2509 = vmatpush1.msra.mxu0 %v2146
    %2510 = vmatprep.subr.mxu0 %v2143
    %2511 = vmatpush1.msra.mxu0 %v2142
    %2512 = vmatprep.subr.mxu0 %v2139
    %2513 = vmatpush1.msra.mxu0 %v2138
    %2514 = vmatprep.subr.mxu0 %v2135
    %2515 = vmatpush1.msra.mxu0 %v2134
    %2516 = vmatprep.subr.mxu0 %v2131
    %2517 = vmatpush1.msra.mxu0 %v2130
    %2518 = vmatprep.subr.mxu0 %v2127
    %2519 = vmatpush1.msra.mxu0 %v2126
    %2520 = vmatprep.subr.mxu0 %v2123
    %2521 = vmatpush1.msra.mxu0 %v2122
    %2522 = vmatprep.subr.mxu0 %v2119
    %2523 = vmatpush1.msra.mxu0 %v2118
    %2524 = vmatprep.subr.mxu0 %v2115
    %2525 = vmatpush1.msra.mxu0 %v2114
    %2526 = vmatprep.subr.mxu0 %v2111
    %2527 = vmatpush1.msra.mxu0 %v2110
    %2528 = vmatprep.subr.mxu0 %v2107
    %2529 = vmatpush1.msra.mxu0 %v2106
    %2530 = vmatprep.subr.mxu0 %v2103
    %2531 = vmatpush1.msra.mxu0 %v2102
    %2532 = vmatprep.subr.mxu0 %v2099
    %2533 = vmatpush1.msra.mxu0 %v2098
    %2534 = vmatprep.subr.mxu0 %v2095
    %2535 = vmatpush1.msra.mxu0 %v2094
    %2536 = vmatprep.subr.mxu0 %v2091
    %2537 = vmatpush1.msra.mxu0 %v2090
    %2538 = vmatprep.subr.mxu0 %v2087
    %2539 = vmatpush1.msra.mxu0 %v2086
    %2540 = vmatprep.subr.mxu0 0.0
    %2541 = vmatpush2.msra.mxu0 0.0
    %2542 = vmatprep.subr.mxu0 0.0
    %2543 = vmatpush2.msra.mxu0 0.0
    %2544 = vmatprep.subr.mxu0 0.0
    %2545 = vmatpush2.msra.mxu0 0.0
    %2546 = vmatprep.subr.mxu0 0.0
    %2547 = vmatpush2.msra.mxu0 0.0
    %2548 = vmatprep.subr.mxu0 0.0
    %2549 = vmatpush2.msra.mxu0 0.0
    %2550 = vmatprep.subr.mxu0 0.0
    %2551 = vmatpush2.msra.mxu0 0.0
    %2552 = vmatprep.subr.mxu0 0.0
    %2553 = vmatpush2.msra.mxu0 0.0
    %2554 = vmatprep.subr.mxu0 0.0
    %2555 = vmatpush2.msra.mxu0 0.0
    %2556 = vmatprep.subr.mxu0 0.0
    %2557 = vmatpush2.msra.mxu0 0.0
    %2558 = vmatprep.subr.mxu0 0.0
    %2559 = vmatpush2.msra.mxu0 0.0
    %2560 = vmatprep.subr.mxu0 0.0
    %2561 = vmatpush2.msra.mxu0 0.0
    %2562 = vmatprep.subr.mxu0 0.0
    %2563 = vmatpush2.msra.mxu0 0.0
    %2564 = vmatprep.subr.mxu0 0.0
    %2565 = vmatpush2.msra.mxu0 0.0
    %2566 = vmatprep.subr.mxu0 0.0
    %2567 = vmatpush2.msra.mxu0 0.0
    %2568 = vmatprep.subr.mxu0 0.0
    %2569 = vmatpush2.msra.mxu0 0.0
    %2570 = vmatprep.subr.mxu0 0.0
    %2571 = vmatpush2.msra.mxu0 0.0
    %2572 = vmatprep.mubr.f32.mxu0 0.0
    %2573 = vmatmul.mubr.f32.gmra.mxu0 %v2506
    %v2574 = vpop.f32.mrf.mxu0
    %v2575 = vadd.f32 0.0, %v2574
    %v2576 = vpop.f32.mrf.mxu0
    %v2577 = vadd.f32 0.0, %v2576
    %2578 = vdwg.mxu0
    %2579 = vmatprep.subr.mxu0 %v2149
    %2580 = vmatpush1.msra.mxu0 %v2148
    %2581 = vmatprep.subr.mxu0 %v2145
    %2582 = vmatpush1.msra.mxu0 %v2144
    %2583 = vmatprep.subr.mxu0 %v2141
    %2584 = vmatpush1.msra.mxu0 %v2140
    %2585 = vmatprep.subr.mxu0 %v2137
    %2586 = vmatpush1.msra.mxu0 %v2136
    %2587 = vmatprep.subr.mxu0 %v2133
    %2588 = vmatpush1.msra.mxu0 %v2132
    %2589 = vmatprep.subr.mxu0 %v2129
    %2590 = vmatpush1.msra.mxu0 %v2128
    %2591 = vmatprep.subr.mxu0 %v2125
    %2592 = vmatpush1.msra.mxu0 %v2124
    %2593 = vmatprep.subr.mxu0 %v2121
    %2594 = vmatpush1.msra.mxu0 %v2120
    %2595 = vmatprep.subr.mxu0 %v2117
    %2596 = vmatpush1.msra.mxu0 %v2116
    %2597 = vmatprep.subr.mxu0 %v2113
    %2598 = vmatpush1.msra.mxu0 %v2112
    %2599 = vmatprep.subr.mxu0 %v2109
    %2600 = vmatpush1.msra.mxu0 %v2108
    %2601 = vmatprep.subr.mxu0 %v2105
    %2602 = vmatpush1.msra.mxu0 %v2104
    %2603 = vmatprep.subr.mxu0 %v2101
    %2604 = vmatpush1.msra.mxu0 %v2100
    %2605 = vmatprep.subr.mxu0 %v2097
    %2606 = vmatpush1.msra.mxu0 %v2096
    %2607 = vmatprep.subr.mxu0 %v2093
    %2608 = vmatpush1.msra.mxu0 %v2092
    %2609 = vmatprep.subr.mxu0 %v2089
    %2610 = vmatpush1.msra.mxu0 %v2088
    %2611 = vmatprep.subr.mxu0 0.0
    %2612 = vmatpush2.msra.mxu0 0.0
    %2613 = vmatprep.subr.mxu0 0.0
    %2614 = vmatpush2.msra.mxu0 0.0
    %2615 = vmatprep.subr.mxu0 0.0
    %2616 = vmatpush2.msra.mxu0 0.0
    %2617 = vmatprep.subr.mxu0 0.0
    %2618 = vmatpush2.msra.mxu0 0.0
    %2619 = vmatprep.subr.mxu0 0.0
    %2620 = vmatpush2.msra.mxu0 0.0
    %2621 = vmatprep.subr.mxu0 0.0
    %2622 = vmatpush2.msra.mxu0 0.0
    %2623 = vmatprep.subr.mxu0 0.0
    %2624 = vmatpush2.msra.mxu0 0.0
    %2625 = vmatprep.subr.mxu0 0.0
    %2626 = vmatpush2.msra.mxu0 0.0
    %2627 = vmatprep.subr.mxu0 0.0
    %2628 = vmatpush2.msra.mxu0 0.0
    %2629 = vmatprep.subr.mxu0 0.0
    %2630 = vmatpush2.msra.mxu0 0.0
    %2631 = vmatprep.subr.mxu0 0.0
    %2632 = vmatpush2.msra.mxu0 0.0
    %2633 = vmatprep.subr.mxu0 0.0
    %2634 = vmatpush2.msra.mxu0 0.0
    %2635 = vmatprep.subr.mxu0 0.0
    %2636 = vmatpush2.msra.mxu0 0.0
    %2637 = vmatprep.subr.mxu0 0.0
    %2638 = vmatpush2.msra.mxu0 0.0
    %2639 = vmatprep.subr.mxu0 0.0
    %2640 = vmatpush2.msra.mxu0 0.0
    %2641 = vmatprep.subr.mxu0 0.0
    %2642 = vmatpush2.msra.mxu0 0.0
    %2643 = vmatprep.mubr.f32.mxu0 0.0
    %2644 = vmatmul.mubr.f32.gmra.mxu0 %v2506
    %v2645 = vpop.f32.mrf.mxu0
    %v2646 = vadd.f32 0.0, %v2645
    %v2647 = vpop.f32.mrf.mxu0
    %v2648 = vadd.f32 0.0, %v2647
    %2649 = vdwg.mxu0
    %v2654 = vrot.slane %v2575, 4
    %v2655 = vrot.slane %v2577, 4
    %v2656 = vrot.slane %v2646, 4
    %v2657 = vrot.slane %v2648, 4
    %v2662 = vadd.f32 %v1999, %v2654
    %v2663 = vadd.f32 %v2001, %v2655
    %v2664 = vadd.f32 %v2076, %v2656
    %v2665 = vadd.f32 %v2078, %v2657
    %v2666 = vxor.u32 %v2662, 2147483648
    %v2667 = vmul.f32 %v2666, 1.442695
    %v2668 = vpow.pop %v2667
    %v2669 = vadd.f32 %v2668, 1.0
    %v2670 = vrcp.pop %v2669
    %v2671 = vmul.f32 1.0, %v2670
    %v2672 = vxor.u32 %v2663, 2147483648
    %v2673 = vmul.f32 %v2672, 1.442695
    %v2674 = vpow.pop %v2673
    %v2675 = vadd.f32 %v2674, 1.0
    %v2676 = vrcp.pop %v2675
    %v2677 = vmul.f32 1.0, %v2676
    %v2678 = vtanh.pop %v2664
    %v2679 = vxor.u32 %v2665, 2147483648
    %v2680 = vmul.f32 %v2679, 1.442695
    %v2681 = vpow.pop %v2680
    %v2682 = vadd.f32 %v2681, 1.0
    %v2683 = vrcp.pop %v2682
    %v2684 = vmul.f32 1.0, %v2683
    %v2686 = vrot.slane %v2502, 6
    %v2688 = vmul.f32 %v2677, %v2686
    %v2689 = vmul.f32 %v2671, %v2678
    %v2690 = vadd.f32 %v2688, %v2689
    %v2691 = vtanh.pop %v2690
    %v2692 = vmul.f32 %v2684, %v2691
    %v2694 = vrot.slane %v2692, 4
    %2696 = vmatprep.subr.mxu0 %v2147
    %2697 = vmatpush1.msra.mxu0 %v2146
    %2698 = vmatprep.subr.mxu0 %v2143
    %2699 = vmatpush1.msra.mxu0 %v2142
    %2700 = vmatprep.subr.mxu0 %v2139
    %2701 = vmatpush1.msra.mxu0 %v2138
    %2702 = vmatprep.subr.mxu0 %v2135
    %2703 = vmatpush1.msra.mxu0 %v2134
    %2704 = vmatprep.subr.mxu0 %v2131
    %2705 = vmatpush1.msra.mxu0 %v2130
    %2706 = vmatprep.subr.mxu0 %v2127
    %2707 = vmatpush1.msra.mxu0 %v2126
    %2708 = vmatprep.subr.mxu0 %v2123
    %2709 = vmatpush1.msra.mxu0 %v2122
    %2710 = vmatprep.subr.mxu0 %v2119
    %2711 = vmatpush1.msra.mxu0 %v2118
    %2712 = vmatprep.subr.mxu0 %v2115
    %2713 = vmatpush1.msra.mxu0 %v2114
    %2714 = vmatprep.subr.mxu0 %v2111
    %2715 = vmatpush1.msra.mxu0 %v2110
    %2716 = vmatprep.subr.mxu0 %v2107
    %2717 = vmatpush1.msra.mxu0 %v2106
    %2718 = vmatprep.subr.mxu0 %v2103
    %2719 = vmatpush1.msra.mxu0 %v2102
    %2720 = vmatprep.subr.mxu0 %v2099
    %2721 = vmatpush1.msra.mxu0 %v2098
    %2722 = vmatprep.subr.mxu0 %v2095
    %2723 = vmatpush1.msra.mxu0 %v2094
    %2724 = vmatprep.subr.mxu0 %v2091
    %2725 = vmatpush1.msra.mxu0 %v2090
    %2726 = vmatprep.subr.mxu0 %v2087
    %2727 = vmatpush1.msra.mxu0 %v2086
    %2728 = vmatprep.subr.mxu0 0.0
    %2729 = vmatpush2.msra.mxu0 0.0
    %2730 = vmatprep.subr.mxu0 0.0
    %2731 = vmatpush2.msra.mxu0 0.0
    %2732 = vmatprep.subr.mxu0 0.0
    %2733 = vmatpush2.msra.mxu0 0.0
    %2734 = vmatprep.subr.mxu0 0.0
    %2735 = vmatpush2.msra.mxu0 0.0
    %2736 = vmatprep.subr.mxu0 0.0
    %2737 = vmatpush2.msra.mxu0 0.0
    %2738 = vmatprep.subr.mxu0 0.0
    %2739 = vmatpush2.msra.mxu0 0.0
    %2740 = vmatprep.subr.mxu0 0.0
    %2741 = vmatpush2.msra.mxu0 0.0
    %2742 = vmatprep.subr.mxu0 0.0
    %2743 = vmatpush2.msra.mxu0 0.0
    %2744 = vmatprep.subr.mxu0 0.0
    %2745 = vmatpush2.msra.mxu0 0.0
    %2746 = vmatprep.subr.mxu0 0.0
    %2747 = vmatpush2.msra.mxu0 0.0
    %2748 = vmatprep.subr.mxu0 0.0
    %2749 = vmatpush2.msra.mxu0 0.0
    %2750 = vmatprep.subr.mxu0 0.0
    %2751 = vmatpush2.msra.mxu0 0.0
    %2752 = vmatprep.subr.mxu0 0.0
    %2753 = vmatpush2.msra.mxu0 0.0
    %2754 = vmatprep.subr.mxu0 0.0
    %2755 = vmatpush2.msra.mxu0 0.0
    %2756 = vmatprep.subr.mxu0 0.0
    %2757 = vmatpush2.msra.mxu0 0.0
    %2758 = vmatprep.subr.mxu0 0.0
    %2759 = vmatpush2.msra.mxu0 0.0
    %2760 = vmatprep.mubr.f32.mxu0 0.0
    %2761 = vmatmul.mubr.f32.gmra.mxu0 %v2694
    %v2762 = vpop.f32.mrf.mxu0
    %v2763 = vadd.f32 0.0, %v2762
    %v2764 = vpop.f32.mrf.mxu0
    %v2765 = vadd.f32 0.0, %v2764
    %2766 = vdwg.mxu0
    %2767 = vmatprep.subr.mxu0 %v2149
    %2768 = vmatpush1.msra.mxu0 %v2148
    %2769 = vmatprep.subr.mxu0 %v2145
    %2770 = vmatpush1.msra.mxu0 %v2144
    %2771 = vmatprep.subr.mxu0 %v2141
    %2772 = vmatpush1.msra.mxu0 %v2140
    %2773 = vmatprep.subr.mxu0 %v2137
    %2774 = vmatpush1.msra.mxu0 %v2136
    %2775 = vmatprep.subr.mxu0 %v2133
    %2776 = vmatpush1.msra.mxu0 %v2132
    %2777 = vmatprep.subr.mxu0 %v2129
    %2778 = vmatpush1.msra.mxu0 %v2128
    %2779 = vmatprep.subr.mxu0 %v2125
    %2780 = vmatpush1.msra.mxu0 %v2124
    %2781 = vmatprep.subr.mxu0 %v2121
    %2782 = vmatpush1.msra.mxu0 %v2120
    %2783 = vmatprep.subr.mxu0 %v2117
    %2784 = vmatpush1.msra.mxu0 %v2116
    %2785 = vmatprep.subr.mxu0 %v2113
    %2786 = vmatpush1.msra.mxu0 %v2112
    %2787 = vmatprep.subr.mxu0 %v2109
    %2788 = vmatpush1.msra.mxu0 %v2108
    %2789 = vmatprep.subr.mxu0 %v2105
    %2790 = vmatpush1.msra.mxu0 %v2104
    %2791 = vmatprep.subr.mxu0 %v2101
    %2792 = vmatpush1.msra.mxu0 %v2100
    %2793 = vmatprep.subr.mxu0 %v2097
    %2794 = vmatpush1.msra.mxu0 %v2096
    %2795 = vmatprep.subr.mxu0 %v2093
    %2796 = vmatpush1.msra.mxu0 %v2092
    %2797 = vmatprep.subr.mxu0 %v2089
    %2798 = vmatpush1.msra.mxu0 %v2088
    %2799 = vmatprep.subr.mxu0 0.0
    %2800 = vmatpush2.msra.mxu0 0.0
    %2801 = vmatprep.subr.mxu0 0.0
    %2802 = vmatpush2.msra.mxu0 0.0
    %2803 = vmatprep.subr.mxu0 0.0
    %2804 = vmatpush2.msra.mxu0 0.0
    %2805 = vmatprep.subr.mxu0 0.0
    %2806 = vmatpush2.msra.mxu0 0.0
    %2807 = vmatprep.subr.mxu0 0.0
    %2808 = vmatpush2.msra.mxu0 0.0
    %2809 = vmatprep.subr.mxu0 0.0
    %2810 = vmatpush2.msra.mxu0 0.0
    %2811 = vmatprep.subr.mxu0 0.0
    %2812 = vmatpush2.msra.mxu0 0.0
    %2813 = vmatprep.subr.mxu0 0.0
    %2814 = vmatpush2.msra.mxu0 0.0
    %2815 = vmatprep.subr.mxu0 0.0
    %2816 = vmatpush2.msra.mxu0 0.0
    %2817 = vmatprep.subr.mxu0 0.0
    %2818 = vmatpush2.msra.mxu0 0.0
    %2819 = vmatprep.subr.mxu0 0.0
    %2820 = vmatpush2.msra.mxu0 0.0
    %2821 = vmatprep.subr.mxu0 0.0
    %2822 = vmatpush2.msra.mxu0 0.0
    %2823 = vmatprep.subr.mxu0 0.0
    %2824 = vmatpush2.msra.mxu0 0.0
    %2825 = vmatprep.subr.mxu0 0.0
    %2826 = vmatpush2.msra.mxu0 0.0
    %2827 = vmatprep.subr.mxu0 0.0
    %2828 = vmatpush2.msra.mxu0 0.0
    %2829 = vmatprep.subr.mxu0 0.0
    %2830 = vmatpush2.msra.mxu0 0.0
    %2831 = vmatprep.mubr.f32.mxu0 0.0
    %2832 = vmatmul.mubr.f32.gmra.mxu0 %v2694
    %v2833 = vpop.f32.mrf.mxu0
    %v2834 = vadd.f32 0.0, %v2833
    %v2835 = vpop.f32.mrf.mxu0
    %v2836 = vadd.f32 0.0, %v2835
    %2837 = vdwg.mxu0
    %v2842 = vrot.slane %v2763, 2
    %v2843 = vrot.slane %v2765, 2
    %v2844 = vrot.slane %v2834, 2
    %v2845 = vrot.slane %v2836, 2
    %v2850 = vadd.f32 %v1999, %v2842
    %v2851 = vadd.f32 %v2001, %v2843
    %v2852 = vadd.f32 %v2076, %v2844
    %v2853 = vadd.f32 %v2078, %v2845
    %v2854 = vxor.u32 %v2850, 2147483648
    %v2855 = vmul.f32 %v2854, 1.442695
    %v2856 = vpow.pop %v2855
    %v2857 = vadd.f32 %v2856, 1.0
    %v2858 = vrcp.pop %v2857
    %v2859 = vmul.f32 1.0, %v2858
    %v2860 = vxor.u32 %v2851, 2147483648
    %v2861 = vmul.f32 %v2860, 1.442695
    %v2862 = vpow.pop %v2861
    %v2863 = vadd.f32 %v2862, 1.0
    %v2864 = vrcp.pop %v2863
    %v2865 = vmul.f32 1.0, %v2864
    %v2866 = vtanh.pop %v2852
    %v2867 = vxor.u32 %v2853, 2147483648
    %v2868 = vmul.f32 %v2867, 1.442695
    %v2869 = vpow.pop %v2868
    %v2870 = vadd.f32 %v2869, 1.0
    %v2871 = vrcp.pop %v2870
    %v2872 = vmul.f32 1.0, %v2871
    %v2874 = vrot.slane %v2690, 6
    %v2876 = vmul.f32 %v2865, %v2874
    %v2877 = vmul.f32 %v2859, %v2866
    %v2878 = vadd.f32 %v2876, %v2877
    %v2879 = vtanh.pop %v2878
    %v2880 = vmul.f32 %v2872, %v2879
    %v2882 = vrot.slane %v2880, 6
    %2884 = vmatprep.subr.mxu0 %v2147
    %2885 = vmatpush1.msra.mxu0 %v2146
    %2886 = vmatprep.subr.mxu0 %v2143
    %2887 = vmatpush1.msra.mxu0 %v2142
    %2888 = vmatprep.subr.mxu0 %v2139
    %2889 = vmatpush1.msra.mxu0 %v2138
    %2890 = vmatprep.subr.mxu0 %v2135
    %2891 = vmatpush1.msra.mxu0 %v2134
    %2892 = vmatprep.subr.mxu0 %v2131
    %2893 = vmatpush1.msra.mxu0 %v2130
    %2894 = vmatprep.subr.mxu0 %v2127
    %2895 = vmatpush1.msra.mxu0 %v2126
    %2896 = vmatprep.subr.mxu0 %v2123
    %2897 = vmatpush1.msra.mxu0 %v2122
    %2898 = vmatprep.subr.mxu0 %v2119
    %2899 = vmatpush1.msra.mxu0 %v2118
    %2900 = vmatprep.subr.mxu0 %v2115
    %2901 = vmatpush1.msra.mxu0 %v2114
    %2902 = vmatprep.subr.mxu0 %v2111
    %2903 = vmatpush1.msra.mxu0 %v2110
    %2904 = vmatprep.subr.mxu0 %v2107
    %2905 = vmatpush1.msra.mxu0 %v2106
    %2906 = vmatprep.subr.mxu0 %v2103
    %2907 = vmatpush1.msra.mxu0 %v2102
    %2908 = vmatprep.subr.mxu0 %v2099
    %2909 = vmatpush1.msra.mxu0 %v2098
    %2910 = vmatprep.subr.mxu0 %v2095
    %2911 = vmatpush1.msra.mxu0 %v2094
    %2912 = vmatprep.subr.mxu0 %v2091
    %2913 = vmatpush1.msra.mxu0 %v2090
    %2914 = vmatprep.subr.mxu0 %v2087
    %2915 = vmatpush1.msra.mxu0 %v2086
    %2916 = vmatprep.subr.mxu0 0.0
    %2917 = vmatpush2.msra.mxu0 0.0
    %2918 = vmatprep.subr.mxu0 0.0
    %2919 = vmatpush2.msra.mxu0 0.0
    %2920 = vmatprep.subr.mxu0 0.0
    %2921 = vmatpush2.msra.mxu0 0.0
    %2922 = vmatprep.subr.mxu0 0.0
    %2923 = vmatpush2.msra.mxu0 0.0
    %2924 = vmatprep.subr.mxu0 0.0
    %2925 = vmatpush2.msra.mxu0 0.0
    %2926 = vmatprep.subr.mxu0 0.0
    %2927 = vmatpush2.msra.mxu0 0.0
    %2928 = vmatprep.subr.mxu0 0.0
    %2929 = vmatpush2.msra.mxu0 0.0
    %2930 = vmatprep.subr.mxu0 0.0
    %2931 = vmatpush2.msra.mxu0 0.0
    %2932 = vmatprep.subr.mxu0 0.0
    %2933 = vmatpush2.msra.mxu0 0.0
    %2934 = vmatprep.subr.mxu0 0.0
    %2935 = vmatpush2.msra.mxu0 0.0
    %2936 = vmatprep.subr.mxu0 0.0
    %2937 = vmatpush2.msra.mxu0 0.0
    %2938 = vmatprep.subr.mxu0 0.0
    %2939 = vmatpush2.msra.mxu0 0.0
    %2940 = vmatprep.subr.mxu0 0.0
    %2941 = vmatpush2.msra.mxu0 0.0
    %2942 = vmatprep.subr.mxu0 0.0
    %2943 = vmatpush2.msra.mxu0 0.0
    %2944 = vmatprep.subr.mxu0 0.0
    %2945 = vmatpush2.msra.mxu0 0.0
    %2946 = vmatprep.subr.mxu0 0.0
    %2947 = vmatpush2.msra.mxu0 0.0
    %2948 = vmatprep.mubr.f32.mxu0 0.0
    %2949 = vmatmul.mubr.f32.gmra.mxu0 %v2882
    %v2950 = vpop.f32.mrf.mxu0
    %v2951 = vadd.f32 0.0, %v2950
    %v2952 = vpop.f32.mrf.mxu0
    %v2953 = vadd.f32 0.0, %v2952
    %2954 = vdwg.mxu0
    %2955 = vmatprep.subr.mxu0 %v2149
    %2956 = vmatpush1.msra.mxu0 %v2148
    %2957 = vmatprep.subr.mxu0 %v2145
    %2958 = vmatpush1.msra.mxu0 %v2144
    %2959 = vmatprep.subr.mxu0 %v2141
    %2960 = vmatpush1.msra.mxu0 %v2140
    %2961 = vmatprep.subr.mxu0 %v2137
    %2962 = vmatpush1.msra.mxu0 %v2136
    %2963 = vmatprep.subr.mxu0 %v2133
    %2964 = vmatpush1.msra.mxu0 %v2132
    %2965 = vmatprep.subr.mxu0 %v2129
    %2966 = vmatpush1.msra.mxu0 %v2128
    %2967 = vmatprep.subr.mxu0 %v2125
    %2968 = vmatpush1.msra.mxu0 %v2124
    %2969 = vmatprep.subr.mxu0 %v2121
    %2970 = vmatpush1.msra.mxu0 %v2120
    %2971 = vmatprep.subr.mxu0 %v2117
    %2972 = vmatpush1.msra.mxu0 %v2116
    %2973 = vmatprep.subr.mxu0 %v2113
    %2974 = vmatpush1.msra.mxu0 %v2112
    %2975 = vmatprep.subr.mxu0 %v2109
    %2976 = vmatpush1.msra.mxu0 %v2108
    %2977 = vmatprep.subr.mxu0 %v2105
    %2978 = vmatpush1.msra.mxu0 %v2104
    %2979 = vmatprep.subr.mxu0 %v2101
    %2980 = vmatpush1.msra.mxu0 %v2100
    %2981 = vmatprep.subr.mxu0 %v2097
    %2982 = vmatpush1.msra.mxu0 %v2096
    %2983 = vmatprep.subr.mxu0 %v2093
    %2984 = vmatpush1.msra.mxu0 %v2092
    %2985 = vmatprep.subr.mxu0 %v2089
    %2986 = vmatpush1.msra.mxu0 %v2088
    %2987 = vmatprep.subr.mxu0 0.0
    %2988 = vmatpush2.msra.mxu0 0.0
    %2989 = vmatprep.subr.mxu0 0.0
    %2990 = vmatpush2.msra.mxu0 0.0
    %2991 = vmatprep.subr.mxu0 0.0
    %2992 = vmatpush2.msra.mxu0 0.0
    %2993 = vmatprep.subr.mxu0 0.0
    %2994 = vmatpush2.msra.mxu0 0.0
    %2995 = vmatprep.subr.mxu0 0.0
    %2996 = vmatpush2.msra.mxu0 0.0
    %2997 = vmatprep.subr.mxu0 0.0
    %2998 = vmatpush2.msra.mxu0 0.0
    %2999 = vmatprep.subr.mxu0 0.0
    %3000 = vmatpush2.msra.mxu0 0.0
    %3001 = vmatprep.subr.mxu0 0.0
    %3002 = vmatpush2.msra.mxu0 0.0
    %3003 = vmatprep.subr.mxu0 0.0
    %3004 = vmatpush2.msra.mxu0 0.0
    %3005 = vmatprep.subr.mxu0 0.0
    %3006 = vmatpush2.msra.mxu0 0.0
    %3007 = vmatprep.subr.mxu0 0.0
    %3008 = vmatpush2.msra.mxu0 0.0
    %3009 = vmatprep.subr.mxu0 0.0
    %3010 = vmatpush2.msra.mxu0 0.0
    %3011 = vmatprep.subr.mxu0 0.0
    %3012 = vmatpush2.msra.mxu0 0.0
    %3013 = vmatprep.subr.mxu0 0.0
    %3014 = vmatpush2.msra.mxu0 0.0
    %3015 = vmatprep.subr.mxu0 0.0
    %3016 = vmatpush2.msra.mxu0 0.0
    %3017 = vmatprep.subr.mxu0 0.0
    %3018 = vmatpush2.msra.mxu0 0.0
    %3019 = vmatprep.mubr.f32.mxu0 0.0
    %3020 = vmatmul.mubr.f32.gmra.mxu0 %v2882
    %v3021 = vpop.f32.mrf.mxu0
    %v3022 = vadd.f32 0.0, %v3021
    %v3023 = vpop.f32.mrf.mxu0
    %v3024 = vadd.f32 0.0, %v3023
    %3025 = vdwg.mxu0
    %v3026 = vadd.f32 %v2005, %v2951
    %v3027 = vadd.f32 %v2007, %v2953
    %v3028 = vadd.f32 %v2082, %v3022
    %v3029 = vadd.f32 %v2084, %v3024
    %v3030 = vxor.u32 %v3026, 2147483648
    %v3031 = vmul.f32 %v3030, 1.442695
    %v3032 = vpow.pop %v3031
    %v3033 = vadd.f32 %v3032, 1.0
    %v3034 = vrcp.pop %v3033
    %v3035 = vmul.f32 1.0, %v3034
    %v3036 = vxor.u32 %v3027, 2147483648
    %v3037 = vmul.f32 %v3036, 1.442695
    %v3038 = vpow.pop %v3037
    %v3039 = vadd.f32 %v3038, 1.0
    %v3040 = vrcp.pop %v3039
    %v3041 = vmul.f32 1.0, %v3040
    %v3042 = vtanh.pop %v3028
    %v3043 = vxor.u32 %v3029, 2147483648
    %v3044 = vmul.f32 %v3043, 1.442695
    %v3045 = vpow.pop %v3044
    %v3046 = vadd.f32 %v3045, 1.0
    %v3047 = vrcp.pop %v3046
    %v3048 = vmul.f32 1.0, %v3047
    %v3050 = vrot.slane %v2878, 6
    %v3052 = vmul.f32 %v3041, %v3050
    %v3053 = vmul.f32 %v3035, %v3042
    %v3054 = vadd.f32 %v3052, %v3053
    %v3055 = vtanh.pop %v3054
    %v3056 = vmul.f32 %v3048, %v3055
    %3057 = vmatprep.subr.mxu0 %v2147
    %3058 = vmatpush1.msra.mxu0 %v2146
    %3059 = vmatprep.subr.mxu0 %v2143
    %3060 = vmatpush1.msra.mxu0 %v2142
    %3061 = vmatprep.subr.mxu0 %v2139
    %3062 = vmatpush1.msra.mxu0 %v2138
    %3063 = vmatprep.subr.mxu0 %v2135
    %3064 = vmatpush1.msra.mxu0 %v2134
    %3065 = vmatprep.subr.mxu0 %v2131
    %3066 = vmatpush1.msra.mxu0 %v2130
    %3067 = vmatprep.subr.mxu0 %v2127
    %3068 = vmatpush1.msra.mxu0 %v2126
    %3069 = vmatprep.subr.mxu0 %v2123
    %3070 = vmatpush1.msra.mxu0 %v2122
    %3071 = vmatprep.subr.mxu0 %v2119
    %3072 = vmatpush1.msra.mxu0 %v2118
    %3073 = vmatprep.subr.mxu0 %v2115
    %3074 = vmatpush1.msra.mxu0 %v2114
    %3075 = vmatprep.subr.mxu0 %v2111
    %3076 = vmatpush1.msra.mxu0 %v2110
    %3077 = vmatprep.subr.mxu0 %v2107
    %3078 = vmatpush1.msra.mxu0 %v2106
    %3079 = vmatprep.subr.mxu0 %v2103
    %3080 = vmatpush1.msra.mxu0 %v2102
    %3081 = vmatprep.subr.mxu0 %v2099
    %3082 = vmatpush1.msra.mxu0 %v2098
    %3083 = vmatprep.subr.mxu0 %v2095
    %3084 = vmatpush1.msra.mxu0 %v2094
    %3085 = vmatprep.subr.mxu0 %v2091
    %3086 = vmatpush1.msra.mxu0 %v2090
    %3087 = vmatprep.subr.mxu0 %v2087
    %3088 = vmatpush1.msra.mxu0 %v2086
    %3089 = vmatprep.subr.mxu0 0.0
    %3090 = vmatpush2.msra.mxu0 0.0
    %3091 = vmatprep.subr.mxu0 0.0
    %3092 = vmatpush2.msra.mxu0 0.0
    %3093 = vmatprep.subr.mxu0 0.0
    %3094 = vmatpush2.msra.mxu0 0.0
    %3095 = vmatprep.subr.mxu0 0.0
    %3096 = vmatpush2.msra.mxu0 0.0
    %3097 = vmatprep.subr.mxu0 0.0
    %3098 = vmatpush2.msra.mxu0 0.0
    %3099 = vmatprep.subr.mxu0 0.0
    %3100 = vmatpush2.msra.mxu0 0.0
    %3101 = vmatprep.subr.mxu0 0.0
    %3102 = vmatpush2.msra.mxu0 0.0
    %3103 = vmatprep.subr.mxu0 0.0
    %3104 = vmatpush2.msra.mxu0 0.0
    %3105 = vmatprep.subr.mxu0 0.0
    %3106 = vmatpush2.msra.mxu0 0.0
    %3107 = vmatprep.subr.mxu0 0.0
    %3108 = vmatpush2.msra.mxu0 0.0
    %3109 = vmatprep.subr.mxu0 0.0
    %3110 = vmatpush2.msra.mxu0 0.0
    %3111 = vmatprep.subr.mxu0 0.0
    %3112 = vmatpush2.msra.mxu0 0.0
    %3113 = vmatprep.subr.mxu0 0.0
    %3114 = vmatpush2.msra.mxu0 0.0
    %3115 = vmatprep.subr.mxu0 0.0
    %3116 = vmatpush2.msra.mxu0 0.0
    %3117 = vmatprep.subr.mxu0 0.0
    %3118 = vmatpush2.msra.mxu0 0.0
    %3119 = vmatprep.subr.mxu0 0.0
    %3120 = vmatpush2.msra.mxu0 0.0
    %3121 = vmatprep.mubr.f32.mxu0 0.0
    %3122 = vmatmul.mubr.f32.gmra.mxu0 %v3056
    %v3123 = vpop.f32.mrf.mxu0
    %v3124 = vadd.f32 0.0, %v3123
    %v3125 = vpop.f32.mrf.mxu0
    %v3126 = vadd.f32 0.0, %v3125
    %3127 = vdwg.mxu0
    %3128 = vmatprep.subr.mxu0 %v2149
    %3129 = vmatpush1.msra.mxu0 %v2148
    %3130 = vmatprep.subr.mxu0 %v2145
    %3131 = vmatpush1.msra.mxu0 %v2144
    %3132 = vmatprep.subr.mxu0 %v2141
    %3133 = vmatpush1.msra.mxu0 %v2140
    %3134 = vmatprep.subr.mxu0 %v2137
    %3135 = vmatpush1.msra.mxu0 %v2136
    %3136 = vmatprep.subr.mxu0 %v2133
    %3137 = vmatpush1.msra.mxu0 %v2132
    %3138 = vmatprep.subr.mxu0 %v2129
    %3139 = vmatpush1.msra.mxu0 %v2128
    %3140 = vmatprep.subr.mxu0 %v2125
    %3141 = vmatpush1.msra.mxu0 %v2124
    %3142 = vmatprep.subr.mxu0 %v2121
    %3143 = vmatpush1.msra.mxu0 %v2120
    %3144 = vmatprep.subr.mxu0 %v2117
    %3145 = vmatpush1.msra.mxu0 %v2116
    %3146 = vmatprep.subr.mxu0 %v2113
    %3147 = vmatpush1.msra.mxu0 %v2112
    %3148 = vmatprep.subr.mxu0 %v2109
    %3149 = vmatpush1.msra.mxu0 %v2108
    %3150 = vmatprep.subr.mxu0 %v2105
    %3151 = vmatpush1.msra.mxu0 %v2104
    %3152 = vmatprep.subr.mxu0 %v2101
    %3153 = vmatpush1.msra.mxu0 %v2100
    %3154 = vmatprep.subr.mxu0 %v2097
    %3155 = vmatpush1.msra.mxu0 %v2096
    %3156 = vmatprep.subr.mxu0 %v2093
    %3157 = vmatpush1.msra.mxu0 %v2092
    %3158 = vmatprep.subr.mxu0 %v2089
    %3159 = vmatpush1.msra.mxu0 %v2088
    %3160 = vmatprep.subr.mxu0 0.0
    %3161 = vmatpush2.msra.mxu0 0.0
    %3162 = vmatprep.subr.mxu0 0.0
    %3163 = vmatpush2.msra.mxu0 0.0
    %3164 = vmatprep.subr.mxu0 0.0
    %3165 = vmatpush2.msra.mxu0 0.0
    %3166 = vmatprep.subr.mxu0 0.0
    %3167 = vmatpush2.msra.mxu0 0.0
    %3168 = vmatprep.subr.mxu0 0.0
    %3169 = vmatpush2.msra.mxu0 0.0
    %3170 = vmatprep.subr.mxu0 0.0
    %3171 = vmatpush2.msra.mxu0 0.0
    %3172 = vmatprep.subr.mxu0 0.0
    %3173 = vmatpush2.msra.mxu0 0.0
    %3174 = vmatprep.subr.mxu0 0.0
    %3175 = vmatpush2.msra.mxu0 0.0
    %3176 = vmatprep.subr.mxu0 0.0
    %3177 = vmatpush2.msra.mxu0 0.0
    %3178 = vmatprep.subr.mxu0 0.0
    %3179 = vmatpush2.msra.mxu0 0.0
    %3180 = vmatprep.subr.mxu0 0.0
    %3181 = vmatpush2.msra.mxu0 0.0
    %3182 = vmatprep.subr.mxu0 0.0
    %3183 = vmatpush2.msra.mxu0 0.0
    %3184 = vmatprep.subr.mxu0 0.0
    %3185 = vmatpush2.msra.mxu0 0.0
    %3186 = vmatprep.subr.mxu0 0.0
    %3187 = vmatpush2.msra.mxu0 0.0
    %3188 = vmatprep.subr.mxu0 0.0
    %3189 = vmatpush2.msra.mxu0 0.0
    %3190 = vmatprep.subr.mxu0 0.0
    %3191 = vmatpush2.msra.mxu0 0.0
    %3192 = vmatprep.mubr.f32.mxu0 0.0
    %3193 = vmatmul.mubr.f32.gmra.mxu0 %v3056
    %v3194 = vpop.f32.mrf.mxu0
    %v3195 = vadd.f32 0.0, %v3194
    %v3196 = vpop.f32.mrf.mxu0
    %v3197 = vadd.f32 0.0, %v3196
    %3198 = vdwg.mxu0
    %v3203 = vrot.slane %v3124, 6
    %v3204 = vrot.slane %v3126, 6
    %v3205 = vrot.slane %v3195, 6
    %v3206 = vrot.slane %v3197, 6
    %v3211 = vadd.f32 %v2005, %v3203
    %v3212 = vadd.f32 %v2007, %v3204
    %v3213 = vadd.f32 %v2082, %v3205
    %v3214 = vadd.f32 %v2084, %v3206
    %v3215 = vxor.u32 %v3211, 2147483648
    %v3216 = vmul.f32 %v3215, 1.442695
    %v3217 = vpow.pop %v3216
    %v3218 = vadd.f32 %v3217, 1.0
    %v3219 = vrcp.pop %v3218
    %v3220 = vmul.f32 1.0, %v3219
    %v3221 = vxor.u32 %v3212, 2147483648
    %v3222 = vmul.f32 %v3221, 1.442695
    %v3223 = vpow.pop %v3222
    %v3224 = vadd.f32 %v3223, 1.0
    %v3225 = vrcp.pop %v3224
    %v3226 = vmul.f32 1.0, %v3225
    %v3227 = vtanh.pop %v3213
    %v3228 = vxor.u32 %v3214, 2147483648
    %v3229 = vmul.f32 %v3228, 1.442695
    %v3230 = vpow.pop %v3229
    %v3231 = vadd.f32 %v3230, 1.0
    %v3232 = vrcp.pop %v3231
    %v3233 = vmul.f32 1.0, %v3232
    %v3235 = vrot.slane %v3054, 6
    %v3237 = vmul.f32 %v3226, %v3235
    %v3238 = vmul.f32 %v3220, %v3227
    %v3239 = vadd.f32 %v3237, %v3238
    %v3240 = vtanh.pop %v3239
    %v3241 = vmul.f32 %v3233, %v3240
    %v3243 = vrot.slane %v3241, 2
    %3245 = vmatprep.subr.mxu0 %v2147
    %3246 = vmatpush1.msra.mxu0 %v2146
    %3247 = vmatprep.subr.mxu0 %v2143
    %3248 = vmatpush1.msra.mxu0 %v2142
    %3249 = vmatprep.subr.mxu0 %v2139
    %3250 = vmatpush1.msra.mxu0 %v2138
    %3251 = vmatprep.subr.mxu0 %v2135
    %3252 = vmatpush1.msra.mxu0 %v2134
    %3253 = vmatprep.subr.mxu0 %v2131
    %3254 = vmatpush1.msra.mxu0 %v2130
    %3255 = vmatprep.subr.mxu0 %v2127
    %3256 = vmatpush1.msra.mxu0 %v2126
    %3257 = vmatprep.subr.mxu0 %v2123
    %3258 = vmatpush1.msra.mxu0 %v2122
    %3259 = vmatprep.subr.mxu0 %v2119
    %3260 = vmatpush1.msra.mxu0 %v2118
    %3261 = vmatprep.subr.mxu0 %v2115
    %3262 = vmatpush1.msra.mxu0 %v2114
    %3263 = vmatprep.subr.mxu0 %v2111
    %3264 = vmatpush1.msra.mxu0 %v2110
    %3265 = vmatprep.subr.mxu0 %v2107
    %3266 = vmatpush1.msra.mxu0 %v2106
    %3267 = vmatprep.subr.mxu0 %v2103
    %3268 = vmatpush1.msra.mxu0 %v2102
    %3269 = vmatprep.subr.mxu0 %v2099
    %3270 = vmatpush1.msra.mxu0 %v2098
    %3271 = vmatprep.subr.mxu0 %v2095
    %3272 = vmatpush1.msra.mxu0 %v2094
    %3273 = vmatprep.subr.mxu0 %v2091
    %3274 = vmatpush1.msra.mxu0 %v2090
    %3275 = vmatprep.subr.mxu0 %v2087
    %3276 = vmatpush1.msra.mxu0 %v2086
    %3277 = vmatprep.subr.mxu0 0.0
    %3278 = vmatpush2.msra.mxu0 0.0
    %3279 = vmatprep.subr.mxu0 0.0
    %3280 = vmatpush2.msra.mxu0 0.0
    %3281 = vmatprep.subr.mxu0 0.0
    %3282 = vmatpush2.msra.mxu0 0.0
    %3283 = vmatprep.subr.mxu0 0.0
    %3284 = vmatpush2.msra.mxu0 0.0
    %3285 = vmatprep.subr.mxu0 0.0
    %3286 = vmatpush2.msra.mxu0 0.0
    %3287 = vmatprep.subr.mxu0 0.0
    %3288 = vmatpush2.msra.mxu0 0.0
    %3289 = vmatprep.subr.mxu0 0.0
    %3290 = vmatpush2.msra.mxu0 0.0
    %3291 = vmatprep.subr.mxu0 0.0
    %3292 = vmatpush2.msra.mxu0 0.0
    %3293 = vmatprep.subr.mxu0 0.0
    %3294 = vmatpush2.msra.mxu0 0.0
    %3295 = vmatprep.subr.mxu0 0.0
    %3296 = vmatpush2.msra.mxu0 0.0
    %3297 = vmatprep.subr.mxu0 0.0
    %3298 = vmatpush2.msra.mxu0 0.0
    %3299 = vmatprep.subr.mxu0 0.0
    %3300 = vmatpush2.msra.mxu0 0.0
    %3301 = vmatprep.subr.mxu0 0.0
    %3302 = vmatpush2.msra.mxu0 0.0
    %3303 = vmatprep.subr.mxu0 0.0
    %3304 = vmatpush2.msra.mxu0 0.0
    %3305 = vmatprep.subr.mxu0 0.0
    %3306 = vmatpush2.msra.mxu0 0.0
    %3307 = vmatprep.subr.mxu0 0.0
    %3308 = vmatpush2.msra.mxu0 0.0
    %3309 = vmatprep.mubr.f32.mxu0 0.0
    %3310 = vmatmul.mubr.f32.gmra.mxu0 %v3243
    %v3311 = vpop.f32.mrf.mxu0
    %v3312 = vadd.f32 0.0, %v3311
    %v3313 = vpop.f32.mrf.mxu0
    %v3314 = vadd.f32 0.0, %v3313
    %3315 = vdwg.mxu0
    %3316 = vmatprep.subr.mxu0 %v2149
    %3317 = vmatpush1.msra.mxu0 %v2148
    %3318 = vmatprep.subr.mxu0 %v2145
    %3319 = vmatpush1.msra.mxu0 %v2144
    %3320 = vmatprep.subr.mxu0 %v2141
    %3321 = vmatpush1.msra.mxu0 %v2140
    %3322 = vmatprep.subr.mxu0 %v2137
    %3323 = vmatpush1.msra.mxu0 %v2136
    %3324 = vmatprep.subr.mxu0 %v2133
    %3325 = vmatpush1.msra.mxu0 %v2132
    %3326 = vmatprep.subr.mxu0 %v2129
    %3327 = vmatpush1.msra.mxu0 %v2128
    %3328 = vmatprep.subr.mxu0 %v2125
    %3329 = vmatpush1.msra.mxu0 %v2124
    %3330 = vmatprep.subr.mxu0 %v2121
    %3331 = vmatpush1.msra.mxu0 %v2120
    %3332 = vmatprep.subr.mxu0 %v2117
    %3333 = vmatpush1.msra.mxu0 %v2116
    %3334 = vmatprep.subr.mxu0 %v2113
    %3335 = vmatpush1.msra.mxu0 %v2112
    %3336 = vmatprep.subr.mxu0 %v2109
    %3337 = vmatpush1.msra.mxu0 %v2108
    %3338 = vmatprep.subr.mxu0 %v2105
    %3339 = vmatpush1.msra.mxu0 %v2104
    %3340 = vmatprep.subr.mxu0 %v2101
    %3341 = vmatpush1.msra.mxu0 %v2100
    %3342 = vmatprep.subr.mxu0 %v2097
    %3343 = vmatpush1.msra.mxu0 %v2096
    %3344 = vmatprep.subr.mxu0 %v2093
    %3345 = vmatpush1.msra.mxu0 %v2092
    %3346 = vmatprep.subr.mxu0 %v2089
    %3347 = vmatpush1.msra.mxu0 %v2088
    %3348 = vmatprep.subr.mxu0 0.0
    %3349 = vmatpush2.msra.mxu0 0.0
    %3350 = vmatprep.subr.mxu0 0.0
    %3351 = vmatpush2.msra.mxu0 0.0
    %3352 = vmatprep.subr.mxu0 0.0
    %3353 = vmatpush2.msra.mxu0 0.0
    %3354 = vmatprep.subr.mxu0 0.0
    %3355 = vmatpush2.msra.mxu0 0.0
    %3356 = vmatprep.subr.mxu0 0.0
    %3357 = vmatpush2.msra.mxu0 0.0
    %3358 = vmatprep.subr.mxu0 0.0
    %3359 = vmatpush2.msra.mxu0 0.0
    %3360 = vmatprep.subr.mxu0 0.0
    %3361 = vmatpush2.msra.mxu0 0.0
    %3362 = vmatprep.subr.mxu0 0.0
    %3363 = vmatpush2.msra.mxu0 0.0
    %3364 = vmatprep.subr.mxu0 0.0
    %3365 = vmatpush2.msra.mxu0 0.0
    %3366 = vmatprep.subr.mxu0 0.0
    %3367 = vmatpush2.msra.mxu0 0.0
    %3368 = vmatprep.subr.mxu0 0.0
    %3369 = vmatpush2.msra.mxu0 0.0
    %3370 = vmatprep.subr.mxu0 0.0
    %3371 = vmatpush2.msra.mxu0 0.0
    %3372 = vmatprep.subr.mxu0 0.0
    %3373 = vmatpush2.msra.mxu0 0.0
    %3374 = vmatprep.subr.mxu0 0.0
    %3375 = vmatpush2.msra.mxu0 0.0
    %3376 = vmatprep.subr.mxu0 0.0
    %3377 = vmatpush2.msra.mxu0 0.0
    %3378 = vmatprep.subr.mxu0 0.0
    %3379 = vmatpush2.msra.mxu0 0.0
    %3380 = vmatprep.mubr.f32.mxu0 0.0
    %3381 = vmatmul.mubr.f32.gmra.mxu0 %v3243
    %v3382 = vpop.f32.mrf.mxu0
    %v3383 = vadd.f32 0.0, %v3382
    %v3384 = vpop.f32.mrf.mxu0
    %v3385 = vadd.f32 0.0, %v3384
    %3386 = vdwg.mxu0
    %v3391 = vrot.slane %v3312, 4
    %v3392 = vrot.slane %v3314, 4
    %v3393 = vrot.slane %v3383, 4
    %v3394 = vrot.slane %v3385, 4
    %v3399 = vadd.f32 %v2005, %v3391
    %v3400 = vadd.f32 %v2007, %v3392
    %v3401 = vadd.f32 %v2082, %v3393
    %v3402 = vadd.f32 %v2084, %v3394
    %v3403 = vxor.u32 %v3399, 2147483648
    %v3404 = vmul.f32 %v3403, 1.442695
    %v3405 = vpow.pop %v3404
    %v3406 = vadd.f32 %v3405, 1.0
    %v3407 = vrcp.pop %v3406
    %v3408 = vmul.f32 1.0, %v3407
    %v3409 = vxor.u32 %v3400, 2147483648
    %v3410 = vmul.f32 %v3409, 1.442695
    %v3411 = vpow.pop %v3410
    %v3412 = vadd.f32 %v3411, 1.0
    %v3413 = vrcp.pop %v3412
    %v3414 = vmul.f32 1.0, %v3413
    %v3415 = vtanh.pop %v3401
    %v3416 = vxor.u32 %v3402, 2147483648
    %v3417 = vmul.f32 %v3416, 1.442695
    %v3418 = vpow.pop %v3417
    %v3419 = vadd.f32 %v3418, 1.0
    %v3420 = vrcp.pop %v3419
    %v3421 = vmul.f32 1.0, %v3420
    %v3423 = vrot.slane %v3239, 6
    %v3425 = vmul.f32 %v3414, %v3423
    %v3426 = vmul.f32 %v3408, %v3415
    %v3427 = vadd.f32 %v3425, %v3426
    %v3428 = vtanh.pop %v3427
    %v3429 = vmul.f32 %v3421, %v3428
    %v3431 = vrot.slane %v3429, 4
    %3433 = vmatprep.subr.mxu0 %v2147
    %3434 = vmatpush1.msra.mxu0 %v2146
    %3435 = vmatprep.subr.mxu0 %v2143
    %3436 = vmatpush1.msra.mxu0 %v2142
    %3437 = vmatprep.subr.mxu0 %v2139
    %3438 = vmatpush1.msra.mxu0 %v2138
    %3439 = vmatprep.subr.mxu0 %v2135
    %3440 = vmatpush1.msra.mxu0 %v2134
    %3441 = vmatprep.subr.mxu0 %v2131
    %3442 = vmatpush1.msra.mxu0 %v2130
    %3443 = vmatprep.subr.mxu0 %v2127
    %3444 = vmatpush1.msra.mxu0 %v2126
    %3445 = vmatprep.subr.mxu0 %v2123
    %3446 = vmatpush1.msra.mxu0 %v2122
    %3447 = vmatprep.subr.mxu0 %v2119
    %3448 = vmatpush1.msra.mxu0 %v2118
    %3449 = vmatprep.subr.mxu0 %v2115
    %3450 = vmatpush1.msra.mxu0 %v2114
    %3451 = vmatprep.subr.mxu0 %v2111
    %3452 = vmatpush1.msra.mxu0 %v2110
    %3453 = vmatprep.subr.mxu0 %v2107
    %3454 = vmatpush1.msra.mxu0 %v2106
    %3455 = vmatprep.subr.mxu0 %v2103
    %3456 = vmatpush1.msra.mxu0 %v2102
    %3457 = vmatprep.subr.mxu0 %v2099
    %3458 = vmatpush1.msra.mxu0 %v2098
    %3459 = vmatprep.subr.mxu0 %v2095
    %3460 = vmatpush1.msra.mxu0 %v2094
    %3461 = vmatprep.subr.mxu0 %v2091
    %3462 = vmatpush1.msra.mxu0 %v2090
    %3463 = vmatprep.subr.mxu0 %v2087
    %3464 = vmatpush1.msra.mxu0 %v2086
    %3465 = vmatprep.subr.mxu0 0.0
    %3466 = vmatpush2.msra.mxu0 0.0
    %3467 = vmatprep.subr.mxu0 0.0
    %3468 = vmatpush2.msra.mxu0 0.0
    %3469 = vmatprep.subr.mxu0 0.0
    %3470 = vmatpush2.msra.mxu0 0.0
    %3471 = vmatprep.subr.mxu0 0.0
    %3472 = vmatpush2.msra.mxu0 0.0
    %3473 = vmatprep.subr.mxu0 0.0
    %3474 = vmatpush2.msra.mxu0 0.0
    %3475 = vmatprep.subr.mxu0 0.0
    %3476 = vmatpush2.msra.mxu0 0.0
    %3477 = vmatprep.subr.mxu0 0.0
    %3478 = vmatpush2.msra.mxu0 0.0
    %3479 = vmatprep.subr.mxu0 0.0
    %3480 = vmatpush2.msra.mxu0 0.0
    %3481 = vmatprep.subr.mxu0 0.0
    %3482 = vmatpush2.msra.mxu0 0.0
    %3483 = vmatprep.subr.mxu0 0.0
    %3484 = vmatpush2.msra.mxu0 0.0
    %3485 = vmatprep.subr.mxu0 0.0
    %3486 = vmatpush2.msra.mxu0 0.0
    %3487 = vmatprep.subr.mxu0 0.0
    %3488 = vmatpush2.msra.mxu0 0.0
    %3489 = vmatprep.subr.mxu0 0.0
    %3490 = vmatpush2.msra.mxu0 0.0
    %3491 = vmatprep.subr.mxu0 0.0
    %3492 = vmatpush2.msra.mxu0 0.0
    %3493 = vmatprep.subr.mxu0 0.0
    %3494 = vmatpush2.msra.mxu0 0.0
    %3495 = vmatprep.subr.mxu0 0.0
    %3496 = vmatpush2.msra.mxu0 0.0
    %3497 = vmatprep.mubr.f32.mxu0 0.0
    %3498 = vmatmul.mubr.f32.gmra.mxu0 %v3431
    %v3499 = vpop.f32.mrf.mxu0
    %v3500 = vadd.f32 0.0, %v3499
    %v3501 = vpop.f32.mrf.mxu0
    %v3502 = vadd.f32 0.0, %v3501
    %3503 = vdwg.mxu0
    %3504 = vmatprep.subr.mxu0 %v2149
    %3505 = vmatpush1.msra.mxu0 %v2148
    %3506 = vmatprep.subr.mxu0 %v2145
    %3507 = vmatpush1.msra.mxu0 %v2144
    %3508 = vmatprep.subr.mxu0 %v2141
    %3509 = vmatpush1.msra.mxu0 %v2140
    %3510 = vmatprep.subr.mxu0 %v2137
    %3511 = vmatpush1.msra.mxu0 %v2136
    %3512 = vmatprep.subr.mxu0 %v2133
    %3513 = vmatpush1.msra.mxu0 %v2132
    %3514 = vmatprep.subr.mxu0 %v2129
    %3515 = vmatpush1.msra.mxu0 %v2128
    %3516 = vmatprep.subr.mxu0 %v2125
    %3517 = vmatpush1.msra.mxu0 %v2124
    %3518 = vmatprep.subr.mxu0 %v2121
    %3519 = vmatpush1.msra.mxu0 %v2120
    %3520 = vmatprep.subr.mxu0 %v2117
    %3521 = vmatpush1.msra.mxu0 %v2116
    %3522 = vmatprep.subr.mxu0 %v2113
    %3523 = vmatpush1.msra.mxu0 %v2112
    %3524 = vmatprep.subr.mxu0 %v2109
    %3525 = vmatpush1.msra.mxu0 %v2108
    %3526 = vmatprep.subr.mxu0 %v2105
    %3527 = vmatpush1.msra.mxu0 %v2104
    %3528 = vmatprep.subr.mxu0 %v2101
    %3529 = vmatpush1.msra.mxu0 %v2100
    %3530 = vmatprep.subr.mxu0 %v2097
    %3531 = vmatpush1.msra.mxu0 %v2096
    %3532 = vmatprep.subr.mxu0 %v2093
    %3533 = vmatpush1.msra.mxu0 %v2092
    %3534 = vmatprep.subr.mxu0 %v2089
    %3535 = vmatpush1.msra.mxu0 %v2088
    %3536 = vmatprep.subr.mxu0 0.0
    %3537 = vmatpush2.msra.mxu0 0.0
    %3538 = vmatprep.subr.mxu0 0.0
    %3539 = vmatpush2.msra.mxu0 0.0
    %3540 = vmatprep.subr.mxu0 0.0
    %3541 = vmatpush2.msra.mxu0 0.0
    %3542 = vmatprep.subr.mxu0 0.0
    %3543 = vmatpush2.msra.mxu0 0.0
    %3544 = vmatprep.subr.mxu0 0.0
    %3545 = vmatpush2.msra.mxu0 0.0
    %3546 = vmatprep.subr.mxu0 0.0
    %3547 = vmatpush2.msra.mxu0 0.0
    %3548 = vmatprep.subr.mxu0 0.0
    %3549 = vmatpush2.msra.mxu0 0.0
    %3550 = vmatprep.subr.mxu0 0.0
    %3551 = vmatpush2.msra.mxu0 0.0
    %3552 = vmatprep.subr.mxu0 0.0
    %3553 = vmatpush2.msra.mxu0 0.0
    %3554 = vmatprep.subr.mxu0 0.0
    %3555 = vmatpush2.msra.mxu0 0.0
    %3556 = vmatprep.subr.mxu0 0.0
    %3557 = vmatpush2.msra.mxu0 0.0
    %3558 = vmatprep.subr.mxu0 0.0
    %3559 = vmatpush2.msra.mxu0 0.0
    %3560 = vmatprep.subr.mxu0 0.0
    %3561 = vmatpush2.msra.mxu0 0.0
    %3562 = vmatprep.subr.mxu0 0.0
    %3563 = vmatpush2.msra.mxu0 0.0
    %3564 = vmatprep.subr.mxu0 0.0
    %3565 = vmatpush2.msra.mxu0 0.0
    %3566 = vmatprep.subr.mxu0 0.0
    %3567 = vmatpush2.msra.mxu0 0.0
    %3568 = vmatprep.mubr.f32.mxu0 0.0
    %3569 = vmatmul.mubr.f32.gmra.mxu0 %v3431
    %v3570 = vpop.f32.mrf.mxu0
    %v3571 = vadd.f32 0.0, %v3570
    %v3572 = vpop.f32.mrf.mxu0
    %v3573 = vadd.f32 0.0, %v3572
    %3574 = vdwg.mxu0
    %v3579 = vrot.slane %v3500, 2
    %v3580 = vrot.slane %v3502, 2
    %v3581 = vrot.slane %v3571, 2
    %v3582 = vrot.slane %v3573, 2
    %v3587 = vadd.f32 %v2005, %v3579
    %v3588 = vadd.f32 %v2007, %v3580
    %v3589 = vadd.f32 %v2082, %v3581
    %v3590 = vadd.f32 %v2084, %v3582
    %v3591 = vxor.u32 %v3587, 2147483648
    %v3592 = vmul.f32 %v3591, 1.442695
    %v3593 = vpow.pop %v3592
    %v3594 = vadd.f32 %v3593, 1.0
    %v3595 = vrcp.pop %v3594
    %v3596 = vmul.f32 1.0, %v3595
    %v3597 = vxor.u32 %v3588, 2147483648
    %v3598 = vmul.f32 %v3597, 1.442695
    %v3599 = vpow.pop %v3598
    %v3600 = vadd.f32 %v3599, 1.0
    %v3601 = vrcp.pop %v3600
    %v3602 = vmul.f32 1.0, %v3601
    %v3603 = vtanh.pop %v3589
    %v3604 = vxor.u32 %v3590, 2147483648
    %v3605 = vmul.f32 %v3604, 1.442695
    %v3606 = vpow.pop %v3605
    %v3607 = vadd.f32 %v3606, 1.0
    %v3608 = vrcp.pop %v3607
    %v3609 = vmul.f32 1.0, %v3608
    %v3611 = vrot.slane %v3427, 6
    %v3613 = vmul.f32 %v3602, %v3611
    %v3614 = vmul.f32 %v3596, %v3603
    %v3615 = vadd.f32 %v3613, %v3614
    %v3616 = vtanh.pop %v3615
    %v3617 = vmul.f32 %v3609, %v3616
    %vm3618 = vcmask 1041408
    %v3619 = vsel %vm3618, %v2319, %v2504
    %vm3620 = vcmask 1043456
    %v3621 = vsel %vm3620, %v3619, %v2692
    %vm3622 = vcmask 1045504
    %v3623 = vsel %vm3622, %v3621, %v2880
    %v3624 = vsel %vm3618, %v3056, %v3241
    %v3625 = vsel %vm3620, %v3624, %v3429
    %v3626 = vsel %vm3622, %v3625, %v3617
    %v3627 = vld [vmem:[#allocation2 + $0x760] sm:$0xff]
    %v3628 = vld [vmem:[#allocation2 + $0x780] sm:$0xff]
    %v3629 = vld [vmem:[#allocation2 + $0x7a0] sm:$0xff]
    %v3630 = vld [vmem:[#allocation2 + $0x7c0] sm:$0xff]
    %v3631 = vld [vmem:[#allocation2 + $0x7e0] sm:$0xff]
    %v3632 = vld [vmem:[#allocation2 + $0x800] sm:$0xff]
    %v3633 = vld [vmem:[#allocation2 + $0x820] sm:$0xff]
    %v3634 = vld [vmem:[#allocation2 + $0x840] sm:$0xff]
    %v3635 = vld [vmem:[#allocation2 + $0x860] sm:$0xff]
    %v3636 = vld [vmem:[#allocation2 + $0x880] sm:$0xff]
    %v3637 = vld [vmem:[#allocation2 + $0x8a0] sm:$0xff]
    %v3638 = vld [vmem:[#allocation2 + $0x8c0] sm:$0xff]
    %v3639 = vld [vmem:[#allocation2 + $0x8e0] sm:$0xff]
    %v3640 = vld [vmem:[#allocation2 + $0x900] sm:$0xff]
    %v3641 = vld [vmem:[#allocation2 + $0x920] sm:$0xff]
    %v3642 = vld [vmem:[#allocation2 + $0x940] sm:$0xff]
    %v3643 = vld [vmem:[#allocation2 + $0x960] ss:$0 sm:$0xff]
    %3644 = vmatprep.subr.mxu0 0.0
    %3645 = vmatpush1.msra.mxu0 %v3642
    %3646 = vmatprep.subr.mxu0 0.0
    %3647 = vmatpush1.msra.mxu0 %v3641
    %3648 = vmatprep.subr.mxu0 0.0
    %3649 = vmatpush1.msra.mxu0 %v3640
    %3650 = vmatprep.subr.mxu0 0.0
    %3651 = vmatpush1.msra.mxu0 %v3639
    %3652 = vmatprep.subr.mxu0 0.0
    %3653 = vmatpush1.msra.mxu0 %v3638
    %3654 = vmatprep.subr.mxu0 0.0
    %3655 = vmatpush1.msra.mxu0 %v3637
    %3656 = vmatprep.subr.mxu0 0.0
    %3657 = vmatpush1.msra.mxu0 %v3636
    %3658 = vmatprep.subr.mxu0 0.0
    %3659 = vmatpush1.msra.mxu0 %v3635
    %3660 = vmatprep.subr.mxu0 0.0
    %3661 = vmatpush1.msra.mxu0 %v3634
    %3662 = vmatprep.subr.mxu0 0.0
    %3663 = vmatpush1.msra.mxu0 %v3633
    %3664 = vmatprep.subr.mxu0 0.0
    %3665 = vmatpush1.msra.mxu0 %v3632
    %3666 = vmatprep.subr.mxu0 0.0
    %3667 = vmatpush1.msra.mxu0 %v3631
    %3668 = vmatprep.subr.mxu0 0.0
    %3669 = vmatpush1.msra.mxu0 %v3630
    %3670 = vmatprep.subr.mxu0 0.0
    %3671 = vmatpush1.msra.mxu0 %v3629
    %3672 = vmatprep.subr.mxu0 0.0
    %3673 = vmatpush1.msra.mxu0 %v3628
    %3674 = vmatprep.subr.mxu0 0.0
    %3675 = vmatpush1.msra.mxu0 %v3627
    %3676 = vmatprep.subr.mxu0 0.0
    %3677 = vmatpush2.msra.mxu0 0.0
    %3678 = vmatprep.subr.mxu0 0.0
    %3679 = vmatpush2.msra.mxu0 0.0
    %3680 = vmatprep.subr.mxu0 0.0
    %3681 = vmatpush2.msra.mxu0 0.0
    %3682 = vmatprep.subr.mxu0 0.0
    %3683 = vmatpush2.msra.mxu0 0.0
    %3684 = vmatprep.subr.mxu0 0.0
    %3685 = vmatpush2.msra.mxu0 0.0
    %3686 = vmatprep.subr.mxu0 0.0
    %3687 = vmatpush2.msra.mxu0 0.0
    %3688 = vmatprep.subr.mxu0 0.0
    %3689 = vmatpush2.msra.mxu0 0.0
    %3690 = vmatprep.subr.mxu0 0.0
    %3691 = vmatpush2.msra.mxu0 0.0
    %3692 = vmatprep.subr.mxu0 0.0
    %3693 = vmatpush2.msra.mxu0 0.0
    %3694 = vmatprep.subr.mxu0 0.0
    %3695 = vmatpush2.msra.mxu0 0.0
    %3696 = vmatprep.subr.mxu0 0.0
    %3697 = vmatpush2.msra.mxu0 0.0
    %3698 = vmatprep.subr.mxu0 0.0
    %3699 = vmatpush2.msra.mxu0 0.0
    %3700 = vmatprep.subr.mxu0 0.0
    %3701 = vmatpush2.msra.mxu0 0.0
    %3702 = vmatprep.subr.mxu0 0.0
    %3703 = vmatpush2.msra.mxu0 0.0
    %3704 = vmatprep.subr.mxu0 0.0
    %3705 = vmatpush2.msra.mxu0 0.0
    %3706 = vmatprep.subr.mxu0 0.0
    %3707 = vmatpush2.msra.mxu0 0.0
    %3708 = vmatprep.mubr.f32.mxu0 0.0
    %3709 = vmatmul.mubr.f32.gmra.mxu0 %v3623
    %v3710 = vpop.f32.mrf.mxu0
    %v3711 = vadd.f32 %v3643, %v3710
    %v3712 = vpop.f32.mrf.mxu0
    %3713 = vmatprep.mubr.f32.mxu0 0.0
    %3714 = vmatmul.mubr.f32.gmra.mxu0 %v3626
    %v3715 = vpop.f32.mrf.mxu0
    %v3716 = vadd.f32 %v3643, %v3715
    %v3717 = vpop.f32.mrf.mxu0
    %3718 = vdwg.mxu0
    %3719 = vst [vmem:[%s2] sm:$0xff] %v3711
    %3720 = vst [vmem:[%s2 + $0x8] sm:$0xff] %v3716
    // Predicated region
    $region14: #{lstm_encoder_decoder_forward.1} parent=1 // pred_check
      _
    $region15: #{lstm_encoder_decoder_forward.1} parent=1 // pred_check_branch
      %3722 = sbr.rel (0) target = $region17
    $region16: #{lstm_encoder_decoder_forward.1} parent=1 // pred_region
      _
    $region17: #{lstm_encoder_decoder_forward.1} parent=1 // pred_fallthru
      _
    // Predicated region
    $region18: #{lstm_encoder_decoder_forward.1} parent=1 // pred_check
      _
    $region19: #{lstm_encoder_decoder_forward.1} parent=1 // pred_check_branch
      %3724 = sbr.rel (0) target = $region21
    $region20: #{lstm_encoder_decoder_forward.1} parent=1 // pred_region
      _
    $region21: #{lstm_encoder_decoder_forward.1} parent=1 // pred_fallthru
      _
    %3725 = vsyncpa [#allocation3], 1

</llo_original>
